<compile_context>
chip_gen: v7x
topology: tpu7x:2x2x1
jax: 0.10.0
libtpu: 0.0.40
codegen_flags: <defaults>
</compile_context>

<pallas_src>
import functools

import jax
import jax.numpy as jnp
from jax import lax
from jax.experimental import pallas as pl
from jax.experimental.pallas import tpu as pltpu


def _pair(v):
    return (v, v) if isinstance(v, int) else (int(v[0]), int(v[1]))


def _round_up(x, m):
    return ((x + m - 1) // m) * m


def _upsampling_phase_kernel(x_ref, w_ref, b_ref, o_ref, *,
                             ksub_h, ksub_w, th, qw, c_in, c_out):
    """One (image row-tile, output phase) block of the transposed conv.

    x_ref: (Tin, Wp, C_in)                 Tin = th + ksub_h - 1, Wp >= qw + ksub_w - 1
    w_ref: (ksub_h * ksub_w, C_in, C_out)  per-phase sub-kernel taps (bf16)
    b_ref: (1, C_out)                      f32 bias
    o_ref: (th * qw, C_out)                rows are (q_row, q_col) row-major
    """
    tin = th + ksub_h - 1
    rows = th * qw
    # Seed the f32 accumulator with the bias (saves a full pass at the end).
    acc = jnp.broadcast_to(b_ref[...].astype(jnp.float32), (rows, c_out))
    for nn in range(ksub_w):
        # One W-shifted view per W-tap; collapse (H, W) once and reuse the
        # collapsed matrix for every H-tap (H-tap offsets become contiguous,
        # qw-aligned row slices -> no further relayout).
        xw = x_ref[:, nn:nn + qw, :].reshape(tin * qw, c_in)
        for mm in range(ksub_h):
            lhs = xw[mm * qw: mm * qw + rows, :]
            acc = acc + jnp.dot(lhs, w_ref[mm * ksub_w + nn],
                                preferred_element_type=jnp.float32)
    o_ref[...] = acc.astype(o_ref.dtype)


def upsampling_forward(x, weight, bias=None, *, kernel_size, stride=1,
                       padding=0, output_padding=0, use_bias=True,
                       compute_dtype=jnp.bfloat16, row_tile=128):
    """Forward of the Upsampling module (== ConvTranspose2d, dilation=1).

    x:      (N, C_in, H, W)         NCHW, as in the PyTorch module
    weight: (C_in, C_out, kh, kw)   module's parameter layout
    bias:   (C_out,)
    returns (N, C_out, H_out, W_out),
        H_out = (H-1)*stride + kh - 2*padding + output_padding
    """
    kh, kw = _pair(kernel_size)
    ph, pw = _pair(padding)
    oph, opw = _pair(output_padding)
    s = int(stride)
    n, c_in, h, w = x.shape
    wc_in, c_out, wkh, wkw = weight.shape
    assert wc_in == c_in and (wkh, wkw) == (kh, kw)

    h_out = (h - 1) * s + kh - 2 * ph + oph
    w_out = (w - 1) * s + kw - 2 * pw + opw

    # ---- stride-phase decomposition sizes -------------------------------
    ksub_h = -(-kh // s)                       # taps per phase along H
    ksub_w = -(-kw // s)
    q_h = (h_out + ph - 1) // s + 1            # per-phase output rows to cover
    q_w = (w_out + pw - 1) // s + 1

    th = min(_round_up(q_h, 8), max(8, _round_up(row_tile, 8)))
    num_t = -(-q_h // th)
    q_hp = num_t * th
    q_wp = _round_up(q_w, 8)                   # keep the (H,W) collapse aligned

    lh, lw = ksub_h - 1, ksub_w - 1
    hp = lh + max(q_hp, h)
    wp = lw + max(q_wp, w)

    # ---- input: NHWC, bf16, small halo pad only (NO interior dilation) ---
    x_nhwc = jnp.transpose(x, (0, 2, 3, 1)).astype(compute_dtype)
    x_pad = lax.pad(x_nhwc, jnp.zeros((), compute_dtype),
                    ((0, 0, 0),
                     (lh, hp - lh - h, 0),
                     (lw, wp - lw - w, 0),
                     (0, 0, 0)))

    tin = th + ksub_h - 1
    # Row tiles with their (ksub_h - 1)-row halo, non-overlapping BlockSpecs.
    x_tiles = jnp.stack(
        [lax.slice_in_dim(x_pad, t * th, t * th + tin, axis=1)
         for t in range(num_t)], axis=1)
    x_tiles = x_tiles.reshape(n * num_t, tin, wp, c_in)

    # ---- per-phase sub-kernels -------------------------------------------
    # w_ph[r_h, r_w, mm*ksub_w + nn, ci, co] = weight[ci, co, j_h, j_w] with
    #   j_h = r_h + s*(ksub_h-1-mm), j_w = r_w + s*(ksub_w-1-nn)  (0 if >= k).
    w_t = jnp.transpose(weight, (2, 3, 0, 1))                       # (kh,kw,Ci,Co)
    w_t = jnp.pad(w_t, ((0, s * ksub_h - kh), (0, s * ksub_w - kw),
                        (0, 0), (0, 0)))
    w_r = w_t.reshape(ksub_h, s, ksub_w, s, c_in, c_out)            # (m,rh,n,rw,..)
    w_f = jnp.flip(w_r, axis=(0, 2))                                # m -> mm
    w_ph = jnp.transpose(w_f, (1, 3, 0, 2, 4, 5))                   # (rh,rw,mm,nn,..)
    w_ph = w_ph.reshape(s, s, ksub_h * ksub_w, c_in, c_out).astype(compute_dtype)

    if use_bias and bias is not None:
        b_arr = bias.reshape(1, c_out).astype(jnp.float32)          # bias stays f32
    else:
        b_arr = jnp.zeros((1, c_out), jnp.float32)

    kernel = functools.partial(_upsampling_phase_kernel, ksub_h=ksub_h,
                               ksub_w=ksub_w, th=th, qw=q_wp,
                               c_in=c_in, c_out=c_out)

    n_tiles = n * num_t
    out_dtype = x.dtype
    y = pl.pallas_call(
        kernel,
        out_shape=jax.ShapeDtypeStruct((n_tiles * s * s, th * q_wp, c_out),
                                       out_dtype),
        grid=(n_tiles, s, s),
        in_specs=[
            # Input row-tile: constant across the inner phase axes -> its DMA
            # is not repeated per phase.
            pl.BlockSpec((None, tin, wp, c_in),
                         lambda i, rh, rw: (i, 0, 0, 0)),
            # Per-phase sub-kernel taps.
            pl.BlockSpec((None, None, ksub_h * ksub_w, c_in, c_out),
                         lambda i, rh, rw: (rh, rw, 0, 0, 0)),
            pl.BlockSpec((1, c_out), lambda i, rh, rw: (0, 0)),
        ],
        out_specs=pl.BlockSpec(
            (None, th * q_wp, c_out),
            lambda i, rh, rw: (i * (s * s) + rh * s + rw, 0, 0)),
        compiler_params=pltpu.CompilerParams(
            dimension_semantics=("parallel", "parallel", "parallel"),
            vmem_limit_bytes=32 * 1024 * 1024),
    )(x_tiles, w_ph, b_arr)

    # ---- interleave the s*s phases and crop `padding` ---------------------
    y = y.reshape(n, num_t, s, s, th, q_wp, c_out)
    y = jnp.transpose(y, (0, 1, 4, 2, 5, 3, 6))      # (n, t, ql, rh, qw, rw, c)
    y = y.reshape(n, num_t * th * s, q_wp * s, c_out)
    y = y[:, ph:ph + h_out, pw:pw + w_out, :]
    return jnp.transpose(y, (0, 3, 1, 2))            # back to NCHW


def _reference(x, weight, bias, kernel_size, stride, padding, output_padding,
               use_bias):
    """Independent reference: ConvTranspose2d == lhs-dilated conv with the
    flipped / transposed kernel (PyTorch semantics)."""
    kh, kw = _pair(kernel_size)
    ph, pw = _pair(padding)
    oph, opw = _pair(output_padding)
    w_corr = jnp.transpose(jnp.flip(weight, axis=(2, 3)), (1, 0, 2, 3))
    out = lax.conv_general_dilated(
        x, w_corr, window_strides=(1, 1),
        padding=((kh - 1 - ph, kh - 1 - ph + oph),
                 (kw - 1 - pw, kw - 1 - pw + opw)),
        lhs_dilation=(stride, stride), rhs_dilation=(1, 1),
        dimension_numbers=("NCHW", "OIHW", "NCHW"),
        precision=lax.Precision.HIGHEST)
    if use_bias:
        out = out + bias.reshape(1, -1, 1, 1)
    return out


if __name__ == "__main__":
    key = jax.random.PRNGKey(0)
    k_x, k_w, k_b = jax.random.split(key, 3)

    in_channels, out_channels, kernel_size = 4, 3, 3
    stride, padding, output_padding = 2, 1, 1         # classic 2x upsampling

    x = jax.random.normal(k_x, (2, in_channels, 16, 16), dtype=jnp.float32)
    fan_in = in_channels * kernel_size * kernel_size
    K = (1.0 / fan_in) ** 0.5                         # module's 'uniform' init bound
    weight = jax.random.uniform(
        k_w, (in_channels, out_channels, kernel_size, kernel_size),
        minval=-K, maxval=K, dtype=jnp.float32)
    bias = jax.random.uniform(k_b, (out_channels,), minval=-K, maxval=K,
                              dtype=jnp.float32)

    out = upsampling_forward(x, weight, bias, kernel_size=kernel_size,
                             stride=stride, padding=padding,
                             output_padding=output_padding, use_bias=True)
    out = jax.block_until_ready(out)
    assert out.shape == (2, out_channels, 32, 32), out.shape

    # The kernel multiplies in bf16 and accumulates in f32, so compare against
    # a high-precision reference run on the same bf16-rounded operands: the
    # check is tight and deterministic.
    x_r = x.astype(jnp.bfloat16).astype(jnp.float32)
    w_r = weight.astype(jnp.bfloat16).astype(jnp.float32)
    ref = _reference(x_r, w_r, bias, kernel_size, stride, padding,
                     output_padding, True)
    assert jnp.allclose(out, ref, atol=1e-3, rtol=1e-3), \
        float(jnp.max(jnp.abs(out - ref)))

    # Also exercise the stride=1 / padding=0 / no output_padding path.
    out2 = upsampling_forward(x, weight, bias, kernel_size=kernel_size,
                              stride=1, padding=0, output_padding=0,
                              use_bias=True)
    out2 = jax.block_until_ready(out2)
    assert out2.shape == (2, out_channels, 18, 18), out2.shape
    ref2 = _reference(x_r, w_r, bias, kernel_size, 1, 0, 0, True)
    assert jnp.allclose(out2, ref2, atol=1e-3, rtol=1e-3), \
        float(jnp.max(jnp.abs(out2 - ref2)))

    print("KERNEL_OK")
</pallas_src>

<mosaic_0001>
module attributes {stable_mosaic.version = 11 : i64} {
  func.func @_upsampling_phase_kernel(%arg0: i32, %arg1: i32, %arg2: i32, %arg3: memref<1x25x25x4xbf16, #tpu.memory_space<vmem>>, %arg4: memref<1x1x4x4x3xbf16, #tpu.memory_space<vmem>>, %arg5: memref<1x3xf32, #tpu.memory_space<vmem>>, %arg6: memref<1x576x3xf32, #tpu.memory_space<vmem>>) attributes {dimension_semantics = [#tpu.dimension_semantics<parallel>, #tpu.dimension_semantics<parallel>, #tpu.dimension_semantics<parallel>], iteration_bounds = array<i64: 2, 2, 2>, scalar_prefetch = 0 : i64, scratch_operands = 0 : i64, tpu.core_type = #tpu.core_type<tc>, window_params = [{transform_indices = @transform_0, window_bounds = array<i64: 1, 25, 25, 4>}, {transform_indices = @transform_1, window_bounds = array<i64: 1, 1, 4, 4, 3>}, {pipeline_mode = #tpu.pipeline_mode<synchronous>, transform_indices = @transform_2, window_bounds = array<i64: 1, 3>}, {transform_indices = @transform_3, window_bounds = array<i64: 1, 576, 3>}]} {
    %c0 = arith.constant 0 : index
    %c0_0 = arith.constant 0 : index
    %0 = vector.load %arg5[%c0, %c0_0] : memref<1x3xf32, #tpu.memory_space<vmem>>, vector<1x3xf32>
    %1 = vector.shape_cast %0 : vector<1x3xf32> to vector<1x3xf32>
    %2 = vector.broadcast %1 : vector<1x3xf32> to vector<576x3xf32>
    %c0_1 = arith.constant 0 : index
    %c0_2 = arith.constant 0 : index
    %c0_3 = arith.constant 0 : index
    %c0_4 = arith.constant 0 : index
    %3 = vector.load %arg3[%c0_1, %c0_2, %c0_3, %c0_4] : memref<1x25x25x4xbf16, #tpu.memory_space<vmem>>, vector<1x25x24x4xbf16>
    %4 = vector.shape_cast %3 : vector<1x25x24x4xbf16> to vector<25x24x4xbf16>
    %5 = vector.shape_cast %4 : vector<25x24x4xbf16> to vector<600x4xbf16>
    %6 = vector.extract_strided_slice %5 {offsets = [0, 0], sizes = [576, 4], strides = [1, 1]} : vector<600x4xbf16> to vector<576x4xbf16>
    %c0_5 = arith.constant 0 : index
    %c0_6 = arith.constant 0 : index
    %c0_7 = arith.constant 0 : index
    %c0_8 = arith.constant 0 : index
    %c0_9 = arith.constant 0 : index
    %7 = vector.load %arg4[%c0_5, %c0_6, %c0_7, %c0_8, %c0_9] : memref<1x1x4x4x3xbf16, #tpu.memory_space<vmem>>, vector<1x1x1x4x3xbf16>
    %8 = vector.shape_cast %7 : vector<1x1x1x4x3xbf16> to vector<4x3xbf16>
    %cst = arith.constant dense<0.000000e+00> : vector<576x3xf32>
    %9 = tpu.matmul %6, %8, %cst {dimension_numbers = #tpu.dot_dimension_numbers<[1], [0], [0], [1], [0, 0, 1, 1], [], []>} : vector<576x4xbf16>, vector<4x3xbf16>, vector<576x3xf32> -> vector<576x3xf32>
    %10 = arith.addf %2, %9 : vector<576x3xf32>
    %11 = vector.extract_strided_slice %5 {offsets = [24, 0], sizes = [576, 4], strides = [1, 1]} : vector<600x4xbf16> to vector<576x4xbf16>
    %c0_10 = arith.constant 0 : index
    %c0_11 = arith.constant 0 : index
    %c2 = arith.constant 2 : index
    %c0_12 = arith.constant 0 : index
    %c0_13 = arith.constant 0 : index
    %12 = vector.load %arg4[%c0_10, %c0_11, %c2, %c0_12, %c0_13] : memref<1x1x4x4x3xbf16, #tpu.memory_space<vmem>>, vector<1x1x1x4x3xbf16>
    %13 = vector.shape_cast %12 : vector<1x1x1x4x3xbf16> to vector<4x3xbf16>
    %cst_14 = arith.constant dense<0.000000e+00> : vector<576x3xf32>
    %14 = tpu.matmul %11, %13, %cst_14 {dimension_numbers = #tpu.dot_dimension_numbers<[1], [0], [0], [1], [0, 0, 1, 1], [], []>} : vector<576x4xbf16>, vector<4x3xbf16>, vector<576x3xf32> -> vector<576x3xf32>
    %15 = arith.addf %10, %14 : vector<576x3xf32>
    %c0_15 = arith.constant 0 : index
    %c0_16 = arith.constant 0 : index
    %c1 = arith.constant 1 : index
    %c0_17 = arith.constant 0 : index
    %16 = vector.load %arg3[%c0_15, %c0_16, %c1, %c0_17] : memref<1x25x25x4xbf16, #tpu.memory_space<vmem>>, vector<1x25x24x4xbf16>
    %17 = vector.shape_cast %16 : vector<1x25x24x4xbf16> to vector<25x24x4xbf16>
    %18 = vector.shape_cast %17 : vector<25x24x4xbf16> to vector<600x4xbf16>
    %19 = vector.extract_strided_slice %18 {offsets = [0, 0], sizes = [576, 4], strides = [1, 1]} : vector<600x4xbf16> to vector<576x4xbf16>
    %c0_18 = arith.constant 0 : index
    %c0_19 = arith.constant 0 : index
    %c1_20 = arith.constant 1 : index
    %c0_21 = arith.constant 0 : index
    %c0_22 = arith.constant 0 : index
    %20 = vector.load %arg4[%c0_18, %c0_19, %c1_20, %c0_21, %c0_22] : memref<1x1x4x4x3xbf16, #tpu.memory_space<vmem>>, vector<1x1x1x4x3xbf16>
    %21 = vector.shape_cast %20 : vector<1x1x1x4x3xbf16> to vector<4x3xbf16>
    %cst_23 = arith.constant dense<0.000000e+00> : vector<576x3xf32>
    %22 = tpu.matmul %19, %21, %cst_23 {dimension_numbers = #tpu.dot_dimension_numbers<[1], [0], [0], [1], [0, 0, 1, 1], [], []>} : vector<576x4xbf16>, vector<4x3xbf16>, vector<576x3xf32> -> vector<576x3xf32>
    %23 = arith.addf %15, %22 : vector<576x3xf32>
    %24 = vector.extract_strided_slice %18 {offsets = [24, 0], sizes = [576, 4], strides = [1, 1]} : vector<600x4xbf16> to vector<576x4xbf16>
    %c0_24 = arith.constant 0 : index
    %c0_25 = arith.constant 0 : index
    %c3 = arith.constant 3 : index
    %c0_26 = arith.constant 0 : index
    %c0_27 = arith.constant 0 : index
    %25 = vector.load %arg4[%c0_24, %c0_25, %c3, %c0_26, %c0_27] : memref<1x1x4x4x3xbf16, #tpu.memory_space<vmem>>, vector<1x1x1x4x3xbf16>
    %26 = vector.shape_cast %25 : vector<1x1x1x4x3xbf16> to vector<4x3xbf16>
    %cst_28 = arith.constant dense<0.000000e+00> : vector<576x3xf32>
    %27 = tpu.matmul %24, %26, %cst_28 {dimension_numbers = #tpu.dot_dimension_numbers<[1], [0], [0], [1], [0, 0, 1, 1], [], []>} : vector<576x4xbf16>, vector<4x3xbf16>, vector<576x3xf32> -> vector<576x3xf32>
    %28 = arith.addf %23, %27 : vector<576x3xf32>
    %c0_29 = arith.constant 0 : index
    %c0_30 = arith.constant 0 : index
    %c0_31 = arith.constant 0 : index
    %29 = vector.load %arg6[%c0_29, %c0_30, %c0_31] : memref<1x576x3xf32, #tpu.memory_space<vmem>>, vector<1x576x3xf32>
    %30 = vector.shape_cast %29 : vector<1x576x3xf32> to vector<576x3xf32>
    %31 = vector.shape_cast %28 : vector<576x3xf32> to vector<1x576x3xf32>
    tpu.vector_store %arg6[%c0_29, %c0_30, %c0_31], %31 {strides = array<i32>} : memref<1x576x3xf32, #tpu.memory_space<vmem>>, vector<1x576x3xf32>,
    return
  }
  func.func @transform_0(%arg0: i32, %arg1: i32, %arg2: i32) -> (i32, i32, i32, i32) {
    %c0_i32 = arith.constant 0 : i32
    %c0_i32_0 = arith.constant 0 : i32
    %c0_i32_1 = arith.constant 0 : i32
    %c0_i32_2 = arith.constant 0 : i32
    return %arg0, %c0_i32, %c0_i32_0, %c0_i32_1 : i32, i32, i32, i32
  }
  func.func @transform_1(%arg0: i32, %arg1: i32, %arg2: i32) -> (i32, i32, i32, i32, i32) {
    %c0_i32 = arith.constant 0 : i32
    %c0_i32_0 = arith.constant 0 : i32
    %c0_i32_1 = arith.constant 0 : i32
    %c0_i32_2 = arith.constant 0 : i32
    return %arg1, %arg2, %c0_i32, %c0_i32_0, %c0_i32_1 : i32, i32, i32, i32, i32
  }
  func.func @transform_2(%arg0: i32, %arg1: i32, %arg2: i32) -> (i32, i32) {
    %c0_i32 = arith.constant 0 : i32
    %c0_i32_0 = arith.constant 0 : i32
    %c0_i32_1 = arith.constant 0 : i32
    return %c0_i32, %c0_i32_0 : i32, i32
  }
  func.func @transform_3(%arg0: i32, %arg1: i32, %arg2: i32) -> (i32, i32, i32) {
    %c4_i32 = arith.constant 4 : i32
    %0 = arith.muli %arg0, %c4_i32 : i32
    %c2_i32 = arith.constant 2 : i32
    %1 = arith.muli %arg1, %c2_i32 : i32
    %2 = arith.addi %0, %1 : i32
    %3 = arith.addi %2, %arg2 : i32
    %c0_i32 = arith.constant 0 : i32
    %c0_i32_0 = arith.constant 0 : i32
    %c0_i32_1 = arith.constant 0 : i32
    return %3, %c0_i32, %c0_i32_0 : i32, i32, i32
  }
}

</mosaic_0001>

<llo_original>
// kernel: tpu_custom_call.1
$region0: #{tpu_custom_call.1}
  #allocation0 [shape = 'u32[]', space=smem, size = 0x4, offset = 0x4, fixed_abs, tag = 'smem constant byte address 0x4 - core index']
  #allocation1 [shape = 'u32[144,128]{1,0:T(1,128)}', space=vmem, size = 0x12000, scoped, tag = 'internal scratch']
  %s0 = inlined_call_operand.vmem [shape: bf16[2,25,25,4], index: 0, kind: input, shape index: {}]
  %s1 = inlined_call_operand.vmem [shape: bf16[2,2,4,4,3], index: 1, kind: input, shape index: {}]
  %s2 = inlined_call_operand.hbm [shape: f32[1,3], index: 2, kind: input, shape index: {}]
  %s3 = inlined_call_operand.vmem [shape: f32[8,576,3], index: 3, kind: output, shape index: {}]
  %s4 = sld [smem:[#allocation0]]
  $region49: #{tpu_custom_call.1} parent=0
    _
  %s6 = ssub.s32 1, %s4
  %s7 = scalar_select 0, %s6, %s4
  $region1: #{tpu_custom_call.1} parent=0
    #allocation2 [shape = 'u8[512]{0}', space=vmem, size = 0x400, scoped, tag = 'input window, operand 2, single buffered']
    #allocation3 [shape = 's32[2]{0}', space=sflag, size = 0x8, scoped, tag = 'scoped memory for tpu_custom_call.1']
    %8 = vsyncpa [#allocation3], 0
    loop: start=0, step=1, limit=10
    $region2: #{tpu_custom_call.1} parent=1 // loop_pre_header
      _
    $region3: #{tpu_custom_call.1} parent=1 // loop_header
      %s10 = sphi 0, %s14
      %p11 = scmp.ge.s32.totalorder %s10, 10
      %s17 = sphi 0, %s36
      %s18 = sphi 0, %s32
      %s19 = sphi 0, %s28
      %s20 = sphi 0, %s17
      %s21 = sphi 0, %s18
      %s22 = sphi 0, %s19
      %s23 = sphi 0, %s20
      %s24 = sphi 0, %s21
      %s25 = sphi 0, %s22
      %s39 = sphi 0, %s41
      %s42 = sphi 0, %s39
      %s43 = sphi 0, %s42
      %s59 = sphi 0, %s43
      %s67 = sphi 0, %s69
      %s70 = sphi 0, %s67
      %s71 = sphi 0, %s70
      %s87 = sphi 0, %s71
      %s91 = sphi 0, %s91
      %s93 = sphi 0, %s91
      %s94 = sphi 0, %s93
      %s108 = sphi 0, %s94
      %s122 = sphi 0, %s124
      %s125 = sphi 0, %s122
      %s126 = sphi 0, %s125
      %s142 = sphi 0, %s126
    $region4: #{tpu_custom_call.1} parent=1 // loop_header_branch
      %13 = sbr.rel (%p11) target = $region8
    $region5: #{tpu_custom_call.1} parent=1 // loop_body
      %s15 = ssub.s32 %s10, 1
      %s16 = ssub.s32 %s10, 2
      %s26 = sadd.s32 1, %s19
      %p27 = scmp.ge.s32.totalorder %s26, 2
      %s28 = scalar_select %p27, 0, %s26
      %s29 = sadd.s32 1, %s18
      %s30 = scalar_select %p27, %s29, %s18
      %p31 = scmp.ge.s32.totalorder %s30, 2
      %s32 = scalar_select %p31, 0, %s30
      %s33 = sadd.s32 1, %s17
      %s34 = scalar_select %p31, %s33, %s17
      %p35 = scmp.ge.s32.totalorder %s34, 2
      %s36 = scalar_select %p35, 0, %s34
      %s37 = ssub.s32 %s17, %s36
      %p38 = scmp.eq.s32.totalorder %s37, 0
      %s40 = sadd.s32 %s39, 1
      %s41 = scalar_select %p38, %s39, %s40
      %p44 = pneg %p38
      %p45 = scmp.eq.s32.totalorder %s10, 7
      %p46 = por %p44, %p45
      %p47 = scmp.ne.s32.totalorder %s39, %s42
      %p48 = scmp.eq.s32.totalorder %s10, 0
      %p49 = por %p47, %p48
      %p50 = scmp.ne.s32.totalorder %s39, %s42
      %p51 = scmp.eq.s32.totalorder %s15, 7
      %p52 = por %p50, %p51
      %p53 = scmp.ne.s32.totalorder %s42, %s43
      %p54 = scmp.eq.s32.totalorder %s15, 0
      %p55 = por %p53, %p54
      %p56 = scmp.ne.s32.totalorder %s42, %s43
      %p57 = scmp.eq.s32.totalorder %s16, 7
      %p58 = por %p56, %p57
      %p60 = scmp.ne.s32.totalorder %s43, %s59
      %p61 = scmp.eq.s32.totalorder %s16, 0
      %p62 = por %p60, %p61
      %s63 = ssub.s32 %s18, %s32
      %s64 = ssub.s32 %s19, %s28
      %s65 = sor.u32 %s63, %s64
      %p66 = scmp.eq.s32.totalorder %s65, 0
      %s68 = sadd.s32 %s67, 1
      %s69 = scalar_select %p66, %s67, %s68
      %p72 = pneg %p66
      %p73 = scmp.eq.s32.totalorder %s10, 7
      %p74 = por %p72, %p73
      %p75 = scmp.ne.s32.totalorder %s67, %s70
      %p76 = scmp.eq.s32.totalorder %s10, 0
      %p77 = por %p75, %p76
      %p78 = scmp.ne.s32.totalorder %s67, %s70
      %p79 = scmp.eq.s32.totalorder %s15, 7
      %p80 = por %p78, %p79
      %p81 = scmp.ne.s32.totalorder %s70, %s71
      %p82 = scmp.eq.s32.totalorder %s15, 0
      %p83 = por %p81, %p82
      %p84 = scmp.ne.s32.totalorder %s70, %s71
      %p85 = scmp.eq.s32.totalorder %s16, 7
      %p86 = por %p84, %p85
      %p88 = scmp.ne.s32.totalorder %s71, %s87
      %p89 = scmp.eq.s32.totalorder %s16, 0
      %p90 = por %p88, %p89
      %s92 = sadd.s32 %s91, 1
      %p95 = scmp.eq.s32.totalorder %s10, 7
      %p96 = scmp.ne.s32.totalorder %s91, %s93
      %p97 = scmp.eq.s32.totalorder %s10, 0
      %p98 = por %p96, %p97
      %p99 = scmp.ne.s32.totalorder %s91, %s93
      %p100 = scmp.eq.s32.totalorder %s15, 7
      %p101 = por %p99, %p100
      %p102 = scmp.ne.s32.totalorder %s93, %s94
      %p103 = scmp.eq.s32.totalorder %s15, 0
      %p104 = por %p102, %p103
      %p105 = scmp.ne.s32.totalorder %s93, %s94
      %p106 = scmp.eq.s32.totalorder %s16, 7
      %p107 = por %p105, %p106
      %p109 = scmp.ne.s32.totalorder %s94, %s108
      %p110 = scmp.eq.s32.totalorder %s16, 0
      %p111 = por %p109, %p110
      %s112 = smul.u32 %s17, 4
      %s113 = smul.u32 %s18, 2
      %s114 = sadd.s32 %s112, %s113
      %s115 = sadd.s32 %s114, %s19
      %s116 = smul.u32 %s36, 4
      %s117 = smul.u32 %s32, 2
      %s118 = sadd.s32 %s116, %s117
      %s119 = sadd.s32 %s118, %s28
      %s120 = ssub.s32 %s115, %s119
      %p121 = scmp.eq.s32.totalorder %s120, 0
      %s123 = sadd.s32 %s122, 1
      %s124 = scalar_select %p121, %s122, %s123
      %p127 = pneg %p121
      %p128 = scmp.eq.s32.totalorder %s10, 7
      %p129 = por %p127, %p128
      %p130 = scmp.ne.s32.totalorder %s122, %s125
      %p131 = scmp.eq.s32.totalorder %s10, 0
      %p132 = por %p130, %p131
      %p133 = scmp.ne.s32.totalorder %s122, %s125
      %p134 = scmp.eq.s32.totalorder %s15, 7
      %p135 = por %p133, %p134
      %p136 = scmp.ne.s32.totalorder %s125, %s126
      %p137 = scmp.eq.s32.totalorder %s15, 0
      %p138 = por %p136, %p137
      %p139 = scmp.ne.s32.totalorder %s125, %s126
      %p140 = scmp.eq.s32.totalorder %s16, 7
      %p141 = por %p139, %p140
      %p143 = scmp.ne.s32.totalorder %s126, %s142
      %p144 = scmp.eq.s32.totalorder %s16, 0
      %p145 = por %p143, %p144
      %p146 = scmp.le.s32.totalorder 1, %s10
      %p147 = scmp.lt.s32.totalorder %s10, 9
      %p148 = pnand %p146, %p147
      %p149 = pneg %p148
      // Predicated region
      $region9: #{tpu_custom_call.1} parent=5 // pred_check
        _
      $region10: #{tpu_custom_call.1} parent=5 // pred_check_branch
        %151 = sbr.rel (%p148) target = $region12
      $region11: #{tpu_custom_call.1} parent=5 // pred_region
        %s152 = ssub.s32 %s10, 1
        // Predicated region
        $region13: #{tpu_custom_call.1} parent=11 // pred_check
          %p153 = pneg %p104
        $region14: #{tpu_custom_call.1} parent=11 // pred_check_branch
          %155 = sbr.rel (%p153) target = $region16
        $region15: #{tpu_custom_call.1} parent=11 // pred_region
          %s157 = ssub.s32 16, 16
          %158 = vsyncadd [#allocation3], %s157
          %s160 = sshll.u32 [#allocation2], 4
          %s161 = int_to_ptr.vmem [resolvable:$true] %s160
          %163 = dma.hbm_to_vmem [thread:$0]  %s2, 16, %s161, [#allocation3]
        $region16: #{tpu_custom_call.1} parent=11 // pred_fallthru
          _
      $region12: #{tpu_custom_call.1} parent=5 // pred_fallthru
        _
      %p164 = scmp.lt.s32.totalorder %s10, 8
      // Predicated region
      $region17: #{tpu_custom_call.1} parent=5 // pred_check
        %p165 = pneg %p164
      $region18: #{tpu_custom_call.1} parent=5 // pred_check_branch
        %167 = sbr.rel (%p165) target = $region20
      $region19: #{tpu_custom_call.1} parent=5 // pred_region
        // Predicated region
        $region21: #{tpu_custom_call.1} parent=19 // pred_check
          %p168 = pneg %p49
        $region22: #{tpu_custom_call.1} parent=19 // pred_check_branch
          %170 = sbr.rel (%p168) target = $region24
        $region23: #{tpu_custom_call.1} parent=19 // pred_region
          %p171 = scmp.lt.s32.totalorder %s17, 1
          %s172 = scalar_select %p171, %s17, 1
          %s173 = smul.addr %s172, 100
          %s174 = smul.addr %s173, 4
          %s175 = scalar_lea.vmem %s0, %s174
        $region24: #{tpu_custom_call.1} parent=19 // pred_fallthru
          _
        // Predicated region
        $region25: #{tpu_custom_call.1} parent=19 // pred_check
          %p176 = pneg %p77
        $region26: #{tpu_custom_call.1} parent=19 // pred_check_branch
          %178 = sbr.rel (%p176) target = $region28
        $region27: #{tpu_custom_call.1} parent=19 // pred_region
          %p179 = scmp.lt.s32.totalorder %s18, 1
          %s180 = scalar_select %p179, %s18, 1
          %p181 = scmp.lt.s32.totalorder %s19, 1
          %s182 = scalar_select %p181, %s19, 1
          %s183 = smul.addr %s182, 4
          %s184 = smul.addr %s180, 8
          %s185 = sadd.s32 %s183, %s184
          %s186 = smul.addr %s185, 2
          %s187 = scalar_lea.vmem %s1, %s186
        $region28: #{tpu_custom_call.1} parent=19 // pred_fallthru
          _
      $region20: #{tpu_custom_call.1} parent=5 // pred_fallthru
        _
      %p188 = scmp.le.s32.totalorder 1, %s10
      %p189 = scmp.lt.s32.totalorder %s10, 9
      %p190 = pnand %p188, %p189
      %p191 = pneg %p190
      // Predicated region
      $region29: #{tpu_custom_call.1} parent=5 // pred_check
        _
      $region30: #{tpu_custom_call.1} parent=5 // pred_check_branch
        %193 = sbr.rel (%p190) target = $region32
      $region31: #{tpu_custom_call.1} parent=5 // pred_region
        %s194 = ssub.s32 %s10, 1
        // Predicated region
        $region33: #{tpu_custom_call.1} parent=31 // pred_check
          %p195 = pneg %p104
        $region34: #{tpu_custom_call.1} parent=31 // pred_check_branch
          %197 = sbr.rel (%p195) target = $region36
        $region35: #{tpu_custom_call.1} parent=31 // pred_region
          %198 = dma.done [#allocation3], 16
        $region36: #{tpu_custom_call.1} parent=31 // pred_fallthru
          _
        %p199 = scmp.lt.s32.totalorder %s20, 1
        %s200 = scalar_select %p199, %s20, 1
        %s201 = smul.addr %s200, 100
        %s202 = smul.addr %s201, 4
        %s203 = scalar_lea.vmem %s0, %s202
        %p204 = pneg %p55
        %p205 = pneg %p52
        %p206 = scmp.lt.s32.totalorder %s21, 1
        %s207 = scalar_select %p206, %s21, 1
        %p208 = scmp.lt.s32.totalorder %s22, 1
        %s209 = scalar_select %p208, %s22, 1
        %s210 = smul.addr %s209, 4
        %s211 = smul.addr %s207, 8
        %s212 = sadd.s32 %s210, %s211
        %s213 = smul.addr %s212, 2
        %s214 = scalar_lea.vmem %s1, %s213
        %p215 = pneg %p83
        %p216 = pneg %p80
        %p217 = pneg %p104
        %p218 = pneg %p101
        %p219 = pneg %p138
        %p220 = pneg %p135
        %s221 = smul.u32 %s20, 4
        %s222 = smul.u32 %s21, 2
        %s223 = sadd.s32 %s221, %s222
        %s224 = sadd.s32 %s223, %s22
        %p225 = scmp.lt.s32.totalorder %s224, 7
        %s226 = scalar_select %p225, %s224, 7
        %s227 = smul.addr %s226, 72
        %s228 = smul.addr %s227, 8
        %s229 = scalar_lea.vmem %s3, %s228
        %p230 = scmp.lt.s32.totalorder %s20, 1
        %s231 = scalar_select %p230, %s20, 1
        %s232 = smul.addr %s231, 100
        %s233 = smul.addr %s232, 4
        %s234 = scalar_lea.vmem %s0, %s233
        %p235 = scmp.lt.s32.totalorder %s21, 1
        %s236 = scalar_select %p235, %s21, 1
        %p237 = scmp.lt.s32.totalorder %s22, 1
        %s238 = scalar_select %p237, %s22, 1
        %s239 = smul.addr %s238, 4
        %s240 = smul.addr %s236, 8
        %s241 = sadd.s32 %s239, %s240
        %s242 = smul.addr %s241, 2
        %s243 = scalar_lea.vmem %s1, %s242
        %s244 = smul.u32 %s20, 4
        %s245 = smul.u32 %s21, 2
        %s246 = sadd.s32 %s244, %s245
        %s247 = sadd.s32 %s246, %s22
        %p248 = scmp.lt.s32.totalorder %s247, 7
        %s249 = scalar_select %p248, %s247, 7
        %s250 = smul.addr %s249, 72
        %s251 = smul.addr %s250, 8
        %s252 = scalar_lea.vmem %s3, %s251
        %s253 = smul.u32 %s20, 4
        %s254 = smul.u32 %s21, 2
        %s255 = sadd.s32 %s253, %s254
        %s256 = sadd.s32 %s255, %s22
        %v258 = vld [vmem:[#allocation2] sm:$0x1]
        %v260 = vlaneseq
        %v261 = vshrl.u32 %v260, 7
        %v262 = vsub.s32 0, %v261
        %v263 = vrot.slane %v258, %v262
        %v265 = vld [vmem:[%s234] sm:$0xf]
        %v266 = vld [vmem:[%s234 + $0x4] sm:$0xf]
        %v267 = vld [vmem:[%s234 + $0x8] sm:$0xf]
        %v268 = vld [vmem:[%s234 + $0x10] sm:$0xf]
        %v269 = vld [vmem:[%s234 + $0x14] sm:$0xf]
        %v270 = vld [vmem:[%s234 + $0x18] sm:$0xf]
        %v271 = vld [vmem:[%s234 + $0x20] sm:$0xf]
        %v272 = vld [vmem:[%s234 + $0x24] sm:$0xf]
        %v273 = vld [vmem:[%s234 + $0x28] sm:$0xf]
        %v274 = vld [vmem:[%s234 + $0x30] sm:$0xf]
        %v275 = vld [vmem:[%s234 + $0x34] sm:$0xf]
        %v276 = vld [vmem:[%s234 + $0x38] sm:$0xf]
        %v277 = vld [vmem:[%s234 + $0x40] sm:$0xf]
        %v278 = vld [vmem:[%s234 + $0x44] sm:$0xf]
        %v279 = vld [vmem:[%s234 + $0x48] sm:$0xf]
        %v280 = vld [vmem:[%s234 + $0x50] sm:$0xf]
        %v281 = vld [vmem:[%s234 + $0x54] sm:$0xf]
        %v282 = vld [vmem:[%s234 + $0x58] sm:$0xf]
        %v283 = vld [vmem:[%s234 + $0x60] sm:$0xf]
        %v284 = vld [vmem:[%s234 + $0x64] sm:$0xf]
        %v285 = vld [vmem:[%s234 + $0x68] sm:$0xf]
        %v286 = vld [vmem:[%s234 + $0x70] sm:$0xf]
        %v287 = vld [vmem:[%s234 + $0x74] sm:$0xf]
        %v288 = vld [vmem:[%s234 + $0x78] sm:$0xf]
        %v289 = vld [vmem:[%s234 + $0x80] sm:$0xf]
        %v290 = vld [vmem:[%s234 + $0x84] sm:$0xf]
        %v291 = vld [vmem:[%s234 + $0x88] sm:$0xf]
        %v292 = vld [vmem:[%s234 + $0x90] sm:$0xf]
        %v293 = vld [vmem:[%s234 + $0x94] sm:$0xf]
        %v294 = vld [vmem:[%s234 + $0x98] sm:$0xf]
        %v295 = vld [vmem:[%s234 + $0xa0] sm:$0xf]
        %v296 = vld [vmem:[%s234 + $0xa4] sm:$0xf]
        %v297 = vld [vmem:[%s234 + $0xa8] sm:$0xf]
        %v298 = vld [vmem:[%s234 + $0xb0] sm:$0xf]
        %v299 = vld [vmem:[%s234 + $0xb4] sm:$0xf]
        %v300 = vld [vmem:[%s234 + $0xb8] sm:$0xf]
        %v301 = vld [vmem:[%s234 + $0xc0] sm:$0xf]
        %v302 = vld [vmem:[%s234 + $0xc4] sm:$0xf]
        %v303 = vld [vmem:[%s234 + $0xc8] sm:$0xf]
        %v304 = vld [vmem:[%s234 + $0xd0] sm:$0xf]
        %v305 = vld [vmem:[%s234 + $0xd4] sm:$0xf]
        %v306 = vld [vmem:[%s234 + $0xd8] sm:$0xf]
        %v307 = vld [vmem:[%s234 + $0xe0] sm:$0xf]
        %v308 = vld [vmem:[%s234 + $0xe4] sm:$0xf]
        %v309 = vld [vmem:[%s234 + $0xe8] sm:$0xf]
        %v310 = vld [vmem:[%s234 + $0xf0] sm:$0xf]
        %v311 = vld [vmem:[%s234 + $0xf4] sm:$0xf]
        %v312 = vld [vmem:[%s234 + $0xf8] sm:$0xf]
        %v313 = vld [vmem:[%s234 + $0x100] sm:$0xf]
        %v314 = vld [vmem:[%s234 + $0x104] sm:$0xf]
        %v315 = vld [vmem:[%s234 + $0x108] sm:$0xf]
        %v316 = vld [vmem:[%s234 + $0x110] sm:$0xf]
        %v317 = vld [vmem:[%s234 + $0x114] sm:$0xf]
        %v318 = vld [vmem:[%s234 + $0x118] sm:$0xf]
        %v319 = vld [vmem:[%s234 + $0x120] sm:$0xf]
        %v320 = vld [vmem:[%s234 + $0x124] sm:$0xf]
        %v321 = vld [vmem:[%s234 + $0x128] sm:$0xf]
        %v322 = vld [vmem:[%s234 + $0x130] sm:$0xf]
        %v323 = vld [vmem:[%s234 + $0x134] sm:$0xf]
        %v324 = vld [vmem:[%s234 + $0x138] sm:$0xf]
        %v325 = vld [vmem:[%s234 + $0x140] sm:$0xf]
        %v326 = vld [vmem:[%s234 + $0x144] sm:$0xf]
        %v327 = vld [vmem:[%s234 + $0x148] sm:$0xf]
        %v328 = vld [vmem:[%s234 + $0x150] sm:$0xf]
        %v329 = vld [vmem:[%s234 + $0x154] sm:$0xf]
        %v330 = vld [vmem:[%s234 + $0x158] sm:$0xf]
        %v331 = vld [vmem:[%s234 + $0x160] sm:$0xf]
        %v332 = vld [vmem:[%s234 + $0x164] sm:$0xf]
        %v333 = vld [vmem:[%s234 + $0x168] sm:$0xf]
        %v334 = vld [vmem:[%s234 + $0x170] sm:$0xf]
        %v335 = vld [vmem:[%s234 + $0x174] sm:$0xf]
        %v336 = vld [vmem:[%s234 + $0x178] sm:$0xf]
        %v337 = vld [vmem:[%s234 + $0x180] sm:$0xf]
        %v338 = vld [vmem:[%s234 + $0x184] sm:$0xf]
        %v339 = vld [vmem:[%s234 + $0x188] sm:$0xf]
        %v340 = vld [vmem:[%s243] sm:$0x3]
        %v413 = vunpack.c.l.b16 %v265
        %v414 = vunpack.c.l.b16 %v266
        %v415 = vunpack.c.l.b16 %v267
        %v416 = vunpack.c.l.b16 %v268
        %v417 = vunpack.c.l.b16 %v269
        %v418 = vunpack.c.l.b16 %v270
        %v419 = vunpack.c.l.b16 %v271
        %v420 = vunpack.c.l.b16 %v272
        %v421 = vunpack.c.l.b16 %v273
        %v422 = vunpack.c.l.b16 %v274
        %v423 = vunpack.c.l.b16 %v275
        %v424 = vunpack.c.l.b16 %v276
        %v425 = vunpack.c.l.b16 %v277
        %v426 = vunpack.c.l.b16 %v278
        %v427 = vunpack.c.l.b16 %v279
        %v428 = vunpack.c.l.b16 %v280
        %v429 = vunpack.c.l.b16 %v281
        %v430 = vunpack.c.l.b16 %v282
        %v431 = vunpack.c.l.b16 %v283
        %v432 = vunpack.c.l.b16 %v284
        %v433 = vunpack.c.l.b16 %v285
        %v434 = vunpack.c.l.b16 %v286
        %v435 = vunpack.c.l.b16 %v287
        %v436 = vunpack.c.l.b16 %v288
        %v437 = vunpack.c.l.b16 %v289
        %v438 = vunpack.c.l.b16 %v290
        %v439 = vunpack.c.l.b16 %v291
        %v440 = vunpack.c.l.b16 %v292
        %v441 = vunpack.c.l.b16 %v293
        %v442 = vunpack.c.l.b16 %v294
        %v443 = vunpack.c.l.b16 %v295
        %v444 = vunpack.c.l.b16 %v296
        %v445 = vunpack.c.l.b16 %v297
        %v446 = vunpack.c.l.b16 %v298
        %v447 = vunpack.c.l.b16 %v299
        %v448 = vunpack.c.l.b16 %v300
        %v449 = vunpack.c.l.b16 %v301
        %v450 = vunpack.c.l.b16 %v302
        %v451 = vunpack.c.l.b16 %v303
        %v452 = vunpack.c.l.b16 %v304
        %v453 = vunpack.c.l.b16 %v305
        %v454 = vunpack.c.l.b16 %v306
        %v455 = vunpack.c.l.b16 %v307
        %v456 = vunpack.c.l.b16 %v308
        %v457 = vunpack.c.l.b16 %v309
        %v458 = vunpack.c.l.b16 %v310
        %v459 = vunpack.c.l.b16 %v311
        %v460 = vunpack.c.l.b16 %v312
        %v461 = vunpack.c.l.b16 %v313
        %v462 = vunpack.c.l.b16 %v314
        %v463 = vunpack.c.l.b16 %v315
        %v464 = vunpack.c.l.b16 %v316
        %v465 = vunpack.c.l.b16 %v317
        %v466 = vunpack.c.l.b16 %v318
        %v467 = vunpack.c.l.b16 %v319
        %v468 = vunpack.c.l.b16 %v320
        %v469 = vunpack.c.l.b16 %v321
        %v470 = vunpack.c.l.b16 %v322
        %v471 = vunpack.c.l.b16 %v323
        %v472 = vunpack.c.l.b16 %v324
        %v473 = vunpack.c.l.b16 %v325
        %v474 = vunpack.c.l.b16 %v326
        %v475 = vunpack.c.l.b16 %v327
        %v476 = vunpack.c.l.b16 %v328
        %v477 = vunpack.c.l.b16 %v329
        %v478 = vunpack.c.l.b16 %v330
        %v479 = vunpack.c.l.b16 %v331
        %v480 = vunpack.c.l.b16 %v332
        %v481 = vunpack.c.l.b16 %v333
        %v482 = vunpack.c.l.b16 %v334
        %v483 = vunpack.c.l.b16 %v335
        %v484 = vunpack.c.l.b16 %v336
        %v485 = vpack.c.b16 %v414, %v413
        %v486 = vpack.c.b16 %v416, %v415
        %v487 = vpack.c.b16 %v418, %v417
        %v488 = vpack.c.b16 %v420, %v419
        %v489 = vpack.c.b16 %v422, %v421
        %v490 = vpack.c.b16 %v424, %v423
        %v491 = vpack.c.b16 %v426, %v425
        %v492 = vpack.c.b16 %v428, %v427
        %v493 = vpack.c.b16 %v430, %v429
        %v494 = vpack.c.b16 %v432, %v431
        %v495 = vpack.c.b16 %v434, %v433
        %v496 = vpack.c.b16 %v436, %v435
        %v497 = vpack.c.b16 %v438, %v437
        %v498 = vpack.c.b16 %v440, %v439
        %v499 = vpack.c.b16 %v442, %v441
        %v500 = vpack.c.b16 %v444, %v443
        %v501 = vpack.c.b16 %v446, %v445
        %v502 = vpack.c.b16 %v448, %v447
        %v503 = vpack.c.b16 %v450, %v449
        %v504 = vpack.c.b16 %v452, %v451
        %v505 = vpack.c.b16 %v454, %v453
        %v506 = vpack.c.b16 %v456, %v455
        %v507 = vpack.c.b16 %v458, %v457
        %v508 = vpack.c.b16 %v460, %v459
        %v509 = vpack.c.b16 %v462, %v461
        %v510 = vpack.c.b16 %v464, %v463
        %v511 = vpack.c.b16 %v466, %v465
        %v512 = vpack.c.b16 %v468, %v467
        %v513 = vpack.c.b16 %v470, %v469
        %v514 = vpack.c.b16 %v472, %v471
        %v515 = vpack.c.b16 %v474, %v473
        %v516 = vpack.c.b16 %v476, %v475
        %v517 = vpack.c.b16 %v478, %v477
        %v518 = vpack.c.b16 %v480, %v479
        %v519 = vpack.c.b16 %v482, %v481
        %v520 = vpack.c.b16 %v484, %v483
        %vm521 = vcmask 31744
        %v523 = vsel %vm521, %v485, 0
        %v526 = vsel %vm521, %v486, 0
        %v529 = vsel %vm521, %v487, 0
        %v532 = vsel %vm521, %v488, 0
        %v535 = vsel %vm521, %v489, 0
        %v538 = vsel %vm521, %v490, 0
        %v541 = vsel %vm521, %v491, 0
        %v544 = vsel %vm521, %v492, 0
        %v547 = vsel %vm521, %v493, 0
        %v550 = vsel %vm521, %v494, 0
        %v553 = vsel %vm521, %v495, 0
        %v556 = vsel %vm521, %v496, 0
        %v559 = vsel %vm521, %v497, 0
        %v562 = vsel %vm521, %v498, 0
        %v565 = vsel %vm521, %v499, 0
        %v568 = vsel %vm521, %v500, 0
        %v571 = vsel %vm521, %v501, 0
        %v574 = vsel %vm521, %v502, 0
        %v577 = vsel %vm521, %v503, 0
        %v580 = vsel %vm521, %v504, 0
        %v583 = vsel %vm521, %v505, 0
        %v586 = vsel %vm521, %v506, 0
        %v589 = vsel %vm521, %v507, 0
        %v592 = vsel %vm521, %v508, 0
        %v595 = vsel %vm521, %v509, 0
        %v598 = vsel %vm521, %v510, 0
        %v601 = vsel %vm521, %v511, 0
        %v604 = vsel %vm521, %v512, 0
        %v607 = vsel %vm521, %v513, 0
        %v610 = vsel %vm521, %v514, 0
        %v613 = vsel %vm521, %v515, 0
        %v616 = vsel %vm521, %v516, 0
        %v619 = vsel %vm521, %v517, 0
        %v622 = vsel %vm521, %v518, 0
        %v625 = vsel %vm521, %v519, 0
        %v628 = vsel %vm521, %v520, 0
        %vm630 = vcmask 1041408
        %v632 = vsel %vm630, %v340, 0
        %634 = vmatprep.subr.bf16.mxu0 0
        %635 = vmatpush1.bf16.msra.mxu0 %v632
        %636 = vmatprep.subr.bf16.mxu0 0
        %637 = vmatpush1.bf16.msra.mxu0 0
        %638 = vmatprep.subr.bf16.mxu0 0
        %639 = vmatpush1.bf16.msra.mxu0 0
        %640 = vmatprep.subr.bf16.mxu0 0
        %641 = vmatpush1.bf16.msra.mxu0 0
        %642 = vmatprep.subr.bf16.mxu0 0
        %643 = vmatpush1.bf16.msra.mxu0 0
        %644 = vmatprep.subr.bf16.mxu0 0
        %645 = vmatpush1.bf16.msra.mxu0 0
        %646 = vmatprep.subr.bf16.mxu0 0
        %647 = vmatpush1.bf16.msra.mxu0 0
        %648 = vmatprep.subr.bf16.mxu0 0
        %649 = vmatpush1.bf16.msra.mxu0 0
        %650 = vmatprep.subr.bf16.mxu0 0
        %651 = vmatpush1.bf16.msra.mxu0 0
        %652 = vmatprep.subr.bf16.mxu0 0
        %653 = vmatpush1.bf16.msra.mxu0 0
        %654 = vmatprep.subr.bf16.mxu0 0
        %655 = vmatpush1.bf16.msra.mxu0 0
        %656 = vmatprep.subr.bf16.mxu0 0
        %657 = vmatpush1.bf16.msra.mxu0 0
        %658 = vmatprep.subr.bf16.mxu0 0
        %659 = vmatpush1.bf16.msra.mxu0 0
        %660 = vmatprep.subr.bf16.mxu0 0
        %661 = vmatpush1.bf16.msra.mxu0 0
        %662 = vmatprep.subr.bf16.mxu0 0
        %663 = vmatpush1.bf16.msra.mxu0 0
        %664 = vmatprep.subr.bf16.mxu0 0
        %665 = vmatpush1.bf16.msra.mxu0 0
        %666 = vmatprep.mubr.bf16.mxu0 0
        %667 = vmatmul.mubr.bf16.gmra.mrb[0].mxu0 %v523
        %v668 = vpop.f32.mrb[0].mxu0
        %v669 = vadd.f32 0.0, %v668
        %v670 = vpop.f32.mrb[0].mxu0
        %v671 = vpop.f32.mrb[0].mxu0
        %v672 = vadd.f32 0.0, %v671
        %v673 = vpop.f32.mrb[0].mxu0
        %674 = vmatprep.mubr.bf16.mxu0 0
        %675 = vmatmul.mubr.bf16.gmra.mrb[0].mxu0 %v526
        %v676 = vpop.f32.mrb[0].mxu0
        %v677 = vadd.f32 0.0, %v676
        %v678 = vpop.f32.mrb[0].mxu0
        %v679 = vpop.f32.mrb[0].mxu0
        %v680 = vadd.f32 0.0, %v679
        %v681 = vpop.f32.mrb[0].mxu0
        %682 = vmatprep.mubr.bf16.mxu0 0
        %683 = vmatmul.mubr.bf16.gmra.mrb[0].mxu0 %v529
        %v684 = vpop.f32.mrb[0].mxu0
        %v685 = vadd.f32 0.0, %v684
        %v686 = vpop.f32.mrb[0].mxu0
        %v687 = vpop.f32.mrb[0].mxu0
        %v688 = vadd.f32 0.0, %v687
        %v689 = vpop.f32.mrb[0].mxu0
        %690 = vmatprep.mubr.bf16.mxu0 0
        %691 = vmatmul.mubr.bf16.gmra.mrb[0].mxu0 %v532
        %v692 = vpop.f32.mrb[0].mxu0
        %v693 = vadd.f32 0.0, %v692
        %v694 = vpop.f32.mrb[0].mxu0
        %v695 = vpop.f32.mrb[0].mxu0
        %v696 = vadd.f32 0.0, %v695
        %v697 = vpop.f32.mrb[0].mxu0
        %698 = vmatprep.mubr.bf16.mxu0 0
        %699 = vmatmul.mubr.bf16.gmra.mrb[0].mxu0 %v535
        %v700 = vpop.f32.mrb[0].mxu0
        %v701 = vadd.f32 0.0, %v700
        %v702 = vpop.f32.mrb[0].mxu0
        %v703 = vpop.f32.mrb[0].mxu0
        %v704 = vadd.f32 0.0, %v703
        %v705 = vpop.f32.mrb[0].mxu0
        %706 = vmatprep.mubr.bf16.mxu0 0
        %707 = vmatmul.mubr.bf16.gmra.mrb[0].mxu0 %v538
        %v708 = vpop.f32.mrb[0].mxu0
        %v709 = vadd.f32 0.0, %v708
        %v710 = vpop.f32.mrb[0].mxu0
        %v711 = vpop.f32.mrb[0].mxu0
        %v712 = vadd.f32 0.0, %v711
        %v713 = vpop.f32.mrb[0].mxu0
        %714 = vmatprep.mubr.bf16.mxu0 0
        %715 = vmatmul.mubr.bf16.gmra.mrb[0].mxu0 %v541
        %v716 = vpop.f32.mrb[0].mxu0
        %v717 = vadd.f32 0.0, %v716
        %v718 = vpop.f32.mrb[0].mxu0
        %v719 = vpop.f32.mrb[0].mxu0
        %v720 = vadd.f32 0.0, %v719
        %v721 = vpop.f32.mrb[0].mxu0
        %722 = vmatprep.mubr.bf16.mxu0 0
        %723 = vmatmul.mubr.bf16.gmra.mrb[0].mxu0 %v544
        %v724 = vpop.f32.mrb[0].mxu0
        %v725 = vadd.f32 0.0, %v724
        %v726 = vpop.f32.mrb[0].mxu0
        %v727 = vpop.f32.mrb[0].mxu0
        %v728 = vadd.f32 0.0, %v727
        %v729 = vpop.f32.mrb[0].mxu0
        %730 = vmatprep.mubr.bf16.mxu0 0
        %731 = vmatmul.mubr.bf16.gmra.mrb[0].mxu0 %v547
        %v732 = vpop.f32.mrb[0].mxu0
        %v733 = vadd.f32 0.0, %v732
        %v734 = vpop.f32.mrb[0].mxu0
        %v735 = vpop.f32.mrb[0].mxu0
        %v736 = vadd.f32 0.0, %v735
        %v737 = vpop.f32.mrb[0].mxu0
        %738 = vmatprep.mubr.bf16.mxu0 0
        %739 = vmatmul.mubr.bf16.gmra.mrb[0].mxu0 %v550
        %v740 = vpop.f32.mrb[0].mxu0
        %v741 = vadd.f32 0.0, %v740
        %v742 = vpop.f32.mrb[0].mxu0
        %v743 = vpop.f32.mrb[0].mxu0
        %v744 = vadd.f32 0.0, %v743
        %v745 = vpop.f32.mrb[0].mxu0
        %746 = vmatprep.mubr.bf16.mxu0 0
        %747 = vmatmul.mubr.bf16.gmra.mrb[0].mxu0 %v553
        %v748 = vpop.f32.mrb[0].mxu0
        %v749 = vadd.f32 0.0, %v748
        %v750 = vpop.f32.mrb[0].mxu0
        %v751 = vpop.f32.mrb[0].mxu0
        %v752 = vadd.f32 0.0, %v751
        %v753 = vpop.f32.mrb[0].mxu0
        %754 = vmatprep.mubr.bf16.mxu0 0
        %755 = vmatmul.mubr.bf16.gmra.mrb[0].mxu0 %v556
        %v756 = vpop.f32.mrb[0].mxu0
        %v757 = vadd.f32 0.0, %v756
        %v758 = vpop.f32.mrb[0].mxu0
        %v759 = vpop.f32.mrb[0].mxu0
        %v760 = vadd.f32 0.0, %v759
        %v761 = vpop.f32.mrb[0].mxu0
        %762 = vmatprep.mubr.bf16.mxu0 0
        %763 = vmatmul.mubr.bf16.gmra.mrb[0].mxu0 %v559
        %v764 = vpop.f32.mrb[0].mxu0
        %v765 = vadd.f32 0.0, %v764
        %v766 = vpop.f32.mrb[0].mxu0
        %v767 = vpop.f32.mrb[0].mxu0
        %v768 = vadd.f32 0.0, %v767
        %v769 = vpop.f32.mrb[0].mxu0
        %770 = vmatprep.mubr.bf16.mxu0 0
        %771 = vmatmul.mubr.bf16.gmra.mrb[0].mxu0 %v562
        %v772 = vpop.f32.mrb[0].mxu0
        %v773 = vadd.f32 0.0, %v772
        %v774 = vpop.f32.mrb[0].mxu0
        %v775 = vpop.f32.mrb[0].mxu0
        %v776 = vadd.f32 0.0, %v775
        %v777 = vpop.f32.mrb[0].mxu0
        %778 = vmatprep.mubr.bf16.mxu0 0
        %779 = vmatmul.mubr.bf16.gmra.mrb[0].mxu0 %v565
        %v780 = vpop.f32.mrb[0].mxu0
        %v781 = vadd.f32 0.0, %v780
        %v782 = vpop.f32.mrb[0].mxu0
        %v783 = vpop.f32.mrb[0].mxu0
        %v784 = vadd.f32 0.0, %v783
        %v785 = vpop.f32.mrb[0].mxu0
        %786 = vmatprep.mubr.bf16.mxu0 0
        %787 = vmatmul.mubr.bf16.gmra.mrb[0].mxu0 %v568
        %v788 = vpop.f32.mrb[0].mxu0
        %v789 = vadd.f32 0.0, %v788
        %v790 = vpop.f32.mrb[0].mxu0
        %v791 = vpop.f32.mrb[0].mxu0
        %v792 = vadd.f32 0.0, %v791
        %v793 = vpop.f32.mrb[0].mxu0
        %794 = vmatprep.mubr.bf16.mxu0 0
        %795 = vmatmul.mubr.bf16.gmra.mrb[0].mxu0 %v571
        %v796 = vpop.f32.mrb[0].mxu0
        %v797 = vadd.f32 0.0, %v796
        %v798 = vpop.f32.mrb[0].mxu0
        %v799 = vpop.f32.mrb[0].mxu0
        %v800 = vadd.f32 0.0, %v799
        %v801 = vpop.f32.mrb[0].mxu0
        %802 = vmatprep.mubr.bf16.mxu0 0
        %803 = vmatmul.mubr.bf16.gmra.mrb[0].mxu0 %v574
        %v804 = vpop.f32.mrb[0].mxu0
        %v805 = vadd.f32 0.0, %v804
        %v806 = vpop.f32.mrb[0].mxu0
        %v807 = vpop.f32.mrb[0].mxu0
        %v808 = vadd.f32 0.0, %v807
        %v809 = vpop.f32.mrb[0].mxu0
        %810 = vmatprep.mubr.bf16.mxu0 0
        %811 = vmatmul.mubr.bf16.gmra.mrb[0].mxu0 %v577
        %v812 = vpop.f32.mrb[0].mxu0
        %v813 = vadd.f32 0.0, %v812
        %v814 = vpop.f32.mrb[0].mxu0
        %v815 = vpop.f32.mrb[0].mxu0
        %v816 = vadd.f32 0.0, %v815
        %v817 = vpop.f32.mrb[0].mxu0
        %818 = vmatprep.mubr.bf16.mxu0 0
        %819 = vmatmul.mubr.bf16.gmra.mrb[0].mxu0 %v580
        %v820 = vpop.f32.mrb[0].mxu0
        %v821 = vadd.f32 0.0, %v820
        %v822 = vpop.f32.mrb[0].mxu0
        %v823 = vpop.f32.mrb[0].mxu0
        %v824 = vadd.f32 0.0, %v823
        %v825 = vpop.f32.mrb[0].mxu0
        %826 = vmatprep.mubr.bf16.mxu0 0
        %827 = vmatmul.mubr.bf16.gmra.mrb[0].mxu0 %v583
        %v828 = vpop.f32.mrb[0].mxu0
        %v829 = vadd.f32 0.0, %v828
        %v830 = vpop.f32.mrb[0].mxu0
        %v831 = vpop.f32.mrb[0].mxu0
        %v832 = vadd.f32 0.0, %v831
        %v833 = vpop.f32.mrb[0].mxu0
        %834 = vmatprep.mubr.bf16.mxu0 0
        %835 = vmatmul.mubr.bf16.gmra.mrb[0].mxu0 %v586
        %v836 = vpop.f32.mrb[0].mxu0
        %v837 = vadd.f32 0.0, %v836
        %v838 = vpop.f32.mrb[0].mxu0
        %v839 = vpop.f32.mrb[0].mxu0
        %v840 = vadd.f32 0.0, %v839
        %v841 = vpop.f32.mrb[0].mxu0
        %842 = vmatprep.mubr.bf16.mxu0 0
        %843 = vmatmul.mubr.bf16.gmra.mrb[0].mxu0 %v589
        %v844 = vpop.f32.mrb[0].mxu0
        %v845 = vadd.f32 0.0, %v844
        %v846 = vpop.f32.mrb[0].mxu0
        %v847 = vpop.f32.mrb[0].mxu0
        %v848 = vadd.f32 0.0, %v847
        %v849 = vpop.f32.mrb[0].mxu0
        %850 = vmatprep.mubr.bf16.mxu0 0
        %851 = vmatmul.mubr.bf16.gmra.mrb[0].mxu0 %v592
        %v852 = vpop.f32.mrb[0].mxu0
        %v853 = vadd.f32 0.0, %v852
        %v854 = vpop.f32.mrb[0].mxu0
        %v855 = vpop.f32.mrb[0].mxu0
        %v856 = vadd.f32 0.0, %v855
        %v857 = vpop.f32.mrb[0].mxu0
        %858 = vmatprep.mubr.bf16.mxu0 0
        %859 = vmatmul.mubr.bf16.gmra.mrb[0].mxu0 %v595
        %v860 = vpop.f32.mrb[0].mxu0
        %v861 = vadd.f32 0.0, %v860
        %v862 = vpop.f32.mrb[0].mxu0
        %v863 = vpop.f32.mrb[0].mxu0
        %v864 = vadd.f32 0.0, %v863
        %v865 = vpop.f32.mrb[0].mxu0
        %866 = vmatprep.mubr.bf16.mxu0 0
        %867 = vmatmul.mubr.bf16.gmra.mrb[0].mxu0 %v598
        %v868 = vpop.f32.mrb[0].mxu0
        %v869 = vadd.f32 0.0, %v868
        %v870 = vpop.f32.mrb[0].mxu0
        %v871 = vpop.f32.mrb[0].mxu0
        %v872 = vadd.f32 0.0, %v871
        %v873 = vpop.f32.mrb[0].mxu0
        %874 = vmatprep.mubr.bf16.mxu0 0
        %875 = vmatmul.mubr.bf16.gmra.mrb[0].mxu0 %v601
        %v876 = vpop.f32.mrb[0].mxu0
        %v877 = vadd.f32 0.0, %v876
        %v878 = vpop.f32.mrb[0].mxu0
        %v879 = vpop.f32.mrb[0].mxu0
        %v880 = vadd.f32 0.0, %v879
        %v881 = vpop.f32.mrb[0].mxu0
        %882 = vmatprep.mubr.bf16.mxu0 0
        %883 = vmatmul.mubr.bf16.gmra.mrb[0].mxu0 %v604
        %v884 = vpop.f32.mrb[0].mxu0
        %v885 = vadd.f32 0.0, %v884
        %v886 = vpop.f32.mrb[0].mxu0
        %v887 = vpop.f32.mrb[0].mxu0
        %v888 = vadd.f32 0.0, %v887
        %v889 = vpop.f32.mrb[0].mxu0
        %890 = vmatprep.mubr.bf16.mxu0 0
        %891 = vmatmul.mubr.bf16.gmra.mrb[0].mxu0 %v607
        %v892 = vpop.f32.mrb[0].mxu0
        %v893 = vadd.f32 0.0, %v892
        %v894 = vpop.f32.mrb[0].mxu0
        %v895 = vpop.f32.mrb[0].mxu0
        %v896 = vadd.f32 0.0, %v895
        %v897 = vpop.f32.mrb[0].mxu0
        %898 = vmatprep.mubr.bf16.mxu0 0
        %899 = vmatmul.mubr.bf16.gmra.mrb[0].mxu0 %v610
        %v900 = vpop.f32.mrb[0].mxu0
        %v901 = vadd.f32 0.0, %v900
        %v902 = vpop.f32.mrb[0].mxu0
        %v903 = vpop.f32.mrb[0].mxu0
        %v904 = vadd.f32 0.0, %v903
        %v905 = vpop.f32.mrb[0].mxu0
        %906 = vmatprep.mubr.bf16.mxu0 0
        %907 = vmatmul.mubr.bf16.gmra.mrb[0].mxu0 %v613
        %v908 = vpop.f32.mrb[0].mxu0
        %v909 = vadd.f32 0.0, %v908
        %v910 = vpop.f32.mrb[0].mxu0
        %v911 = vpop.f32.mrb[0].mxu0
        %v912 = vadd.f32 0.0, %v911
        %v913 = vpop.f32.mrb[0].mxu0
        %914 = vmatprep.mubr.bf16.mxu0 0
        %915 = vmatmul.mubr.bf16.gmra.mrb[0].mxu0 %v616
        %v916 = vpop.f32.mrb[0].mxu0
        %v917 = vadd.f32 0.0, %v916
        %v918 = vpop.f32.mrb[0].mxu0
        %v919 = vpop.f32.mrb[0].mxu0
        %v920 = vadd.f32 0.0, %v919
        %v921 = vpop.f32.mrb[0].mxu0
        %922 = vmatprep.mubr.bf16.mxu0 0
        %923 = vmatmul.mubr.bf16.gmra.mrb[0].mxu0 %v619
        %v924 = vpop.f32.mrb[0].mxu0
        %v925 = vadd.f32 0.0, %v924
        %v926 = vpop.f32.mrb[0].mxu0
        %v927 = vpop.f32.mrb[0].mxu0
        %v928 = vadd.f32 0.0, %v927
        %v929 = vpop.f32.mrb[0].mxu0
        %930 = vmatprep.mubr.bf16.mxu0 0
        %931 = vmatmul.mubr.bf16.gmra.mrb[0].mxu0 %v622
        %v932 = vpop.f32.mrb[0].mxu0
        %v933 = vadd.f32 0.0, %v932
        %v934 = vpop.f32.mrb[0].mxu0
        %v935 = vpop.f32.mrb[0].mxu0
        %v936 = vadd.f32 0.0, %v935
        %v937 = vpop.f32.mrb[0].mxu0
        %938 = vmatprep.mubr.bf16.mxu0 0
        %939 = vmatmul.mubr.bf16.gmra.mrb[0].mxu0 %v625
        %v940 = vpop.f32.mrb[0].mxu0
        %v941 = vadd.f32 0.0, %v940
        %v942 = vpop.f32.mrb[0].mxu0
        %v943 = vpop.f32.mrb[0].mxu0
        %v944 = vadd.f32 0.0, %v943
        %v945 = vpop.f32.mrb[0].mxu0
        %946 = vmatprep.mubr.bf16.mxu0 0
        %947 = vmatmul.mubr.bf16.gmra.mrb[0].mxu0 %v628
        %v948 = vpop.f32.mrb[0].mxu0
        %v949 = vadd.f32 0.0, %v948
        %v950 = vpop.f32.mrb[0].mxu0
        %v951 = vpop.f32.mrb[0].mxu0
        %v952 = vadd.f32 0.0, %v951
        %v953 = vpop.f32.mrb[0].mxu0
        %954 = vdwg.mxu0
        %v955 = vadd.f32 %v263, %v669
        %v956 = vadd.f32 %v263, %v672
        %v957 = vadd.f32 %v263, %v677
        %v958 = vadd.f32 %v263, %v680
        %v959 = vadd.f32 %v263, %v685
        %v960 = vadd.f32 %v263, %v688
        %v961 = vadd.f32 %v263, %v693
        %v962 = vadd.f32 %v263, %v696
        %v963 = vadd.f32 %v263, %v701
        %v964 = vadd.f32 %v263, %v704
        %v965 = vadd.f32 %v263, %v709
        %v966 = vadd.f32 %v263, %v712
        %v967 = vadd.f32 %v263, %v717
        %v968 = vadd.f32 %v263, %v720
        %v969 = vadd.f32 %v263, %v725
        %v970 = vadd.f32 %v263, %v728
        %v971 = vadd.f32 %v263, %v733
        %v972 = vadd.f32 %v263, %v736
        %v973 = vadd.f32 %v263, %v741
        %v974 = vadd.f32 %v263, %v744
        %v975 = vadd.f32 %v263, %v749
        %v976 = vadd.f32 %v263, %v752
        %v977 = vadd.f32 %v263, %v757
        %v978 = vadd.f32 %v263, %v760
        %v979 = vadd.f32 %v263, %v765
        %v980 = vadd.f32 %v263, %v768
        %v981 = vadd.f32 %v263, %v773
        %v982 = vadd.f32 %v263, %v776
        %v983 = vadd.f32 %v263, %v781
        %v984 = vadd.f32 %v263, %v784
        %v985 = vadd.f32 %v263, %v789
        %v986 = vadd.f32 %v263, %v792
        %v987 = vadd.f32 %v263, %v797
        %v988 = vadd.f32 %v263, %v800
        %v989 = vadd.f32 %v263, %v805
        %v990 = vadd.f32 %v263, %v808
        %v991 = vadd.f32 %v263, %v813
        %v992 = vadd.f32 %v263, %v816
        %v993 = vadd.f32 %v263, %v821
        %v994 = vadd.f32 %v263, %v824
        %v995 = vadd.f32 %v263, %v829
        %v996 = vadd.f32 %v263, %v832
        %v997 = vadd.f32 %v263, %v837
        %v998 = vadd.f32 %v263, %v840
        %v999 = vadd.f32 %v263, %v845
        %v1000 = vadd.f32 %v263, %v848
        %v1001 = vadd.f32 %v263, %v853
        %v1002 = vadd.f32 %v263, %v856
        %v1003 = vadd.f32 %v263, %v861
        %v1004 = vadd.f32 %v263, %v864
        %v1005 = vadd.f32 %v263, %v869
        %v1006 = vadd.f32 %v263, %v872
        %v1007 = vadd.f32 %v263, %v877
        %v1008 = vadd.f32 %v263, %v880
        %v1009 = vadd.f32 %v263, %v885
        %v1010 = vadd.f32 %v263, %v888
        %v1011 = vadd.f32 %v263, %v893
        %v1012 = vadd.f32 %v263, %v896
        %v1013 = vadd.f32 %v263, %v901
        %v1014 = vadd.f32 %v263, %v904
        %v1015 = vadd.f32 %v263, %v909
        %v1016 = vadd.f32 %v263, %v912
        %v1017 = vadd.f32 %v263, %v917
        %v1018 = vadd.f32 %v263, %v920
        %v1019 = vadd.f32 %v263, %v925
        %v1020 = vadd.f32 %v263, %v928
        %v1021 = vadd.f32 %v263, %v933
        %v1022 = vadd.f32 %v263, %v936
        %v1023 = vadd.f32 %v263, %v941
        %v1024 = vadd.f32 %v263, %v944
        %v1025 = vadd.f32 %v263, %v949
        %v1026 = vadd.f32 %v263, %v952
        %s1027 = scalar_lea.vmem %s243, 4
        %v1028 = vld [vmem:[%s1027] sm:$0x3]
        %v1032 = vunpack.c.l.b16 %v337
        %v1033 = vunpack.c.l.b16 %v338
        %v1034 = vunpack.c.l.b16 %v339
        %v1035 = vpack.c.b16 %v417, %v416
        %v1036 = vpack.c.b16 %v419, %v418
        %v1037 = vpack.c.b16 %v421, %v420
        %v1038 = vpack.c.b16 %v423, %v422
        %v1039 = vpack.c.b16 %v425, %v424
        %v1040 = vpack.c.b16 %v427, %v426
        %v1041 = vpack.c.b16 %v429, %v428
        %v1042 = vpack.c.b16 %v431, %v430
        %v1043 = vpack.c.b16 %v433, %v432
        %v1044 = vpack.c.b16 %v435, %v434
        %v1045 = vpack.c.b16 %v437, %v436
        %v1046 = vpack.c.b16 %v439, %v438
        %v1047 = vpack.c.b16 %v441, %v440
        %v1048 = vpack.c.b16 %v443, %v442
        %v1049 = vpack.c.b16 %v445, %v444
        %v1050 = vpack.c.b16 %v447, %v446
        %v1051 = vpack.c.b16 %v449, %v448
        %v1052 = vpack.c.b16 %v451, %v450
        %v1053 = vpack.c.b16 %v453, %v452
        %v1054 = vpack.c.b16 %v455, %v454
        %v1055 = vpack.c.b16 %v457, %v456
        %v1056 = vpack.c.b16 %v459, %v458
        %v1057 = vpack.c.b16 %v461, %v460
        %v1058 = vpack.c.b16 %v463, %v462
        %v1059 = vpack.c.b16 %v465, %v464
        %v1060 = vpack.c.b16 %v467, %v466
        %v1061 = vpack.c.b16 %v469, %v468
        %v1062 = vpack.c.b16 %v471, %v470
        %v1063 = vpack.c.b16 %v473, %v472
        %v1064 = vpack.c.b16 %v475, %v474
        %v1065 = vpack.c.b16 %v477, %v476
        %v1066 = vpack.c.b16 %v479, %v478
        %v1067 = vpack.c.b16 %v481, %v480
        %v1068 = vpack.c.b16 %v483, %v482
        %v1069 = vpack.c.b16 %v1032, %v484
        %v1070 = vpack.c.b16 %v1034, %v1033
        %v1072 = vsel %vm521, %v1035, 0
        %v1075 = vsel %vm521, %v1036, 0
        %v1078 = vsel %vm521, %v1037, 0
        %v1081 = vsel %vm521, %v1038, 0
        %v1084 = vsel %vm521, %v1039, 0
        %v1087 = vsel %vm521, %v1040, 0
        %v1090 = vsel %vm521, %v1041, 0
        %v1093 = vsel %vm521, %v1042, 0
        %v1096 = vsel %vm521, %v1043, 0
        %v1099 = vsel %vm521, %v1044, 0
        %v1102 = vsel %vm521, %v1045, 0
        %v1105 = vsel %vm521, %v1046, 0
        %v1108 = vsel %vm521, %v1047, 0
        %v1111 = vsel %vm521, %v1048, 0
        %v1114 = vsel %vm521, %v1049, 0
        %v1117 = vsel %vm521, %v1050, 0
        %v1120 = vsel %vm521, %v1051, 0
        %v1123 = vsel %vm521, %v1052, 0
        %v1126 = vsel %vm521, %v1053, 0
        %v1129 = vsel %vm521, %v1054, 0
        %v1132 = vsel %vm521, %v1055, 0
        %v1135 = vsel %vm521, %v1056, 0
        %v1138 = vsel %vm521, %v1057, 0
        %v1141 = vsel %vm521, %v1058, 0
        %v1144 = vsel %vm521, %v1059, 0
        %v1147 = vsel %vm521, %v1060, 0
        %v1150 = vsel %vm521, %v1061, 0
        %v1153 = vsel %vm521, %v1062, 0
        %v1156 = vsel %vm521, %v1063, 0
        %v1159 = vsel %vm521, %v1064, 0
        %v1162 = vsel %vm521, %v1065, 0
        %v1165 = vsel %vm521, %v1066, 0
        %v1168 = vsel %vm521, %v1067, 0
        %v1171 = vsel %vm521, %v1068, 0
        %v1174 = vsel %vm521, %v1069, 0
        %v1177 = vsel %vm521, %v1070, 0
        %v1180 = vsel %vm630, %v1028, 0
        %1182 = vmatprep.subr.bf16.mxu0 0
        %1183 = vmatpush1.bf16.msra.mxu0 %v1180
        %1184 = vmatprep.subr.bf16.mxu0 0
        %1185 = vmatpush1.bf16.msra.mxu0 0
        %1186 = vmatprep.subr.bf16.mxu0 0
        %1187 = vmatpush1.bf16.msra.mxu0 0
        %1188 = vmatprep.subr.bf16.mxu0 0
        %1189 = vmatpush1.bf16.msra.mxu0 0
        %1190 = vmatprep.subr.bf16.mxu0 0
        %1191 = vmatpush1.bf16.msra.mxu0 0
        %1192 = vmatprep.subr.bf16.mxu0 0
        %1193 = vmatpush1.bf16.msra.mxu0 0
        %1194 = vmatprep.subr.bf16.mxu0 0
        %1195 = vmatpush1.bf16.msra.mxu0 0
        %1196 = vmatprep.subr.bf16.mxu0 0
        %1197 = vmatpush1.bf16.msra.mxu0 0
        %1198 = vmatprep.subr.bf16.mxu0 0
        %1199 = vmatpush1.bf16.msra.mxu0 0
        %1200 = vmatprep.subr.bf16.mxu0 0
        %1201 = vmatpush1.bf16.msra.mxu0 0
        %1202 = vmatprep.subr.bf16.mxu0 0
        %1203 = vmatpush1.bf16.msra.mxu0 0
        %1204 = vmatprep.subr.bf16.mxu0 0
        %1205 = vmatpush1.bf16.msra.mxu0 0
        %1206 = vmatprep.subr.bf16.mxu0 0
        %1207 = vmatpush1.bf16.msra.mxu0 0
        %1208 = vmatprep.subr.bf16.mxu0 0
        %1209 = vmatpush1.bf16.msra.mxu0 0
        %1210 = vmatprep.subr.bf16.mxu0 0
        %1211 = vmatpush1.bf16.msra.mxu0 0
        %1212 = vmatprep.subr.bf16.mxu0 0
        %1213 = vmatpush1.bf16.msra.mxu0 0
        %1214 = vmatprep.mubr.bf16.mxu0 0
        %1215 = vmatmul.mubr.bf16.gmra.mrb[0].mxu0 %v1072
        %v1216 = vpop.f32.mrb[0].mxu0
        %v1217 = vadd.f32 0.0, %v1216
        %v1218 = vpop.f32.mrb[0].mxu0
        %v1219 = vpop.f32.mrb[0].mxu0
        %v1220 = vadd.f32 0.0, %v1219
        %v1221 = vpop.f32.mrb[0].mxu0
        %1222 = vmatprep.mubr.bf16.mxu0 0
        %1223 = vmatmul.mubr.bf16.gmra.mrb[0].mxu0 %v1075
        %v1224 = vpop.f32.mrb[0].mxu0
        %v1225 = vadd.f32 0.0, %v1224
        %v1226 = vpop.f32.mrb[0].mxu0
        %v1227 = vpop.f32.mrb[0].mxu0
        %v1228 = vadd.f32 0.0, %v1227
        %v1229 = vpop.f32.mrb[0].mxu0
        %1230 = vmatprep.mubr.bf16.mxu0 0
        %1231 = vmatmul.mubr.bf16.gmra.mrb[0].mxu0 %v1078
        %v1232 = vpop.f32.mrb[0].mxu0
        %v1233 = vadd.f32 0.0, %v1232
        %v1234 = vpop.f32.mrb[0].mxu0
        %v1235 = vpop.f32.mrb[0].mxu0
        %v1236 = vadd.f32 0.0, %v1235
        %v1237 = vpop.f32.mrb[0].mxu0
        %1238 = vmatprep.mubr.bf16.mxu0 0
        %1239 = vmatmul.mubr.bf16.gmra.mrb[0].mxu0 %v1081
        %v1240 = vpop.f32.mrb[0].mxu0
        %v1241 = vadd.f32 0.0, %v1240
        %v1242 = vpop.f32.mrb[0].mxu0
        %v1243 = vpop.f32.mrb[0].mxu0
        %v1244 = vadd.f32 0.0, %v1243
        %v1245 = vpop.f32.mrb[0].mxu0
        %1246 = vmatprep.mubr.bf16.mxu0 0
        %1247 = vmatmul.mubr.bf16.gmra.mrb[0].mxu0 %v1084
        %v1248 = vpop.f32.mrb[0].mxu0
        %v1249 = vadd.f32 0.0, %v1248
        %v1250 = vpop.f32.mrb[0].mxu0
        %v1251 = vpop.f32.mrb[0].mxu0
        %v1252 = vadd.f32 0.0, %v1251
        %v1253 = vpop.f32.mrb[0].mxu0
        %1254 = vmatprep.mubr.bf16.mxu0 0
        %1255 = vmatmul.mubr.bf16.gmra.mrb[0].mxu0 %v1087
        %v1256 = vpop.f32.mrb[0].mxu0
        %v1257 = vadd.f32 0.0, %v1256
        %v1258 = vpop.f32.mrb[0].mxu0
        %v1259 = vpop.f32.mrb[0].mxu0
        %v1260 = vadd.f32 0.0, %v1259
        %v1261 = vpop.f32.mrb[0].mxu0
        %1262 = vmatprep.mubr.bf16.mxu0 0
        %1263 = vmatmul.mubr.bf16.gmra.mrb[0].mxu0 %v1090
        %v1264 = vpop.f32.mrb[0].mxu0
        %v1265 = vadd.f32 0.0, %v1264
        %v1266 = vpop.f32.mrb[0].mxu0
        %v1267 = vpop.f32.mrb[0].mxu0
        %v1268 = vadd.f32 0.0, %v1267
        %v1269 = vpop.f32.mrb[0].mxu0
        %1270 = vmatprep.mubr.bf16.mxu0 0
        %1271 = vmatmul.mubr.bf16.gmra.mrb[0].mxu0 %v1093
        %v1272 = vpop.f32.mrb[0].mxu0
        %v1273 = vadd.f32 0.0, %v1272
        %v1274 = vpop.f32.mrb[0].mxu0
        %v1275 = vpop.f32.mrb[0].mxu0
        %v1276 = vadd.f32 0.0, %v1275
        %v1277 = vpop.f32.mrb[0].mxu0
        %1278 = vmatprep.mubr.bf16.mxu0 0
        %1279 = vmatmul.mubr.bf16.gmra.mrb[0].mxu0 %v1096
        %v1280 = vpop.f32.mrb[0].mxu0
        %v1281 = vadd.f32 0.0, %v1280
        %v1282 = vpop.f32.mrb[0].mxu0
        %v1283 = vpop.f32.mrb[0].mxu0
        %v1284 = vadd.f32 0.0, %v1283
        %v1285 = vpop.f32.mrb[0].mxu0
        %1286 = vmatprep.mubr.bf16.mxu0 0
        %1287 = vmatmul.mubr.bf16.gmra.mrb[0].mxu0 %v1099
        %v1288 = vpop.f32.mrb[0].mxu0
        %v1289 = vadd.f32 0.0, %v1288
        %v1290 = vpop.f32.mrb[0].mxu0
        %v1291 = vpop.f32.mrb[0].mxu0
        %v1292 = vadd.f32 0.0, %v1291
        %v1293 = vpop.f32.mrb[0].mxu0
        %1294 = vmatprep.mubr.bf16.mxu0 0
        %1295 = vmatmul.mubr.bf16.gmra.mrb[0].mxu0 %v1102
        %v1296 = vpop.f32.mrb[0].mxu0
        %v1297 = vadd.f32 0.0, %v1296
        %v1298 = vpop.f32.mrb[0].mxu0
        %v1299 = vpop.f32.mrb[0].mxu0
        %v1300 = vadd.f32 0.0, %v1299
        %v1301 = vpop.f32.mrb[0].mxu0
        %1302 = vmatprep.mubr.bf16.mxu0 0
        %1303 = vmatmul.mubr.bf16.gmra.mrb[0].mxu0 %v1105
        %v1304 = vpop.f32.mrb[0].mxu0
        %v1305 = vadd.f32 0.0, %v1304
        %v1306 = vpop.f32.mrb[0].mxu0
        %v1307 = vpop.f32.mrb[0].mxu0
        %v1308 = vadd.f32 0.0, %v1307
        %v1309 = vpop.f32.mrb[0].mxu0
        %1310 = vmatprep.mubr.bf16.mxu0 0
        %1311 = vmatmul.mubr.bf16.gmra.mrb[0].mxu0 %v1108
        %v1312 = vpop.f32.mrb[0].mxu0
        %v1313 = vadd.f32 0.0, %v1312
        %v1314 = vpop.f32.mrb[0].mxu0
        %v1315 = vpop.f32.mrb[0].mxu0
        %v1316 = vadd.f32 0.0, %v1315
        %v1317 = vpop.f32.mrb[0].mxu0
        %1318 = vmatprep.mubr.bf16.mxu0 0
        %1319 = vmatmul.mubr.bf16.gmra.mrb[0].mxu0 %v1111
        %v1320 = vpop.f32.mrb[0].mxu0
        %v1321 = vadd.f32 0.0, %v1320
        %v1322 = vpop.f32.mrb[0].mxu0
        %v1323 = vpop.f32.mrb[0].mxu0
        %v1324 = vadd.f32 0.0, %v1323
        %v1325 = vpop.f32.mrb[0].mxu0
        %1326 = vmatprep.mubr.bf16.mxu0 0
        %1327 = vmatmul.mubr.bf16.gmra.mrb[0].mxu0 %v1114
        %v1328 = vpop.f32.mrb[0].mxu0
        %v1329 = vadd.f32 0.0, %v1328
        %v1330 = vpop.f32.mrb[0].mxu0
        %v1331 = vpop.f32.mrb[0].mxu0
        %v1332 = vadd.f32 0.0, %v1331
        %v1333 = vpop.f32.mrb[0].mxu0
        %1334 = vmatprep.mubr.bf16.mxu0 0
        %1335 = vmatmul.mubr.bf16.gmra.mrb[0].mxu0 %v1117
        %v1336 = vpop.f32.mrb[0].mxu0
        %v1337 = vadd.f32 0.0, %v1336
        %v1338 = vpop.f32.mrb[0].mxu0
        %v1339 = vpop.f32.mrb[0].mxu0
        %v1340 = vadd.f32 0.0, %v1339
        %v1341 = vpop.f32.mrb[0].mxu0
        %1342 = vmatprep.mubr.bf16.mxu0 0
        %1343 = vmatmul.mubr.bf16.gmra.mrb[0].mxu0 %v1120
        %v1344 = vpop.f32.mrb[0].mxu0
        %v1345 = vadd.f32 0.0, %v1344
        %v1346 = vpop.f32.mrb[0].mxu0
        %v1347 = vpop.f32.mrb[0].mxu0
        %v1348 = vadd.f32 0.0, %v1347
        %v1349 = vpop.f32.mrb[0].mxu0
        %1350 = vmatprep.mubr.bf16.mxu0 0
        %1351 = vmatmul.mubr.bf16.gmra.mrb[0].mxu0 %v1123
        %v1352 = vpop.f32.mrb[0].mxu0
        %v1353 = vadd.f32 0.0, %v1352
        %v1354 = vpop.f32.mrb[0].mxu0
        %v1355 = vpop.f32.mrb[0].mxu0
        %v1356 = vadd.f32 0.0, %v1355
        %v1357 = vpop.f32.mrb[0].mxu0
        %1358 = vmatprep.mubr.bf16.mxu0 0
        %1359 = vmatmul.mubr.bf16.gmra.mrb[0].mxu0 %v1126
        %v1360 = vpop.f32.mrb[0].mxu0
        %v1361 = vadd.f32 0.0, %v1360
        %v1362 = vpop.f32.mrb[0].mxu0
        %v1363 = vpop.f32.mrb[0].mxu0
        %v1364 = vadd.f32 0.0, %v1363
        %v1365 = vpop.f32.mrb[0].mxu0
        %1366 = vmatprep.mubr.bf16.mxu0 0
        %1367 = vmatmul.mubr.bf16.gmra.mrb[0].mxu0 %v1129
        %v1368 = vpop.f32.mrb[0].mxu0
        %v1369 = vadd.f32 0.0, %v1368
        %v1370 = vpop.f32.mrb[0].mxu0
        %v1371 = vpop.f32.mrb[0].mxu0
        %v1372 = vadd.f32 0.0, %v1371
        %v1373 = vpop.f32.mrb[0].mxu0
        %1374 = vmatprep.mubr.bf16.mxu0 0
        %1375 = vmatmul.mubr.bf16.gmra.mrb[0].mxu0 %v1132
        %v1376 = vpop.f32.mrb[0].mxu0
        %v1377 = vadd.f32 0.0, %v1376
        %v1378 = vpop.f32.mrb[0].mxu0
        %v1379 = vpop.f32.mrb[0].mxu0
        %v1380 = vadd.f32 0.0, %v1379
        %v1381 = vpop.f32.mrb[0].mxu0
        %1382 = vmatprep.mubr.bf16.mxu0 0
        %1383 = vmatmul.mubr.bf16.gmra.mrb[0].mxu0 %v1135
        %v1384 = vpop.f32.mrb[0].mxu0
        %v1385 = vadd.f32 0.0, %v1384
        %v1386 = vpop.f32.mrb[0].mxu0
        %v1387 = vpop.f32.mrb[0].mxu0
        %v1388 = vadd.f32 0.0, %v1387
        %v1389 = vpop.f32.mrb[0].mxu0
        %1390 = vmatprep.mubr.bf16.mxu0 0
        %1391 = vmatmul.mubr.bf16.gmra.mrb[0].mxu0 %v1138
        %v1392 = vpop.f32.mrb[0].mxu0
        %v1393 = vadd.f32 0.0, %v1392
        %v1394 = vpop.f32.mrb[0].mxu0
        %v1395 = vpop.f32.mrb[0].mxu0
        %v1396 = vadd.f32 0.0, %v1395
        %v1397 = vpop.f32.mrb[0].mxu0
        %1398 = vmatprep.mubr.bf16.mxu0 0
        %1399 = vmatmul.mubr.bf16.gmra.mrb[0].mxu0 %v1141
        %v1400 = vpop.f32.mrb[0].mxu0
        %v1401 = vadd.f32 0.0, %v1400
        %v1402 = vpop.f32.mrb[0].mxu0
        %v1403 = vpop.f32.mrb[0].mxu0
        %v1404 = vadd.f32 0.0, %v1403
        %v1405 = vpop.f32.mrb[0].mxu0
        %1406 = vmatprep.mubr.bf16.mxu0 0
        %1407 = vmatmul.mubr.bf16.gmra.mrb[0].mxu0 %v1144
        %v1408 = vpop.f32.mrb[0].mxu0
        %v1409 = vadd.f32 0.0, %v1408
        %v1410 = vpop.f32.mrb[0].mxu0
        %v1411 = vpop.f32.mrb[0].mxu0
        %v1412 = vadd.f32 0.0, %v1411
        %v1413 = vpop.f32.mrb[0].mxu0
        %1414 = vmatprep.mubr.bf16.mxu0 0
        %1415 = vmatmul.mubr.bf16.gmra.mrb[0].mxu0 %v1147
        %v1416 = vpop.f32.mrb[0].mxu0
        %v1417 = vadd.f32 0.0, %v1416
        %v1418 = vpop.f32.mrb[0].mxu0
        %v1419 = vpop.f32.mrb[0].mxu0
        %v1420 = vadd.f32 0.0, %v1419
        %v1421 = vpop.f32.mrb[0].mxu0
        %1422 = vmatprep.mubr.bf16.mxu0 0
        %1423 = vmatmul.mubr.bf16.gmra.mrb[0].mxu0 %v1150
        %v1424 = vpop.f32.mrb[0].mxu0
        %v1425 = vadd.f32 0.0, %v1424
        %v1426 = vpop.f32.mrb[0].mxu0
        %v1427 = vpop.f32.mrb[0].mxu0
        %v1428 = vadd.f32 0.0, %v1427
        %v1429 = vpop.f32.mrb[0].mxu0
        %1430 = vmatprep.mubr.bf16.mxu0 0
        %1431 = vmatmul.mubr.bf16.gmra.mrb[0].mxu0 %v1153
        %v1432 = vpop.f32.mrb[0].mxu0
        %v1433 = vadd.f32 0.0, %v1432
        %v1434 = vpop.f32.mrb[0].mxu0
        %v1435 = vpop.f32.mrb[0].mxu0
        %v1436 = vadd.f32 0.0, %v1435
        %v1437 = vpop.f32.mrb[0].mxu0
        %1438 = vmatprep.mubr.bf16.mxu0 0
        %1439 = vmatmul.mubr.bf16.gmra.mrb[0].mxu0 %v1156
        %v1440 = vpop.f32.mrb[0].mxu0
        %v1441 = vadd.f32 0.0, %v1440
        %v1442 = vpop.f32.mrb[0].mxu0
        %v1443 = vpop.f32.mrb[0].mxu0
        %v1444 = vadd.f32 0.0, %v1443
        %v1445 = vpop.f32.mrb[0].mxu0
        %1446 = vmatprep.mubr.bf16.mxu0 0
        %1447 = vmatmul.mubr.bf16.gmra.mrb[0].mxu0 %v1159
        %v1448 = vpop.f32.mrb[0].mxu0
        %v1449 = vadd.f32 0.0, %v1448
        %v1450 = vpop.f32.mrb[0].mxu0
        %v1451 = vpop.f32.mrb[0].mxu0
        %v1452 = vadd.f32 0.0, %v1451
        %v1453 = vpop.f32.mrb[0].mxu0
        %1454 = vmatprep.mubr.bf16.mxu0 0
        %1455 = vmatmul.mubr.bf16.gmra.mrb[0].mxu0 %v1162
        %v1456 = vpop.f32.mrb[0].mxu0
        %v1457 = vadd.f32 0.0, %v1456
        %v1458 = vpop.f32.mrb[0].mxu0
        %v1459 = vpop.f32.mrb[0].mxu0
        %v1460 = vadd.f32 0.0, %v1459
        %v1461 = vpop.f32.mrb[0].mxu0
        %1462 = vmatprep.mubr.bf16.mxu0 0
        %1463 = vmatmul.mubr.bf16.gmra.mrb[0].mxu0 %v1165
        %v1464 = vpop.f32.mrb[0].mxu0
        %v1465 = vadd.f32 0.0, %v1464
        %v1466 = vpop.f32.mrb[0].mxu0
        %v1467 = vpop.f32.mrb[0].mxu0
        %v1468 = vadd.f32 0.0, %v1467
        %v1469 = vpop.f32.mrb[0].mxu0
        %1470 = vmatprep.mubr.bf16.mxu0 0
        %1471 = vmatmul.mubr.bf16.gmra.mrb[0].mxu0 %v1168
        %v1472 = vpop.f32.mrb[0].mxu0
        %v1473 = vadd.f32 0.0, %v1472
        %v1474 = vpop.f32.mrb[0].mxu0
        %v1475 = vpop.f32.mrb[0].mxu0
        %v1476 = vadd.f32 0.0, %v1475
        %v1477 = vpop.f32.mrb[0].mxu0
        %1478 = vmatprep.mubr.bf16.mxu0 0
        %1479 = vmatmul.mubr.bf16.gmra.mrb[0].mxu0 %v1171
        %v1480 = vpop.f32.mrb[0].mxu0
        %v1481 = vadd.f32 0.0, %v1480
        %v1482 = vpop.f32.mrb[0].mxu0
        %v1483 = vpop.f32.mrb[0].mxu0
        %v1484 = vadd.f32 0.0, %v1483
        %v1485 = vpop.f32.mrb[0].mxu0
        %1486 = vmatprep.mubr.bf16.mxu0 0
        %1487 = vmatmul.mubr.bf16.gmra.mrb[0].mxu0 %v1174
        %v1488 = vpop.f32.mrb[0].mxu0
        %v1489 = vadd.f32 0.0, %v1488
        %v1490 = vpop.f32.mrb[0].mxu0
        %v1491 = vpop.f32.mrb[0].mxu0
        %v1492 = vadd.f32 0.0, %v1491
        %v1493 = vpop.f32.mrb[0].mxu0
        %1494 = vmatprep.mubr.bf16.mxu0 0
        %1495 = vmatmul.mubr.bf16.gmra.mrb[0].mxu0 %v1177
        %v1496 = vpop.f32.mrb[0].mxu0
        %v1497 = vadd.f32 0.0, %v1496
        %v1498 = vpop.f32.mrb[0].mxu0
        %v1499 = vpop.f32.mrb[0].mxu0
        %v1500 = vadd.f32 0.0, %v1499
        %v1501 = vpop.f32.mrb[0].mxu0
        %1502 = vdwg.mxu0
        %v1503 = vadd.f32 %v955, %v1217
        %v1504 = vadd.f32 %v956, %v1220
        %v1505 = vadd.f32 %v957, %v1225
        %v1506 = vadd.f32 %v958, %v1228
        %v1507 = vadd.f32 %v959, %v1233
        %v1508 = vadd.f32 %v960, %v1236
        %v1509 = vadd.f32 %v961, %v1241
        %v1510 = vadd.f32 %v962, %v1244
        %v1511 = vadd.f32 %v963, %v1249
        %v1512 = vadd.f32 %v964, %v1252
        %v1513 = vadd.f32 %v965, %v1257
        %v1514 = vadd.f32 %v966, %v1260
        %v1515 = vadd.f32 %v967, %v1265
        %v1516 = vadd.f32 %v968, %v1268
        %v1517 = vadd.f32 %v969, %v1273
        %v1518 = vadd.f32 %v970, %v1276
        %v1519 = vadd.f32 %v971, %v1281
        %v1520 = vadd.f32 %v972, %v1284
        %v1521 = vadd.f32 %v973, %v1289
        %v1522 = vadd.f32 %v974, %v1292
        %v1523 = vadd.f32 %v975, %v1297
        %v1524 = vadd.f32 %v976, %v1300
        %v1525 = vadd.f32 %v977, %v1305
        %v1526 = vadd.f32 %v978, %v1308
        %v1527 = vadd.f32 %v979, %v1313
        %v1528 = vadd.f32 %v980, %v1316
        %v1529 = vadd.f32 %v981, %v1321
        %v1530 = vadd.f32 %v982, %v1324
        %v1531 = vadd.f32 %v983, %v1329
        %v1532 = vadd.f32 %v984, %v1332
        %v1533 = vadd.f32 %v985, %v1337
        %v1534 = vadd.f32 %v986, %v1340
        %v1535 = vadd.f32 %v987, %v1345
        %v1536 = vadd.f32 %v988, %v1348
        %v1537 = vadd.f32 %v989, %v1353
        %v1538 = vadd.f32 %v990, %v1356
        %v1539 = vadd.f32 %v991, %v1361
        %v1540 = vadd.f32 %v992, %v1364
        %v1541 = vadd.f32 %v993, %v1369
        %v1542 = vadd.f32 %v994, %v1372
        %v1543 = vadd.f32 %v995, %v1377
        %v1544 = vadd.f32 %v996, %v1380
        %v1545 = vadd.f32 %v997, %v1385
        %v1546 = vadd.f32 %v998, %v1388
        %v1547 = vadd.f32 %v999, %v1393
        %v1548 = vadd.f32 %v1000, %v1396
        %v1549 = vadd.f32 %v1001, %v1401
        %v1550 = vadd.f32 %v1002, %v1404
        %v1551 = vadd.f32 %v1003, %v1409
        %v1552 = vadd.f32 %v1004, %v1412
        %v1553 = vadd.f32 %v1005, %v1417
        %v1554 = vadd.f32 %v1006, %v1420
        %v1555 = vadd.f32 %v1007, %v1425
        %v1556 = vadd.f32 %v1008, %v1428
        %v1557 = vadd.f32 %v1009, %v1433
        %v1558 = vadd.f32 %v1010, %v1436
        %v1559 = vadd.f32 %v1011, %v1441
        %v1560 = vadd.f32 %v1012, %v1444
        %v1561 = vadd.f32 %v1013, %v1449
        %v1562 = vadd.f32 %v1014, %v1452
        %v1563 = vadd.f32 %v1015, %v1457
        %v1564 = vadd.f32 %v1016, %v1460
        %v1565 = vadd.f32 %v1017, %v1465
        %v1566 = vadd.f32 %v1018, %v1468
        %v1567 = vadd.f32 %v1019, %v1473
        %v1568 = vadd.f32 %v1020, %v1476
        %v1569 = vadd.f32 %v1021, %v1481
        %v1570 = vadd.f32 %v1022, %v1484
        %v1571 = vadd.f32 %v1023, %v1489
        %v1572 = vadd.f32 %v1024, %v1492
        %v1573 = vadd.f32 %v1025, %v1497
        %v1574 = vadd.f32 %v1026, %v1500
        %v1575 = vld [vmem:[%s234] sm:$0xf]
        %v1576 = vld [vmem:[%s234 + $0x4] sm:$0xf]
        %v1577 = vld [vmem:[%s234 + $0x8] sm:$0xf]
        %v1578 = vld [vmem:[%s234 + $0xc] sm:$0x1]
        %v1579 = vld [vmem:[%s234 + $0x10] sm:$0xf]
        %v1580 = vld [vmem:[%s234 + $0x14] sm:$0xf]
        %v1581 = vld [vmem:[%s234 + $0x18] sm:$0xf]
        %v1582 = vld [vmem:[%s234 + $0x1c] sm:$0x1]
        %v1583 = vld [vmem:[%s234 + $0x20] sm:$0xf]
        %v1584 = vld [vmem:[%s234 + $0x24] sm:$0xf]
        %v1585 = vld [vmem:[%s234 + $0x28] sm:$0xf]
        %v1586 = vld [vmem:[%s234 + $0x2c] sm:$0x1]
        %v1587 = vld [vmem:[%s234 + $0x30] sm:$0xf]
        %v1588 = vld [vmem:[%s234 + $0x34] sm:$0xf]
        %v1589 = vld [vmem:[%s234 + $0x38] sm:$0xf]
        %v1590 = vld [vmem:[%s234 + $0x3c] sm:$0x1]
        %v1591 = vld [vmem:[%s234 + $0x40] sm:$0xf]
        %v1592 = vld [vmem:[%s234 + $0x44] sm:$0xf]
        %v1593 = vld [vmem:[%s234 + $0x48] sm:$0xf]
        %v1594 = vld [vmem:[%s234 + $0x4c] sm:$0x1]
        %v1595 = vld [vmem:[%s234 + $0x50] sm:$0xf]
        %v1596 = vld [vmem:[%s234 + $0x54] sm:$0xf]
        %v1597 = vld [vmem:[%s234 + $0x58] sm:$0xf]
        %v1598 = vld [vmem:[%s234 + $0x5c] sm:$0x1]
        %v1599 = vld [vmem:[%s234 + $0x60] sm:$0xf]
        %v1600 = vld [vmem:[%s234 + $0x64] sm:$0xf]
        %v1601 = vld [vmem:[%s234 + $0x68] sm:$0xf]
        %v1602 = vld [vmem:[%s234 + $0x6c] sm:$0x1]
        %v1603 = vld [vmem:[%s234 + $0x70] sm:$0xf]
        %v1604 = vld [vmem:[%s234 + $0x74] sm:$0xf]
        %v1605 = vld [vmem:[%s234 + $0x78] sm:$0xf]
        %v1606 = vld [vmem:[%s234 + $0x7c] sm:$0x1]
        %v1607 = vld [vmem:[%s234 + $0x80] sm:$0xf]
        %v1608 = vld [vmem:[%s234 + $0x84] sm:$0xf]
        %v1609 = vld [vmem:[%s234 + $0x88] sm:$0xf]
        %v1610 = vld [vmem:[%s234 + $0x8c] sm:$0x1]
        %v1611 = vld [vmem:[%s234 + $0x90] sm:$0xf]
        %v1612 = vld [vmem:[%s234 + $0x94] sm:$0xf]
        %v1613 = vld [vmem:[%s234 + $0x98] sm:$0xf]
        %v1614 = vld [vmem:[%s234 + $0x9c] sm:$0x1]
        %v1615 = vld [vmem:[%s234 + $0xa0] sm:$0xf]
        %v1616 = vld [vmem:[%s234 + $0xa4] sm:$0xf]
        %v1617 = vld [vmem:[%s234 + $0xa8] sm:$0xf]
        %v1618 = vld [vmem:[%s234 + $0xac] sm:$0x1]
        %v1619 = vld [vmem:[%s234 + $0xb0] sm:$0xf]
        %v1620 = vld [vmem:[%s234 + $0xb4] sm:$0xf]
        %v1621 = vld [vmem:[%s234 + $0xb8] sm:$0xf]
        %v1622 = vld [vmem:[%s234 + $0xbc] sm:$0x1]
        %v1623 = vld [vmem:[%s234 + $0xc0] sm:$0xf]
        %v1624 = vld [vmem:[%s234 + $0xc4] sm:$0xf]
        %v1625 = vld [vmem:[%s234 + $0xc8] sm:$0xf]
        %v1626 = vld [vmem:[%s234 + $0xcc] sm:$0x1]
        %v1627 = vld [vmem:[%s234 + $0xd0] sm:$0xf]
        %v1628 = vld [vmem:[%s234 + $0xd4] sm:$0xf]
        %v1629 = vld [vmem:[%s234 + $0xd8] sm:$0xf]
        %v1630 = vld [vmem:[%s234 + $0xdc] sm:$0x1]
        %v1631 = vld [vmem:[%s234 + $0xe0] sm:$0xf]
        %v1632 = vld [vmem:[%s234 + $0xe4] sm:$0xf]
        %v1633 = vld [vmem:[%s234 + $0xe8] sm:$0xf]
        %v1634 = vld [vmem:[%s234 + $0xec] sm:$0x1]
        %v1635 = vld [vmem:[%s234 + $0xf0] sm:$0xf]
        %v1636 = vld [vmem:[%s234 + $0xf4] sm:$0xf]
        %v1637 = vld [vmem:[%s234 + $0xf8] sm:$0xf]
        %v1638 = vld [vmem:[%s234 + $0xfc] sm:$0x1]
        %v1639 = vld [vmem:[%s234 + $0x100] sm:$0xf]
        %v1640 = vld [vmem:[%s234 + $0x104] sm:$0xf]
        %v1641 = vld [vmem:[%s234 + $0x108] sm:$0xf]
        %v1642 = vld [vmem:[%s234 + $0x10c] sm:$0x1]
        %v1643 = vld [vmem:[%s234 + $0x110] sm:$0xf]
        %v1644 = vld [vmem:[%s234 + $0x114] sm:$0xf]
        %v1645 = vld [vmem:[%s234 + $0x118] sm:$0xf]
        %v1646 = vld [vmem:[%s234 + $0x11c] sm:$0x1]
        %v1647 = vld [vmem:[%s234 + $0x120] sm:$0xf]
        %v1648 = vld [vmem:[%s234 + $0x124] sm:$0xf]
        %v1649 = vld [vmem:[%s234 + $0x128] sm:$0xf]
        %v1650 = vld [vmem:[%s234 + $0x12c] sm:$0x1]
        %v1651 = vld [vmem:[%s234 + $0x130] sm:$0xf]
        %v1652 = vld [vmem:[%s234 + $0x134] sm:$0xf]
        %v1653 = vld [vmem:[%s234 + $0x138] sm:$0xf]
        %v1654 = vld [vmem:[%s234 + $0x13c] sm:$0x1]
        %v1655 = vld [vmem:[%s234 + $0x140] sm:$0xf]
        %v1656 = vld [vmem:[%s234 + $0x144] sm:$0xf]
        %v1657 = vld [vmem:[%s234 + $0x148] sm:$0xf]
        %v1658 = vld [vmem:[%s234 + $0x14c] sm:$0x1]
        %v1659 = vld [vmem:[%s234 + $0x150] sm:$0xf]
        %v1660 = vld [vmem:[%s234 + $0x154] sm:$0xf]
        %v1661 = vld [vmem:[%s234 + $0x158] sm:$0xf]
        %v1662 = vld [vmem:[%s234 + $0x15c] sm:$0x1]
        %v1663 = vld [vmem:[%s234 + $0x160] sm:$0xf]
        %v1664 = vld [vmem:[%s234 + $0x164] sm:$0xf]
        %v1665 = vld [vmem:[%s234 + $0x168] sm:$0xf]
        %v1666 = vld [vmem:[%s234 + $0x16c] sm:$0x1]
        %v1667 = vld [vmem:[%s234 + $0x170] sm:$0xf]
        %v1668 = vld [vmem:[%s234 + $0x174] sm:$0xf]
        %v1669 = vld [vmem:[%s234 + $0x178] sm:$0xf]
        %v1670 = vld [vmem:[%s234 + $0x17c] sm:$0x1]
        %v1671 = vld [vmem:[%s234 + $0x180] sm:$0xf]
        %v1672 = vld [vmem:[%s234 + $0x184] sm:$0xf]
        %v1673 = vld [vmem:[%s234 + $0x188] sm:$0xf]
        %v1674 = vld [vmem:[%s234 + $0x18c] sm:$0x1]
        %vm1675 = vsmask.f32 3328
        %vm1676 = vsmask.f32 7440
        %vm1677 = vmor %vm1675, %vm1676
        %v1679 = vshrl.u32 %v1575, 16
        %v1681 = vrot.slane %v1679, 4
        %v1682 = vshll.u32 %v1575, 16
        %v1684 = vrot.slane %v1682, 5
        %v1685 = vor.u32 %v1681, %v1684
        %v1686 = vrot.slane %v1685, 4
        %v1688 = vshll.u32 %v1576, 16
        %v1690 = vrot.slane %v1688, 5
        %v1691 = vsel %vm1677, %v1686, %v1690
        %v1692 = vshrl.u32 %v1576, 16
        %v1694 = vrot.slane %v1692, 4
        %v1695 = vor.u32 %v1694, %v1690
        %v1696 = vrot.slane %v1695, 4
        %v1698 = vshll.u32 %v1577, 16
        %v1700 = vrot.slane %v1698, 5
        %v1701 = vsel %vm1677, %v1696, %v1700
        %v1702 = vshrl.u32 %v1577, 16
        %v1704 = vrot.slane %v1702, 4
        %v1705 = vor.u32 %v1704, %v1700
        %v1706 = vrot.slane %v1705, 4
        %v1708 = vshll.u32 %v1578, 16
        %v1710 = vrot.slane %v1708, 5
        %v1711 = vsel %vm1677, %v1706, %v1710
        %v1713 = vshrl.u32 %v1579, 16
        %v1715 = vrot.slane %v1713, 4
        %v1716 = vshll.u32 %v1579, 16
        %v1718 = vrot.slane %v1716, 5
        %v1719 = vor.u32 %v1715, %v1718
        %v1720 = vrot.slane %v1719, 4
        %v1722 = vshll.u32 %v1580, 16
        %v1724 = vrot.slane %v1722, 5
        %v1725 = vsel %vm1677, %v1720, %v1724
        %v1726 = vshrl.u32 %v1580, 16
        %v1728 = vrot.slane %v1726, 4
        %v1729 = vor.u32 %v1728, %v1724
        %v1730 = vrot.slane %v1729, 4
        %v1732 = vshll.u32 %v1581, 16
        %v1734 = vrot.slane %v1732, 5
        %v1735 = vsel %vm1677, %v1730, %v1734
        %v1736 = vshrl.u32 %v1581, 16
        %v1738 = vrot.slane %v1736, 4
        %v1739 = vor.u32 %v1738, %v1734
        %v1740 = vrot.slane %v1739, 4
        %v1742 = vshll.u32 %v1582, 16
        %v1744 = vrot.slane %v1742, 5
        %v1745 = vsel %vm1677, %v1740, %v1744
        %v1747 = vshrl.u32 %v1583, 16
        %v1749 = vrot.slane %v1747, 4
        %v1750 = vshll.u32 %v1583, 16
        %v1752 = vrot.slane %v1750, 5
        %v1753 = vor.u32 %v1749, %v1752
        %v1754 = vrot.slane %v1753, 4
        %v1756 = vshll.u32 %v1584, 16
        %v1758 = vrot.slane %v1756, 5
        %v1759 = vsel %vm1677, %v1754, %v1758
        %v1760 = vshrl.u32 %v1584, 16
        %v1762 = vrot.slane %v1760, 4
        %v1763 = vor.u32 %v1762, %v1758
        %v1764 = vrot.slane %v1763, 4
        %v1766 = vshll.u32 %v1585, 16
        %v1768 = vrot.slane %v1766, 5
        %v1769 = vsel %vm1677, %v1764, %v1768
        %v1770 = vshrl.u32 %v1585, 16
        %v1772 = vrot.slane %v1770, 4
        %v1773 = vor.u32 %v1772, %v1768
        %v1774 = vrot.slane %v1773, 4
        %v1776 = vshll.u32 %v1586, 16
        %v1778 = vrot.slane %v1776, 5
        %v1779 = vsel %vm1677, %v1774, %v1778
        %v1781 = vshrl.u32 %v1587, 16
        %v1783 = vrot.slane %v1781, 4
        %v1784 = vshll.u32 %v1587, 16
        %v1786 = vrot.slane %v1784, 5
        %v1787 = vor.u32 %v1783, %v1786
        %v1788 = vrot.slane %v1787, 4
        %v1790 = vshll.u32 %v1588, 16
        %v1792 = vrot.slane %v1790, 5
        %v1793 = vsel %vm1677, %v1788, %v1792
        %v1794 = vshrl.u32 %v1588, 16
        %v1796 = vrot.slane %v1794, 4
        %v1797 = vor.u32 %v1796, %v1792
        %v1798 = vrot.slane %v1797, 4
        %v1800 = vshll.u32 %v1589, 16
        %v1802 = vrot.slane %v1800, 5
        %v1803 = vsel %vm1677, %v1798, %v1802
        %v1804 = vshrl.u32 %v1589, 16
        %v1806 = vrot.slane %v1804, 4
        %v1807 = vor.u32 %v1806, %v1802
        %v1808 = vrot.slane %v1807, 4
        %v1810 = vshll.u32 %v1590, 16
        %v1812 = vrot.slane %v1810, 5
        %v1813 = vsel %vm1677, %v1808, %v1812
        %v1815 = vshrl.u32 %v1591, 16
        %v1817 = vrot.slane %v1815, 4
        %v1818 = vshll.u32 %v1591, 16
        %v1820 = vrot.slane %v1818, 5
        %v1821 = vor.u32 %v1817, %v1820
        %v1822 = vrot.slane %v1821, 4
        %v1824 = vshll.u32 %v1592, 16
        %v1826 = vrot.slane %v1824, 5
        %v1827 = vsel %vm1677, %v1822, %v1826
        %v1828 = vshrl.u32 %v1592, 16
        %v1830 = vrot.slane %v1828, 4
        %v1831 = vor.u32 %v1830, %v1826
        %v1832 = vrot.slane %v1831, 4
        %v1834 = vshll.u32 %v1593, 16
        %v1836 = vrot.slane %v1834, 5
        %v1837 = vsel %vm1677, %v1832, %v1836
        %v1838 = vshrl.u32 %v1593, 16
        %v1840 = vrot.slane %v1838, 4
        %v1841 = vor.u32 %v1840, %v1836
        %v1842 = vrot.slane %v1841, 4
        %v1844 = vshll.u32 %v1594, 16
        %v1846 = vrot.slane %v1844, 5
        %v1847 = vsel %vm1677, %v1842, %v1846
        %v1849 = vshrl.u32 %v1595, 16
        %v1851 = vrot.slane %v1849, 4
        %v1852 = vshll.u32 %v1595, 16
        %v1854 = vrot.slane %v1852, 5
        %v1855 = vor.u32 %v1851, %v1854
        %v1856 = vrot.slane %v1855, 4
        %v1858 = vshll.u32 %v1596, 16
        %v1860 = vrot.slane %v1858, 5
        %v1861 = vsel %vm1677, %v1856, %v1860
        %v1862 = vshrl.u32 %v1596, 16
        %v1864 = vrot.slane %v1862, 4
        %v1865 = vor.u32 %v1864, %v1860
        %v1866 = vrot.slane %v1865, 4
        %v1868 = vshll.u32 %v1597, 16
        %v1870 = vrot.slane %v1868, 5
        %v1871 = vsel %vm1677, %v1866, %v1870
        %v1872 = vshrl.u32 %v1597, 16
        %v1874 = vrot.slane %v1872, 4
        %v1875 = vor.u32 %v1874, %v1870
        %v1876 = vrot.slane %v1875, 4
        %v1878 = vshll.u32 %v1598, 16
        %v1880 = vrot.slane %v1878, 5
        %v1881 = vsel %vm1677, %v1876, %v1880
        %v1883 = vshrl.u32 %v1599, 16
        %v1885 = vrot.slane %v1883, 4
        %v1886 = vshll.u32 %v1599, 16
        %v1888 = vrot.slane %v1886, 5
        %v1889 = vor.u32 %v1885, %v1888
        %v1890 = vrot.slane %v1889, 4
        %v1892 = vshll.u32 %v1600, 16
        %v1894 = vrot.slane %v1892, 5
        %v1895 = vsel %vm1677, %v1890, %v1894
        %v1896 = vshrl.u32 %v1600, 16
        %v1898 = vrot.slane %v1896, 4
        %v1899 = vor.u32 %v1898, %v1894
        %v1900 = vrot.slane %v1899, 4
        %v1902 = vshll.u32 %v1601, 16
        %v1904 = vrot.slane %v1902, 5
        %v1905 = vsel %vm1677, %v1900, %v1904
        %v1906 = vshrl.u32 %v1601, 16
        %v1908 = vrot.slane %v1906, 4
        %v1909 = vor.u32 %v1908, %v1904
        %v1910 = vrot.slane %v1909, 4
        %v1912 = vshll.u32 %v1602, 16
        %v1914 = vrot.slane %v1912, 5
        %v1915 = vsel %vm1677, %v1910, %v1914
        %v1917 = vshrl.u32 %v1603, 16
        %v1919 = vrot.slane %v1917, 4
        %v1920 = vshll.u32 %v1603, 16
        %v1922 = vrot.slane %v1920, 5
        %v1923 = vor.u32 %v1919, %v1922
        %v1924 = vrot.slane %v1923, 4
        %v1926 = vshll.u32 %v1604, 16
        %v1928 = vrot.slane %v1926, 5
        %v1929 = vsel %vm1677, %v1924, %v1928
        %v1930 = vshrl.u32 %v1604, 16
        %v1932 = vrot.slane %v1930, 4
        %v1933 = vor.u32 %v1932, %v1928
        %v1934 = vrot.slane %v1933, 4
        %v1936 = vshll.u32 %v1605, 16
        %v1938 = vrot.slane %v1936, 5
        %v1939 = vsel %vm1677, %v1934, %v1938
        %v1940 = vshrl.u32 %v1605, 16
        %v1942 = vrot.slane %v1940, 4
        %v1943 = vor.u32 %v1942, %v1938
        %v1944 = vrot.slane %v1943, 4
        %v1946 = vshll.u32 %v1606, 16
        %v1948 = vrot.slane %v1946, 5
        %v1949 = vsel %vm1677, %v1944, %v1948
        %v1951 = vshrl.u32 %v1607, 16
        %v1953 = vrot.slane %v1951, 4
        %v1954 = vshll.u32 %v1607, 16
        %v1956 = vrot.slane %v1954, 5
        %v1957 = vor.u32 %v1953, %v1956
        %v1958 = vrot.slane %v1957, 4
        %v1960 = vshll.u32 %v1608, 16
        %v1962 = vrot.slane %v1960, 5
        %v1963 = vsel %vm1677, %v1958, %v1962
        %v1964 = vshrl.u32 %v1608, 16
        %v1966 = vrot.slane %v1964, 4
        %v1967 = vor.u32 %v1966, %v1962
        %v1968 = vrot.slane %v1967, 4
        %v1970 = vshll.u32 %v1609, 16
        %v1972 = vrot.slane %v1970, 5
        %v1973 = vsel %vm1677, %v1968, %v1972
        %v1974 = vshrl.u32 %v1609, 16
        %v1976 = vrot.slane %v1974, 4
        %v1977 = vor.u32 %v1976, %v1972
        %v1978 = vrot.slane %v1977, 4
        %v1980 = vshll.u32 %v1610, 16
        %v1982 = vrot.slane %v1980, 5
        %v1983 = vsel %vm1677, %v1978, %v1982
        %v1985 = vshrl.u32 %v1611, 16
        %v1987 = vrot.slane %v1985, 4
        %v1988 = vshll.u32 %v1611, 16
        %v1990 = vrot.slane %v1988, 5
        %v1991 = vor.u32 %v1987, %v1990
        %v1992 = vrot.slane %v1991, 4
        %v1994 = vshll.u32 %v1612, 16
        %v1996 = vrot.slane %v1994, 5
        %v1997 = vsel %vm1677, %v1992, %v1996
        %v1998 = vshrl.u32 %v1612, 16
        %v2000 = vrot.slane %v1998, 4
        %v2001 = vor.u32 %v2000, %v1996
        %v2002 = vrot.slane %v2001, 4
        %v2004 = vshll.u32 %v1613, 16
        %v2006 = vrot.slane %v2004, 5
        %v2007 = vsel %vm1677, %v2002, %v2006
        %v2008 = vshrl.u32 %v1613, 16
        %v2010 = vrot.slane %v2008, 4
        %v2011 = vor.u32 %v2010, %v2006
        %v2012 = vrot.slane %v2011, 4
        %v2014 = vshll.u32 %v1614, 16
        %v2016 = vrot.slane %v2014, 5
        %v2017 = vsel %vm1677, %v2012, %v2016
        %v2019 = vshrl.u32 %v1615, 16
        %v2021 = vrot.slane %v2019, 4
        %v2022 = vshll.u32 %v1615, 16
        %v2024 = vrot.slane %v2022, 5
        %v2025 = vor.u32 %v2021, %v2024
        %v2026 = vrot.slane %v2025, 4
        %v2028 = vshll.u32 %v1616, 16
        %v2030 = vrot.slane %v2028, 5
        %v2031 = vsel %vm1677, %v2026, %v2030
        %v2032 = vshrl.u32 %v1616, 16
        %v2034 = vrot.slane %v2032, 4
        %v2035 = vor.u32 %v2034, %v2030
        %v2036 = vrot.slane %v2035, 4
        %v2038 = vshll.u32 %v1617, 16
        %v2040 = vrot.slane %v2038, 5
        %v2041 = vsel %vm1677, %v2036, %v2040
        %v2042 = vshrl.u32 %v1617, 16
        %v2044 = vrot.slane %v2042, 4
        %v2045 = vor.u32 %v2044, %v2040
        %v2046 = vrot.slane %v2045, 4
        %v2048 = vshll.u32 %v1618, 16
        %v2050 = vrot.slane %v2048, 5
        %v2051 = vsel %vm1677, %v2046, %v2050
        %v2053 = vshrl.u32 %v1619, 16
        %v2055 = vrot.slane %v2053, 4
        %v2056 = vshll.u32 %v1619, 16
        %v2058 = vrot.slane %v2056, 5
        %v2059 = vor.u32 %v2055, %v2058
        %v2060 = vrot.slane %v2059, 4
        %v2062 = vshll.u32 %v1620, 16
        %v2064 = vrot.slane %v2062, 5
        %v2065 = vsel %vm1677, %v2060, %v2064
        %v2066 = vshrl.u32 %v1620, 16
        %v2068 = vrot.slane %v2066, 4
        %v2069 = vor.u32 %v2068, %v2064
        %v2070 = vrot.slane %v2069, 4
        %v2072 = vshll.u32 %v1621, 16
        %v2074 = vrot.slane %v2072, 5
        %v2075 = vsel %vm1677, %v2070, %v2074
        %v2076 = vshrl.u32 %v1621, 16
        %v2078 = vrot.slane %v2076, 4
        %v2079 = vor.u32 %v2078, %v2074
        %v2080 = vrot.slane %v2079, 4
        %v2082 = vshll.u32 %v1622, 16
        %v2084 = vrot.slane %v2082, 5
        %v2085 = vsel %vm1677, %v2080, %v2084
        %v2087 = vshrl.u32 %v1623, 16
        %v2089 = vrot.slane %v2087, 4
        %v2090 = vshll.u32 %v1623, 16
        %v2092 = vrot.slane %v2090, 5
        %v2093 = vor.u32 %v2089, %v2092
        %v2094 = vrot.slane %v2093, 4
        %v2096 = vshll.u32 %v1624, 16
        %v2098 = vrot.slane %v2096, 5
        %v2099 = vsel %vm1677, %v2094, %v2098
        %v2100 = vshrl.u32 %v1624, 16
        %v2102 = vrot.slane %v2100, 4
        %v2103 = vor.u32 %v2102, %v2098
        %v2104 = vrot.slane %v2103, 4
        %v2106 = vshll.u32 %v1625, 16
        %v2108 = vrot.slane %v2106, 5
        %v2109 = vsel %vm1677, %v2104, %v2108
        %v2110 = vshrl.u32 %v1625, 16
        %v2112 = vrot.slane %v2110, 4
        %v2113 = vor.u32 %v2112, %v2108
        %v2114 = vrot.slane %v2113, 4
        %v2116 = vshll.u32 %v1626, 16
        %v2118 = vrot.slane %v2116, 5
        %v2119 = vsel %vm1677, %v2114, %v2118
        %v2121 = vshrl.u32 %v1627, 16
        %v2123 = vrot.slane %v2121, 4
        %v2124 = vshll.u32 %v1627, 16
        %v2126 = vrot.slane %v2124, 5
        %v2127 = vor.u32 %v2123, %v2126
        %v2128 = vrot.slane %v2127, 4
        %v2130 = vshll.u32 %v1628, 16
        %v2132 = vrot.slane %v2130, 5
        %v2133 = vsel %vm1677, %v2128, %v2132
        %v2134 = vshrl.u32 %v1628, 16
        %v2136 = vrot.slane %v2134, 4
        %v2137 = vor.u32 %v2136, %v2132
        %v2138 = vrot.slane %v2137, 4
        %v2140 = vshll.u32 %v1629, 16
        %v2142 = vrot.slane %v2140, 5
        %v2143 = vsel %vm1677, %v2138, %v2142
        %v2144 = vshrl.u32 %v1629, 16
        %v2146 = vrot.slane %v2144, 4
        %v2147 = vor.u32 %v2146, %v2142
        %v2148 = vrot.slane %v2147, 4
        %v2150 = vshll.u32 %v1630, 16
        %v2152 = vrot.slane %v2150, 5
        %v2153 = vsel %vm1677, %v2148, %v2152
        %v2155 = vshrl.u32 %v1631, 16
        %v2157 = vrot.slane %v2155, 4
        %v2158 = vshll.u32 %v1631, 16
        %v2160 = vrot.slane %v2158, 5
        %v2161 = vor.u32 %v2157, %v2160
        %v2162 = vrot.slane %v2161, 4
        %v2164 = vshll.u32 %v1632, 16
        %v2166 = vrot.slane %v2164, 5
        %v2167 = vsel %vm1677, %v2162, %v2166
        %v2168 = vshrl.u32 %v1632, 16
        %v2170 = vrot.slane %v2168, 4
        %v2171 = vor.u32 %v2170, %v2166
        %v2172 = vrot.slane %v2171, 4
        %v2174 = vshll.u32 %v1633, 16
        %v2176 = vrot.slane %v2174, 5
        %v2177 = vsel %vm1677, %v2172, %v2176
        %v2178 = vshrl.u32 %v1633, 16
        %v2180 = vrot.slane %v2178, 4
        %v2181 = vor.u32 %v2180, %v2176
        %v2182 = vrot.slane %v2181, 4
        %v2184 = vshll.u32 %v1634, 16
        %v2186 = vrot.slane %v2184, 5
        %v2187 = vsel %vm1677, %v2182, %v2186
        %v2189 = vshrl.u32 %v1635, 16
        %v2191 = vrot.slane %v2189, 4
        %v2192 = vshll.u32 %v1635, 16
        %v2194 = vrot.slane %v2192, 5
        %v2195 = vor.u32 %v2191, %v2194
        %v2196 = vrot.slane %v2195, 4
        %v2198 = vshll.u32 %v1636, 16
        %v2200 = vrot.slane %v2198, 5
        %v2201 = vsel %vm1677, %v2196, %v2200
        %v2202 = vshrl.u32 %v1636, 16
        %v2204 = vrot.slane %v2202, 4
        %v2205 = vor.u32 %v2204, %v2200
        %v2206 = vrot.slane %v2205, 4
        %v2208 = vshll.u32 %v1637, 16
        %v2210 = vrot.slane %v2208, 5
        %v2211 = vsel %vm1677, %v2206, %v2210
        %v2212 = vshrl.u32 %v1637, 16
        %v2214 = vrot.slane %v2212, 4
        %v2215 = vor.u32 %v2214, %v2210
        %v2216 = vrot.slane %v2215, 4
        %v2218 = vshll.u32 %v1638, 16
        %v2220 = vrot.slane %v2218, 5
        %v2221 = vsel %vm1677, %v2216, %v2220
        %v2223 = vshrl.u32 %v1639, 16
        %v2225 = vrot.slane %v2223, 4
        %v2226 = vshll.u32 %v1639, 16
        %v2228 = vrot.slane %v2226, 5
        %v2229 = vor.u32 %v2225, %v2228
        %v2230 = vrot.slane %v2229, 4
        %v2232 = vshll.u32 %v1640, 16
        %v2234 = vrot.slane %v2232, 5
        %v2235 = vsel %vm1677, %v2230, %v2234
        %v2236 = vshrl.u32 %v1640, 16
        %v2238 = vrot.slane %v2236, 4
        %v2239 = vor.u32 %v2238, %v2234
        %v2240 = vrot.slane %v2239, 4
        %v2242 = vshll.u32 %v1641, 16
        %v2244 = vrot.slane %v2242, 5
        %v2245 = vsel %vm1677, %v2240, %v2244
        %v2246 = vshrl.u32 %v1641, 16
        %v2248 = vrot.slane %v2246, 4
        %v2249 = vor.u32 %v2248, %v2244
        %v2250 = vrot.slane %v2249, 4
        %v2252 = vshll.u32 %v1642, 16
        %v2254 = vrot.slane %v2252, 5
        %v2255 = vsel %vm1677, %v2250, %v2254
        %v2257 = vshrl.u32 %v1643, 16
        %v2259 = vrot.slane %v2257, 4
        %v2260 = vshll.u32 %v1643, 16
        %v2262 = vrot.slane %v2260, 5
        %v2263 = vor.u32 %v2259, %v2262
        %v2264 = vrot.slane %v2263, 4
        %v2266 = vshll.u32 %v1644, 16
        %v2268 = vrot.slane %v2266, 5
        %v2269 = vsel %vm1677, %v2264, %v2268
        %v2270 = vshrl.u32 %v1644, 16
        %v2272 = vrot.slane %v2270, 4
        %v2273 = vor.u32 %v2272, %v2268
        %v2274 = vrot.slane %v2273, 4
        %v2276 = vshll.u32 %v1645, 16
        %v2278 = vrot.slane %v2276, 5
        %v2279 = vsel %vm1677, %v2274, %v2278
        %v2280 = vshrl.u32 %v1645, 16
        %v2282 = vrot.slane %v2280, 4
        %v2283 = vor.u32 %v2282, %v2278
        %v2284 = vrot.slane %v2283, 4
        %v2286 = vshll.u32 %v1646, 16
        %v2288 = vrot.slane %v2286, 5
        %v2289 = vsel %vm1677, %v2284, %v2288
        %v2291 = vshrl.u32 %v1647, 16
        %v2293 = vrot.slane %v2291, 4
        %v2294 = vshll.u32 %v1647, 16
        %v2296 = vrot.slane %v2294, 5
        %v2297 = vor.u32 %v2293, %v2296
        %v2298 = vrot.slane %v2297, 4
        %v2300 = vshll.u32 %v1648, 16
        %v2302 = vrot.slane %v2300, 5
        %v2303 = vsel %vm1677, %v2298, %v2302
        %v2304 = vshrl.u32 %v1648, 16
        %v2306 = vrot.slane %v2304, 4
        %v2307 = vor.u32 %v2306, %v2302
        %v2308 = vrot.slane %v2307, 4
        %v2310 = vshll.u32 %v1649, 16
        %v2312 = vrot.slane %v2310, 5
        %v2313 = vsel %vm1677, %v2308, %v2312
        %v2314 = vshrl.u32 %v1649, 16
        %v2316 = vrot.slane %v2314, 4
        %v2317 = vor.u32 %v2316, %v2312
        %v2318 = vrot.slane %v2317, 4
        %v2320 = vshll.u32 %v1650, 16
        %v2322 = vrot.slane %v2320, 5
        %v2323 = vsel %vm1677, %v2318, %v2322
        %v2325 = vshrl.u32 %v1651, 16
        %v2327 = vrot.slane %v2325, 4
        %v2328 = vshll.u32 %v1651, 16
        %v2330 = vrot.slane %v2328, 5
        %v2331 = vor.u32 %v2327, %v2330
        %v2332 = vrot.slane %v2331, 4
        %v2334 = vshll.u32 %v1652, 16
        %v2336 = vrot.slane %v2334, 5
        %v2337 = vsel %vm1677, %v2332, %v2336
        %v2338 = vshrl.u32 %v1652, 16
        %v2340 = vrot.slane %v2338, 4
        %v2341 = vor.u32 %v2340, %v2336
        %v2342 = vrot.slane %v2341, 4
        %v2344 = vshll.u32 %v1653, 16
        %v2346 = vrot.slane %v2344, 5
        %v2347 = vsel %vm1677, %v2342, %v2346
        %v2348 = vshrl.u32 %v1653, 16
        %v2350 = vrot.slane %v2348, 4
        %v2351 = vor.u32 %v2350, %v2346
        %v2352 = vrot.slane %v2351, 4
        %v2354 = vshll.u32 %v1654, 16
        %v2356 = vrot.slane %v2354, 5
        %v2357 = vsel %vm1677, %v2352, %v2356
        %v2359 = vshrl.u32 %v1655, 16
        %v2361 = vrot.slane %v2359, 4
        %v2362 = vshll.u32 %v1655, 16
        %v2364 = vrot.slane %v2362, 5
        %v2365 = vor.u32 %v2361, %v2364
        %v2366 = vrot.slane %v2365, 4
        %v2368 = vshll.u32 %v1656, 16
        %v2370 = vrot.slane %v2368, 5
        %v2371 = vsel %vm1677, %v2366, %v2370
        %v2372 = vshrl.u32 %v1656, 16
        %v2374 = vrot.slane %v2372, 4
        %v2375 = vor.u32 %v2374, %v2370
        %v2376 = vrot.slane %v2375, 4
        %v2378 = vshll.u32 %v1657, 16
        %v2380 = vrot.slane %v2378, 5
        %v2381 = vsel %vm1677, %v2376, %v2380
        %v2382 = vshrl.u32 %v1657, 16
        %v2384 = vrot.slane %v2382, 4
        %v2385 = vor.u32 %v2384, %v2380
        %v2386 = vrot.slane %v2385, 4
        %v2388 = vshll.u32 %v1658, 16
        %v2390 = vrot.slane %v2388, 5
        %v2391 = vsel %vm1677, %v2386, %v2390
        %v2393 = vshrl.u32 %v1659, 16
        %v2395 = vrot.slane %v2393, 4
        %v2396 = vshll.u32 %v1659, 16
        %v2398 = vrot.slane %v2396, 5
        %v2399 = vor.u32 %v2395, %v2398
        %v2400 = vrot.slane %v2399, 4
        %v2402 = vshll.u32 %v1660, 16
        %v2404 = vrot.slane %v2402, 5
        %v2405 = vsel %vm1677, %v2400, %v2404
        %v2406 = vshrl.u32 %v1660, 16
        %v2408 = vrot.slane %v2406, 4
        %v2409 = vor.u32 %v2408, %v2404
        %v2410 = vrot.slane %v2409, 4
        %v2412 = vshll.u32 %v1661, 16
        %v2414 = vrot.slane %v2412, 5
        %v2415 = vsel %vm1677, %v2410, %v2414
        %v2416 = vshrl.u32 %v1661, 16
        %v2418 = vrot.slane %v2416, 4
        %v2419 = vor.u32 %v2418, %v2414
        %v2420 = vrot.slane %v2419, 4
        %v2422 = vshll.u32 %v1662, 16
        %v2424 = vrot.slane %v2422, 5
        %v2425 = vsel %vm1677, %v2420, %v2424
        %v2427 = vshrl.u32 %v1663, 16
        %v2429 = vrot.slane %v2427, 4
        %v2430 = vshll.u32 %v1663, 16
        %v2432 = vrot.slane %v2430, 5
        %v2433 = vor.u32 %v2429, %v2432
        %v2434 = vrot.slane %v2433, 4
        %v2436 = vshll.u32 %v1664, 16
        %v2438 = vrot.slane %v2436, 5
        %v2439 = vsel %vm1677, %v2434, %v2438
        %v2440 = vshrl.u32 %v1664, 16
        %v2442 = vrot.slane %v2440, 4
        %v2443 = vor.u32 %v2442, %v2438
        %v2444 = vrot.slane %v2443, 4
        %v2446 = vshll.u32 %v1665, 16
        %v2448 = vrot.slane %v2446, 5
        %v2449 = vsel %vm1677, %v2444, %v2448
        %v2450 = vshrl.u32 %v1665, 16
        %v2452 = vrot.slane %v2450, 4
        %v2453 = vor.u32 %v2452, %v2448
        %v2454 = vrot.slane %v2453, 4
        %v2456 = vshll.u32 %v1666, 16
        %v2458 = vrot.slane %v2456, 5
        %v2459 = vsel %vm1677, %v2454, %v2458
        %v2461 = vshrl.u32 %v1667, 16
        %v2463 = vrot.slane %v2461, 4
        %v2464 = vshll.u32 %v1667, 16
        %v2466 = vrot.slane %v2464, 5
        %v2467 = vor.u32 %v2463, %v2466
        %v2468 = vrot.slane %v2467, 4
        %v2470 = vshll.u32 %v1668, 16
        %v2472 = vrot.slane %v2470, 5
        %v2473 = vsel %vm1677, %v2468, %v2472
        %v2474 = vshrl.u32 %v1668, 16
        %v2476 = vrot.slane %v2474, 4
        %v2477 = vor.u32 %v2476, %v2472
        %v2478 = vrot.slane %v2477, 4
        %v2480 = vshll.u32 %v1669, 16
        %v2482 = vrot.slane %v2480, 5
        %v2483 = vsel %vm1677, %v2478, %v2482
        %v2484 = vshrl.u32 %v1669, 16
        %v2486 = vrot.slane %v2484, 4
        %v2487 = vor.u32 %v2486, %v2482
        %v2488 = vrot.slane %v2487, 4
        %v2490 = vshll.u32 %v1670, 16
        %v2492 = vrot.slane %v2490, 5
        %v2493 = vsel %vm1677, %v2488, %v2492
        %v2495 = vshrl.u32 %v1671, 16
        %v2497 = vrot.slane %v2495, 4
        %v2498 = vshll.u32 %v1671, 16
        %v2500 = vrot.slane %v2498, 5
        %v2501 = vor.u32 %v2497, %v2500
        %v2502 = vrot.slane %v2501, 4
        %v2504 = vshll.u32 %v1672, 16
        %v2506 = vrot.slane %v2504, 5
        %v2507 = vsel %vm1677, %v2502, %v2506
        %v2508 = vshrl.u32 %v1672, 16
        %v2510 = vrot.slane %v2508, 4
        %v2511 = vor.u32 %v2510, %v2506
        %v2512 = vrot.slane %v2511, 4
        %v2514 = vshll.u32 %v1673, 16
        %v2516 = vrot.slane %v2514, 5
        %v2517 = vsel %vm1677, %v2512, %v2516
        %v2518 = vshrl.u32 %v1673, 16
        %v2520 = vrot.slane %v2518, 4
        %v2521 = vor.u32 %v2520, %v2516
        %v2522 = vrot.slane %v2521, 4
        %v2524 = vshll.u32 %v1674, 16
        %v2526 = vrot.slane %v2524, 5
        %v2527 = vsel %vm1677, %v2522, %v2526
        %s2528 = scalar_lea.vmem %s243, 2
        %v2529 = vld [vmem:[%s2528] sm:$0x3]
        %v2530 = vunpack.c.l.b16 %v1691
        %v2531 = vunpack.c.l.b16 %v1701
        %v2532 = vunpack.c.l.b16 %v1711
        %v2533 = vunpack.c.l.b16 %v1725
        %v2534 = vunpack.c.l.b16 %v1735
        %v2535 = vunpack.c.l.b16 %v1745
        %v2536 = vunpack.c.l.b16 %v1759
        %v2537 = vunpack.c.l.b16 %v1769
        %v2538 = vunpack.c.l.b16 %v1779
        %v2539 = vunpack.c.l.b16 %v1793
        %v2540 = vunpack.c.l.b16 %v1803
        %v2541 = vunpack.c.l.b16 %v1813
        %v2542 = vunpack.c.l.b16 %v1827
        %v2543 = vunpack.c.l.b16 %v1837
        %v2544 = vunpack.c.l.b16 %v1847
        %v2545 = vunpack.c.l.b16 %v1861
        %v2546 = vunpack.c.l.b16 %v1871
        %v2547 = vunpack.c.l.b16 %v1881
        %v2548 = vunpack.c.l.b16 %v1895
        %v2549 = vunpack.c.l.b16 %v1905
        %v2550 = vunpack.c.l.b16 %v1915
        %v2551 = vunpack.c.l.b16 %v1929
        %v2552 = vunpack.c.l.b16 %v1939
        %v2553 = vunpack.c.l.b16 %v1949
        %v2554 = vunpack.c.l.b16 %v1963
        %v2555 = vunpack.c.l.b16 %v1973
        %v2556 = vunpack.c.l.b16 %v1983
        %v2557 = vunpack.c.l.b16 %v1997
        %v2558 = vunpack.c.l.b16 %v2007
        %v2559 = vunpack.c.l.b16 %v2017
        %v2560 = vunpack.c.l.b16 %v2031
        %v2561 = vunpack.c.l.b16 %v2041
        %v2562 = vunpack.c.l.b16 %v2051
        %v2563 = vunpack.c.l.b16 %v2065
        %v2564 = vunpack.c.l.b16 %v2075
        %v2565 = vunpack.c.l.b16 %v2085
        %v2566 = vunpack.c.l.b16 %v2099
        %v2567 = vunpack.c.l.b16 %v2109
        %v2568 = vunpack.c.l.b16 %v2119
        %v2569 = vunpack.c.l.b16 %v2133
        %v2570 = vunpack.c.l.b16 %v2143
        %v2571 = vunpack.c.l.b16 %v2153
        %v2572 = vunpack.c.l.b16 %v2167
        %v2573 = vunpack.c.l.b16 %v2177
        %v2574 = vunpack.c.l.b16 %v2187
        %v2575 = vunpack.c.l.b16 %v2201
        %v2576 = vunpack.c.l.b16 %v2211
        %v2577 = vunpack.c.l.b16 %v2221
        %v2578 = vunpack.c.l.b16 %v2235
        %v2579 = vunpack.c.l.b16 %v2245
        %v2580 = vunpack.c.l.b16 %v2255
        %v2581 = vunpack.c.l.b16 %v2269
        %v2582 = vunpack.c.l.b16 %v2279
        %v2583 = vunpack.c.l.b16 %v2289
        %v2584 = vunpack.c.l.b16 %v2303
        %v2585 = vunpack.c.l.b16 %v2313
        %v2586 = vunpack.c.l.b16 %v2323
        %v2587 = vunpack.c.l.b16 %v2337
        %v2588 = vunpack.c.l.b16 %v2347
        %v2589 = vunpack.c.l.b16 %v2357
        %v2590 = vunpack.c.l.b16 %v2371
        %v2591 = vunpack.c.l.b16 %v2381
        %v2592 = vunpack.c.l.b16 %v2391
        %v2593 = vunpack.c.l.b16 %v2405
        %v2594 = vunpack.c.l.b16 %v2415
        %v2595 = vunpack.c.l.b16 %v2425
        %v2596 = vunpack.c.l.b16 %v2439
        %v2597 = vunpack.c.l.b16 %v2449
        %v2598 = vunpack.c.l.b16 %v2459
        %v2599 = vunpack.c.l.b16 %v2473
        %v2600 = vunpack.c.l.b16 %v2483
        %v2601 = vunpack.c.l.b16 %v2493
        %v2602 = vpack.c.b16 %v2531, %v2530
        %v2603 = vpack.c.b16 %v2533, %v2532
        %v2604 = vpack.c.b16 %v2535, %v2534
        %v2605 = vpack.c.b16 %v2537, %v2536
        %v2606 = vpack.c.b16 %v2539, %v2538
        %v2607 = vpack.c.b16 %v2541, %v2540
        %v2608 = vpack.c.b16 %v2543, %v2542
        %v2609 = vpack.c.b16 %v2545, %v2544
        %v2610 = vpack.c.b16 %v2547, %v2546
        %v2611 = vpack.c.b16 %v2549, %v2548
        %v2612 = vpack.c.b16 %v2551, %v2550
        %v2613 = vpack.c.b16 %v2553, %v2552
        %v2614 = vpack.c.b16 %v2555, %v2554
        %v2615 = vpack.c.b16 %v2557, %v2556
        %v2616 = vpack.c.b16 %v2559, %v2558
        %v2617 = vpack.c.b16 %v2561, %v2560
        %v2618 = vpack.c.b16 %v2563, %v2562
        %v2619 = vpack.c.b16 %v2565, %v2564
        %v2620 = vpack.c.b16 %v2567, %v2566
        %v2621 = vpack.c.b16 %v2569, %v2568
        %v2622 = vpack.c.b16 %v2571, %v2570
        %v2623 = vpack.c.b16 %v2573, %v2572
        %v2624 = vpack.c.b16 %v2575, %v2574
        %v2625 = vpack.c.b16 %v2577, %v2576
        %v2626 = vpack.c.b16 %v2579, %v2578
        %v2627 = vpack.c.b16 %v2581, %v2580
        %v2628 = vpack.c.b16 %v2583, %v2582
        %v2629 = vpack.c.b16 %v2585, %v2584
        %v2630 = vpack.c.b16 %v2587, %v2586
        %v2631 = vpack.c.b16 %v2589, %v2588
        %v2632 = vpack.c.b16 %v2591, %v2590
        %v2633 = vpack.c.b16 %v2593, %v2592
        %v2634 = vpack.c.b16 %v2595, %v2594
        %v2635 = vpack.c.b16 %v2597, %v2596
        %v2636 = vpack.c.b16 %v2599, %v2598
        %v2637 = vpack.c.b16 %v2601, %v2600
        %v2639 = vsel %vm521, %v2602, 0
        %v2642 = vsel %vm521, %v2603, 0
        %v2645 = vsel %vm521, %v2604, 0
        %v2648 = vsel %vm521, %v2605, 0
        %v2651 = vsel %vm521, %v2606, 0
        %v2654 = vsel %vm521, %v2607, 0
        %v2657 = vsel %vm521, %v2608, 0
        %v2660 = vsel %vm521, %v2609, 0
        %v2663 = vsel %vm521, %v2610, 0
        %v2666 = vsel %vm521, %v2611, 0
        %v2669 = vsel %vm521, %v2612, 0
        %v2672 = vsel %vm521, %v2613, 0
        %v2675 = vsel %vm521, %v2614, 0
        %v2678 = vsel %vm521, %v2615, 0
        %v2681 = vsel %vm521, %v2616, 0
        %v2684 = vsel %vm521, %v2617, 0
        %v2687 = vsel %vm521, %v2618, 0
        %v2690 = vsel %vm521, %v2619, 0
        %v2693 = vsel %vm521, %v2620, 0
        %v2696 = vsel %vm521, %v2621, 0
        %v2699 = vsel %vm521, %v2622, 0
        %v2702 = vsel %vm521, %v2623, 0
        %v2705 = vsel %vm521, %v2624, 0
        %v2708 = vsel %vm521, %v2625, 0
        %v2711 = vsel %vm521, %v2626, 0
        %v2714 = vsel %vm521, %v2627, 0
        %v2717 = vsel %vm521, %v2628, 0
        %v2720 = vsel %vm521, %v2629, 0
        %v2723 = vsel %vm521, %v2630, 0
        %v2726 = vsel %vm521, %v2631, 0
        %v2729 = vsel %vm521, %v2632, 0
        %v2732 = vsel %vm521, %v2633, 0
        %v2735 = vsel %vm521, %v2634, 0
        %v2738 = vsel %vm521, %v2635, 0
        %v2741 = vsel %vm521, %v2636, 0
        %v2744 = vsel %vm521, %v2637, 0
        %v2747 = vsel %vm630, %v2529, 0
        %2749 = vmatprep.subr.bf16.mxu0 0
        %2750 = vmatpush1.bf16.msra.mxu0 %v2747
        %2751 = vmatprep.subr.bf16.mxu0 0
        %2752 = vmatpush1.bf16.msra.mxu0 0
        %2753 = vmatprep.subr.bf16.mxu0 0
        %2754 = vmatpush1.bf16.msra.mxu0 0
        %2755 = vmatprep.subr.bf16.mxu0 0
        %2756 = vmatpush1.bf16.msra.mxu0 0
        %2757 = vmatprep.subr.bf16.mxu0 0
        %2758 = vmatpush1.bf16.msra.mxu0 0
        %2759 = vmatprep.subr.bf16.mxu0 0
        %2760 = vmatpush1.bf16.msra.mxu0 0
        %2761 = vmatprep.subr.bf16.mxu0 0
        %2762 = vmatpush1.bf16.msra.mxu0 0
        %2763 = vmatprep.subr.bf16.mxu0 0
        %2764 = vmatpush1.bf16.msra.mxu0 0
        %2765 = vmatprep.subr.bf16.mxu0 0
        %2766 = vmatpush1.bf16.msra.mxu0 0
        %2767 = vmatprep.subr.bf16.mxu0 0
        %2768 = vmatpush1.bf16.msra.mxu0 0
        %2769 = vmatprep.subr.bf16.mxu0 0
        %2770 = vmatpush1.bf16.msra.mxu0 0
        %2771 = vmatprep.subr.bf16.mxu0 0
        %2772 = vmatpush1.bf16.msra.mxu0 0
        %2773 = vmatprep.subr.bf16.mxu0 0
        %2774 = vmatpush1.bf16.msra.mxu0 0
        %2775 = vmatprep.subr.bf16.mxu0 0
        %2776 = vmatpush1.bf16.msra.mxu0 0
        %2777 = vmatprep.subr.bf16.mxu0 0
        %2778 = vmatpush1.bf16.msra.mxu0 0
        %2779 = vmatprep.subr.bf16.mxu0 0
        %2780 = vmatpush1.bf16.msra.mxu0 0
        %2781 = vmatprep.mubr.bf16.mxu0 0
        %2782 = vmatmul.mubr.bf16.gmra.mrb[0].mxu0 %v2639
        %v2783 = vpop.f32.mrb[0].mxu0
        %v2784 = vadd.f32 0.0, %v2783
        %v2785 = vpop.f32.mrb[0].mxu0
        %v2786 = vpop.f32.mrb[0].mxu0
        %v2787 = vadd.f32 0.0, %v2786
        %v2788 = vpop.f32.mrb[0].mxu0
        %2789 = vmatprep.mubr.bf16.mxu0 0
        %2790 = vmatmul.mubr.bf16.gmra.mrb[0].mxu0 %v2642
        %v2791 = vpop.f32.mrb[0].mxu0
        %v2792 = vadd.f32 0.0, %v2791
        %v2793 = vpop.f32.mrb[0].mxu0
        %v2794 = vpop.f32.mrb[0].mxu0
        %v2795 = vadd.f32 0.0, %v2794
        %v2796 = vpop.f32.mrb[0].mxu0
        %2797 = vmatprep.mubr.bf16.mxu0 0
        %2798 = vmatmul.mubr.bf16.gmra.mrb[0].mxu0 %v2645
        %v2799 = vpop.f32.mrb[0].mxu0
        %v2800 = vadd.f32 0.0, %v2799
        %v2801 = vpop.f32.mrb[0].mxu0
        %v2802 = vpop.f32.mrb[0].mxu0
        %v2803 = vadd.f32 0.0, %v2802
        %v2804 = vpop.f32.mrb[0].mxu0
        %2805 = vmatprep.mubr.bf16.mxu0 0
        %2806 = vmatmul.mubr.bf16.gmra.mrb[0].mxu0 %v2648
        %v2807 = vpop.f32.mrb[0].mxu0
        %v2808 = vadd.f32 0.0, %v2807
        %v2809 = vpop.f32.mrb[0].mxu0
        %v2810 = vpop.f32.mrb[0].mxu0
        %v2811 = vadd.f32 0.0, %v2810
        %v2812 = vpop.f32.mrb[0].mxu0
        %2813 = vmatprep.mubr.bf16.mxu0 0
        %2814 = vmatmul.mubr.bf16.gmra.mrb[0].mxu0 %v2651
        %v2815 = vpop.f32.mrb[0].mxu0
        %v2816 = vadd.f32 0.0, %v2815
        %v2817 = vpop.f32.mrb[0].mxu0
        %v2818 = vpop.f32.mrb[0].mxu0
        %v2819 = vadd.f32 0.0, %v2818
        %v2820 = vpop.f32.mrb[0].mxu0
        %2821 = vmatprep.mubr.bf16.mxu0 0
        %2822 = vmatmul.mubr.bf16.gmra.mrb[0].mxu0 %v2654
        %v2823 = vpop.f32.mrb[0].mxu0
        %v2824 = vadd.f32 0.0, %v2823
        %v2825 = vpop.f32.mrb[0].mxu0
        %v2826 = vpop.f32.mrb[0].mxu0
        %v2827 = vadd.f32 0.0, %v2826
        %v2828 = vpop.f32.mrb[0].mxu0
        %2829 = vmatprep.mubr.bf16.mxu0 0
        %2830 = vmatmul.mubr.bf16.gmra.mrb[0].mxu0 %v2657
        %v2831 = vpop.f32.mrb[0].mxu0
        %v2832 = vadd.f32 0.0, %v2831
        %v2833 = vpop.f32.mrb[0].mxu0
        %v2834 = vpop.f32.mrb[0].mxu0
        %v2835 = vadd.f32 0.0, %v2834
        %v2836 = vpop.f32.mrb[0].mxu0
        %2837 = vmatprep.mubr.bf16.mxu0 0
        %2838 = vmatmul.mubr.bf16.gmra.mrb[0].mxu0 %v2660
        %v2839 = vpop.f32.mrb[0].mxu0
        %v2840 = vadd.f32 0.0, %v2839
        %v2841 = vpop.f32.mrb[0].mxu0
        %v2842 = vpop.f32.mrb[0].mxu0
        %v2843 = vadd.f32 0.0, %v2842
        %v2844 = vpop.f32.mrb[0].mxu0
        %2845 = vmatprep.mubr.bf16.mxu0 0
        %2846 = vmatmul.mubr.bf16.gmra.mrb[0].mxu0 %v2663
        %v2847 = vpop.f32.mrb[0].mxu0
        %v2848 = vadd.f32 0.0, %v2847
        %v2849 = vpop.f32.mrb[0].mxu0
        %v2850 = vpop.f32.mrb[0].mxu0
        %v2851 = vadd.f32 0.0, %v2850
        %v2852 = vpop.f32.mrb[0].mxu0
        %2853 = vmatprep.mubr.bf16.mxu0 0
        %2854 = vmatmul.mubr.bf16.gmra.mrb[0].mxu0 %v2666
        %v2855 = vpop.f32.mrb[0].mxu0
        %v2856 = vadd.f32 0.0, %v2855
        %v2857 = vpop.f32.mrb[0].mxu0
        %v2858 = vpop.f32.mrb[0].mxu0
        %v2859 = vadd.f32 0.0, %v2858
        %v2860 = vpop.f32.mrb[0].mxu0
        %2861 = vmatprep.mubr.bf16.mxu0 0
        %2862 = vmatmul.mubr.bf16.gmra.mrb[0].mxu0 %v2669
        %v2863 = vpop.f32.mrb[0].mxu0
        %v2864 = vadd.f32 0.0, %v2863
        %v2865 = vpop.f32.mrb[0].mxu0
        %v2866 = vpop.f32.mrb[0].mxu0
        %v2867 = vadd.f32 0.0, %v2866
        %v2868 = vpop.f32.mrb[0].mxu0
        %2869 = vmatprep.mubr.bf16.mxu0 0
        %2870 = vmatmul.mubr.bf16.gmra.mrb[0].mxu0 %v2672
        %v2871 = vpop.f32.mrb[0].mxu0
        %v2872 = vadd.f32 0.0, %v2871
        %v2873 = vpop.f32.mrb[0].mxu0
        %v2874 = vpop.f32.mrb[0].mxu0
        %v2875 = vadd.f32 0.0, %v2874
        %v2876 = vpop.f32.mrb[0].mxu0
        %2877 = vmatprep.mubr.bf16.mxu0 0
        %2878 = vmatmul.mubr.bf16.gmra.mrb[0].mxu0 %v2675
        %v2879 = vpop.f32.mrb[0].mxu0
        %v2880 = vadd.f32 0.0, %v2879
        %v2881 = vpop.f32.mrb[0].mxu0
        %v2882 = vpop.f32.mrb[0].mxu0
        %v2883 = vadd.f32 0.0, %v2882
        %v2884 = vpop.f32.mrb[0].mxu0
        %2885 = vmatprep.mubr.bf16.mxu0 0
        %2886 = vmatmul.mubr.bf16.gmra.mrb[0].mxu0 %v2678
        %v2887 = vpop.f32.mrb[0].mxu0
        %v2888 = vadd.f32 0.0, %v2887
        %v2889 = vpop.f32.mrb[0].mxu0
        %v2890 = vpop.f32.mrb[0].mxu0
        %v2891 = vadd.f32 0.0, %v2890
        %v2892 = vpop.f32.mrb[0].mxu0
        %2893 = vmatprep.mubr.bf16.mxu0 0
        %2894 = vmatmul.mubr.bf16.gmra.mrb[0].mxu0 %v2681
        %v2895 = vpop.f32.mrb[0].mxu0
        %v2896 = vadd.f32 0.0, %v2895
        %v2897 = vpop.f32.mrb[0].mxu0
        %v2898 = vpop.f32.mrb[0].mxu0
        %v2899 = vadd.f32 0.0, %v2898
        %v2900 = vpop.f32.mrb[0].mxu0
        %2901 = vmatprep.mubr.bf16.mxu0 0
        %2902 = vmatmul.mubr.bf16.gmra.mrb[0].mxu0 %v2684
        %v2903 = vpop.f32.mrb[0].mxu0
        %v2904 = vadd.f32 0.0, %v2903
        %v2905 = vpop.f32.mrb[0].mxu0
        %v2906 = vpop.f32.mrb[0].mxu0
        %v2907 = vadd.f32 0.0, %v2906
        %v2908 = vpop.f32.mrb[0].mxu0
        %2909 = vmatprep.mubr.bf16.mxu0 0
        %2910 = vmatmul.mubr.bf16.gmra.mrb[0].mxu0 %v2687
        %v2911 = vpop.f32.mrb[0].mxu0
        %v2912 = vadd.f32 0.0, %v2911
        %v2913 = vpop.f32.mrb[0].mxu0
        %v2914 = vpop.f32.mrb[0].mxu0
        %v2915 = vadd.f32 0.0, %v2914
        %v2916 = vpop.f32.mrb[0].mxu0
        %2917 = vmatprep.mubr.bf16.mxu0 0
        %2918 = vmatmul.mubr.bf16.gmra.mrb[0].mxu0 %v2690
        %v2919 = vpop.f32.mrb[0].mxu0
        %v2920 = vadd.f32 0.0, %v2919
        %v2921 = vpop.f32.mrb[0].mxu0
        %v2922 = vpop.f32.mrb[0].mxu0
        %v2923 = vadd.f32 0.0, %v2922
        %v2924 = vpop.f32.mrb[0].mxu0
        %2925 = vmatprep.mubr.bf16.mxu0 0
        %2926 = vmatmul.mubr.bf16.gmra.mrb[0].mxu0 %v2693
        %v2927 = vpop.f32.mrb[0].mxu0
        %v2928 = vadd.f32 0.0, %v2927
        %v2929 = vpop.f32.mrb[0].mxu0
        %v2930 = vpop.f32.mrb[0].mxu0
        %v2931 = vadd.f32 0.0, %v2930
        %v2932 = vpop.f32.mrb[0].mxu0
        %2933 = vmatprep.mubr.bf16.mxu0 0
        %2934 = vmatmul.mubr.bf16.gmra.mrb[0].mxu0 %v2696
        %v2935 = vpop.f32.mrb[0].mxu0
        %v2936 = vadd.f32 0.0, %v2935
        %v2937 = vpop.f32.mrb[0].mxu0
        %v2938 = vpop.f32.mrb[0].mxu0
        %v2939 = vadd.f32 0.0, %v2938
        %v2940 = vpop.f32.mrb[0].mxu0
        %2941 = vmatprep.mubr.bf16.mxu0 0
        %2942 = vmatmul.mubr.bf16.gmra.mrb[0].mxu0 %v2699
        %v2943 = vpop.f32.mrb[0].mxu0
        %v2944 = vadd.f32 0.0, %v2943
        %v2945 = vpop.f32.mrb[0].mxu0
        %v2946 = vpop.f32.mrb[0].mxu0
        %v2947 = vadd.f32 0.0, %v2946
        %v2948 = vpop.f32.mrb[0].mxu0
        %2949 = vmatprep.mubr.bf16.mxu0 0
        %2950 = vmatmul.mubr.bf16.gmra.mrb[0].mxu0 %v2702
        %v2951 = vpop.f32.mrb[0].mxu0
        %v2952 = vadd.f32 0.0, %v2951
        %v2953 = vpop.f32.mrb[0].mxu0
        %v2954 = vpop.f32.mrb[0].mxu0
        %v2955 = vadd.f32 0.0, %v2954
        %v2956 = vpop.f32.mrb[0].mxu0
        %2957 = vmatprep.mubr.bf16.mxu0 0
        %2958 = vmatmul.mubr.bf16.gmra.mrb[0].mxu0 %v2705
        %v2959 = vpop.f32.mrb[0].mxu0
        %v2960 = vadd.f32 0.0, %v2959
        %v2961 = vpop.f32.mrb[0].mxu0
        %v2962 = vpop.f32.mrb[0].mxu0
        %v2963 = vadd.f32 0.0, %v2962
        %v2964 = vpop.f32.mrb[0].mxu0
        %2965 = vmatprep.mubr.bf16.mxu0 0
        %2966 = vmatmul.mubr.bf16.gmra.mrb[0].mxu0 %v2708
        %v2967 = vpop.f32.mrb[0].mxu0
        %v2968 = vadd.f32 0.0, %v2967
        %v2969 = vpop.f32.mrb[0].mxu0
        %v2970 = vpop.f32.mrb[0].mxu0
        %v2971 = vadd.f32 0.0, %v2970
        %v2972 = vpop.f32.mrb[0].mxu0
        %2973 = vmatprep.mubr.bf16.mxu0 0
        %2974 = vmatmul.mubr.bf16.gmra.mrb[0].mxu0 %v2711
        %v2975 = vpop.f32.mrb[0].mxu0
        %v2976 = vadd.f32 0.0, %v2975
        %v2977 = vpop.f32.mrb[0].mxu0
        %v2978 = vpop.f32.mrb[0].mxu0
        %v2979 = vadd.f32 0.0, %v2978
        %v2980 = vpop.f32.mrb[0].mxu0
        %2981 = vmatprep.mubr.bf16.mxu0 0
        %2982 = vmatmul.mubr.bf16.gmra.mrb[0].mxu0 %v2714
        %v2983 = vpop.f32.mrb[0].mxu0
        %v2984 = vadd.f32 0.0, %v2983
        %v2985 = vpop.f32.mrb[0].mxu0
        %v2986 = vpop.f32.mrb[0].mxu0
        %v2987 = vadd.f32 0.0, %v2986
        %v2988 = vpop.f32.mrb[0].mxu0
        %2989 = vmatprep.mubr.bf16.mxu0 0
        %2990 = vmatmul.mubr.bf16.gmra.mrb[0].mxu0 %v2717
        %v2991 = vpop.f32.mrb[0].mxu0
        %v2992 = vadd.f32 0.0, %v2991
        %v2993 = vpop.f32.mrb[0].mxu0
        %v2994 = vpop.f32.mrb[0].mxu0
        %v2995 = vadd.f32 0.0, %v2994
        %v2996 = vpop.f32.mrb[0].mxu0
        %2997 = vmatprep.mubr.bf16.mxu0 0
        %2998 = vmatmul.mubr.bf16.gmra.mrb[0].mxu0 %v2720
        %v2999 = vpop.f32.mrb[0].mxu0
        %v3000 = vadd.f32 0.0, %v2999
        %v3001 = vpop.f32.mrb[0].mxu0
        %v3002 = vpop.f32.mrb[0].mxu0
        %v3003 = vadd.f32 0.0, %v3002
        %v3004 = vpop.f32.mrb[0].mxu0
        %3005 = vmatprep.mubr.bf16.mxu0 0
        %3006 = vmatmul.mubr.bf16.gmra.mrb[0].mxu0 %v2723
        %v3007 = vpop.f32.mrb[0].mxu0
        %v3008 = vadd.f32 0.0, %v3007
        %v3009 = vpop.f32.mrb[0].mxu0
        %v3010 = vpop.f32.mrb[0].mxu0
        %v3011 = vadd.f32 0.0, %v3010
        %v3012 = vpop.f32.mrb[0].mxu0
        %3013 = vmatprep.mubr.bf16.mxu0 0
        %3014 = vmatmul.mubr.bf16.gmra.mrb[0].mxu0 %v2726
        %v3015 = vpop.f32.mrb[0].mxu0
        %v3016 = vadd.f32 0.0, %v3015
        %v3017 = vpop.f32.mrb[0].mxu0
        %v3018 = vpop.f32.mrb[0].mxu0
        %v3019 = vadd.f32 0.0, %v3018
        %v3020 = vpop.f32.mrb[0].mxu0
        %3021 = vmatprep.mubr.bf16.mxu0 0
        %3022 = vmatmul.mubr.bf16.gmra.mrb[0].mxu0 %v2729
        %v3023 = vpop.f32.mrb[0].mxu0
        %v3024 = vadd.f32 0.0, %v3023
        %v3025 = vpop.f32.mrb[0].mxu0
        %v3026 = vpop.f32.mrb[0].mxu0
        %v3027 = vadd.f32 0.0, %v3026
        %v3028 = vpop.f32.mrb[0].mxu0
        %3029 = vmatprep.mubr.bf16.mxu0 0
        %3030 = vmatmul.mubr.bf16.gmra.mrb[0].mxu0 %v2732
        %v3031 = vpop.f32.mrb[0].mxu0
        %v3032 = vadd.f32 0.0, %v3031
        %v3033 = vpop.f32.mrb[0].mxu0
        %v3034 = vpop.f32.mrb[0].mxu0
        %v3035 = vadd.f32 0.0, %v3034
        %v3036 = vpop.f32.mrb[0].mxu0
        %3037 = vmatprep.mubr.bf16.mxu0 0
        %3038 = vmatmul.mubr.bf16.gmra.mrb[0].mxu0 %v2735
        %v3039 = vpop.f32.mrb[0].mxu0
        %v3040 = vadd.f32 0.0, %v3039
        %v3041 = vpop.f32.mrb[0].mxu0
        %v3042 = vpop.f32.mrb[0].mxu0
        %v3043 = vadd.f32 0.0, %v3042
        %v3044 = vpop.f32.mrb[0].mxu0
        %3045 = vmatprep.mubr.bf16.mxu0 0
        %3046 = vmatmul.mubr.bf16.gmra.mrb[0].mxu0 %v2738
        %v3047 = vpop.f32.mrb[0].mxu0
        %v3048 = vadd.f32 0.0, %v3047
        %v3049 = vpop.f32.mrb[0].mxu0
        %v3050 = vpop.f32.mrb[0].mxu0
        %v3051 = vadd.f32 0.0, %v3050
        %v3052 = vpop.f32.mrb[0].mxu0
        %3053 = vmatprep.mubr.bf16.mxu0 0
        %3054 = vmatmul.mubr.bf16.gmra.mrb[0].mxu0 %v2741
        %v3055 = vpop.f32.mrb[0].mxu0
        %v3056 = vadd.f32 0.0, %v3055
        %v3057 = vpop.f32.mrb[0].mxu0
        %v3058 = vpop.f32.mrb[0].mxu0
        %v3059 = vadd.f32 0.0, %v3058
        %v3060 = vpop.f32.mrb[0].mxu0
        %3061 = vmatprep.mubr.bf16.mxu0 0
        %3062 = vmatmul.mubr.bf16.gmra.mrb[0].mxu0 %v2744
        %v3063 = vpop.f32.mrb[0].mxu0
        %v3064 = vadd.f32 0.0, %v3063
        %v3065 = vpop.f32.mrb[0].mxu0
        %v3066 = vpop.f32.mrb[0].mxu0
        %v3067 = vadd.f32 0.0, %v3066
        %v3068 = vpop.f32.mrb[0].mxu0
        %3069 = vdwg.mxu0
        %v3070 = vadd.f32 %v1503, %v2784
        %v3071 = vadd.f32 %v1504, %v2787
        %v3072 = vadd.f32 %v1505, %v2792
        %v3073 = vadd.f32 %v1506, %v2795
        %v3074 = vadd.f32 %v1507, %v2800
        %v3075 = vadd.f32 %v1508, %v2803
        %v3076 = vadd.f32 %v1509, %v2808
        %v3077 = vadd.f32 %v1510, %v2811
        %v3078 = vadd.f32 %v1511, %v2816
        %v3079 = vadd.f32 %v1512, %v2819
        %v3080 = vadd.f32 %v1513, %v2824
        %v3081 = vadd.f32 %v1514, %v2827
        %v3082 = vadd.f32 %v1515, %v2832
        %v3083 = vadd.f32 %v1516, %v2835
        %v3084 = vadd.f32 %v1517, %v2840
        %v3085 = vadd.f32 %v1518, %v2843
        %v3086 = vadd.f32 %v1519, %v2848
        %v3087 = vadd.f32 %v1520, %v2851
        %v3088 = vadd.f32 %v1521, %v2856
        %v3089 = vadd.f32 %v1522, %v2859
        %v3090 = vadd.f32 %v1523, %v2864
        %v3091 = vadd.f32 %v1524, %v2867
        %v3092 = vadd.f32 %v1525, %v2872
        %v3093 = vadd.f32 %v1526, %v2875
        %v3094 = vadd.f32 %v1527, %v2880
        %v3095 = vadd.f32 %v1528, %v2883
        %v3096 = vadd.f32 %v1529, %v2888
        %v3097 = vadd.f32 %v1530, %v2891
        %v3098 = vadd.f32 %v1531, %v2896
        %v3099 = vadd.f32 %v1532, %v2899
        %v3100 = vadd.f32 %v1533, %v2904
        %v3101 = vadd.f32 %v1534, %v2907
        %v3102 = vadd.f32 %v1535, %v2912
        %v3103 = vadd.f32 %v1536, %v2915
        %v3104 = vadd.f32 %v1537, %v2920
        %v3105 = vadd.f32 %v1538, %v2923
        %v3106 = vadd.f32 %v1539, %v2928
        %v3107 = vadd.f32 %v1540, %v2931
        %v3108 = vadd.f32 %v1541, %v2936
        %v3109 = vadd.f32 %v1542, %v2939
        %v3110 = vadd.f32 %v1543, %v2944
        %v3111 = vadd.f32 %v1544, %v2947
        %v3112 = vadd.f32 %v1545, %v2952
        %v3113 = vadd.f32 %v1546, %v2955
        %v3114 = vadd.f32 %v1547, %v2960
        %v3115 = vadd.f32 %v1548, %v2963
        %v3116 = vadd.f32 %v1549, %v2968
        %v3117 = vadd.f32 %v1550, %v2971
        %v3118 = vadd.f32 %v1551, %v2976
        %v3119 = vadd.f32 %v1552, %v2979
        %v3120 = vadd.f32 %v1553, %v2984
        %v3121 = vadd.f32 %v1554, %v2987
        %v3122 = vadd.f32 %v1555, %v2992
        %v3123 = vadd.f32 %v1556, %v2995
        %v3124 = vadd.f32 %v1557, %v3000
        %v3125 = vadd.f32 %v1558, %v3003
        %v3126 = vadd.f32 %v1559, %v3008
        %v3127 = vadd.f32 %v1560, %v3011
        %v3128 = vadd.f32 %v1561, %v3016
        %v3129 = vadd.f32 %v1562, %v3019
        %v3130 = vadd.f32 %v1563, %v3024
        %v3131 = vadd.f32 %v1564, %v3027
        %v3132 = vadd.f32 %v1565, %v3032
        %v3133 = vadd.f32 %v1566, %v3035
        %v3134 = vadd.f32 %v1567, %v3040
        %v3135 = vadd.f32 %v1568, %v3043
        %v3136 = vadd.f32 %v1569, %v3048
        %v3137 = vadd.f32 %v1570, %v3051
        %v3138 = vadd.f32 %v1571, %v3056
        %v3139 = vadd.f32 %v1572, %v3059
        %v3140 = vadd.f32 %v1573, %v3064
        %v3141 = vadd.f32 %v1574, %v3067
        %s3142 = scalar_lea.vmem %s243, 6
        %v3143 = vld [vmem:[%s3142] sm:$0x3]
        %v3144 = vunpack.c.l.b16 %v2507
        %v3145 = vunpack.c.l.b16 %v2517
        %v3146 = vunpack.c.l.b16 %v2527
        %v3147 = vpack.c.b16 %v2534, %v2533
        %v3148 = vpack.c.b16 %v2536, %v2535
        %v3149 = vpack.c.b16 %v2538, %v2537
        %v3150 = vpack.c.b16 %v2540, %v2539
        %v3151 = vpack.c.b16 %v2542, %v2541
        %v3152 = vpack.c.b16 %v2544, %v2543
        %v3153 = vpack.c.b16 %v2546, %v2545
        %v3154 = vpack.c.b16 %v2548, %v2547
        %v3155 = vpack.c.b16 %v2550, %v2549
        %v3156 = vpack.c.b16 %v2552, %v2551
        %v3157 = vpack.c.b16 %v2554, %v2553
        %v3158 = vpack.c.b16 %v2556, %v2555
        %v3159 = vpack.c.b16 %v2558, %v2557
        %v3160 = vpack.c.b16 %v2560, %v2559
        %v3161 = vpack.c.b16 %v2562, %v2561
        %v3162 = vpack.c.b16 %v2564, %v2563
        %v3163 = vpack.c.b16 %v2566, %v2565
        %v3164 = vpack.c.b16 %v2568, %v2567
        %v3165 = vpack.c.b16 %v2570, %v2569
        %v3166 = vpack.c.b16 %v2572, %v2571
        %v3167 = vpack.c.b16 %v2574, %v2573
        %v3168 = vpack.c.b16 %v2576, %v2575
        %v3169 = vpack.c.b16 %v2578, %v2577
        %v3170 = vpack.c.b16 %v2580, %v2579
        %v3171 = vpack.c.b16 %v2582, %v2581
        %v3172 = vpack.c.b16 %v2584, %v2583
        %v3173 = vpack.c.b16 %v2586, %v2585
        %v3174 = vpack.c.b16 %v2588, %v2587
        %v3175 = vpack.c.b16 %v2590, %v2589
        %v3176 = vpack.c.b16 %v2592, %v2591
        %v3177 = vpack.c.b16 %v2594, %v2593
        %v3178 = vpack.c.b16 %v2596, %v2595
        %v3179 = vpack.c.b16 %v2598, %v2597
        %v3180 = vpack.c.b16 %v2600, %v2599
        %v3181 = vpack.c.b16 %v3144, %v2601
        %v3182 = vpack.c.b16 %v3146, %v3145
        %v3184 = vsel %vm521, %v3147, 0
        %v3187 = vsel %vm521, %v3148, 0
        %v3190 = vsel %vm521, %v3149, 0
        %v3193 = vsel %vm521, %v3150, 0
        %v3196 = vsel %vm521, %v3151, 0
        %v3199 = vsel %vm521, %v3152, 0
        %v3202 = vsel %vm521, %v3153, 0
        %v3205 = vsel %vm521, %v3154, 0
        %v3208 = vsel %vm521, %v3155, 0
        %v3211 = vsel %vm521, %v3156, 0
        %v3214 = vsel %vm521, %v3157, 0
        %v3217 = vsel %vm521, %v3158, 0
        %v3220 = vsel %vm521, %v3159, 0
        %v3223 = vsel %vm521, %v3160, 0
        %v3226 = vsel %vm521, %v3161, 0
        %v3229 = vsel %vm521, %v3162, 0
        %v3232 = vsel %vm521, %v3163, 0
        %v3235 = vsel %vm521, %v3164, 0
        %v3238 = vsel %vm521, %v3165, 0
        %v3241 = vsel %vm521, %v3166, 0
        %v3244 = vsel %vm521, %v3167, 0
        %v3247 = vsel %vm521, %v3168, 0
        %v3250 = vsel %vm521, %v3169, 0
        %v3253 = vsel %vm521, %v3170, 0
        %v3256 = vsel %vm521, %v3171, 0
        %v3259 = vsel %vm521, %v3172, 0
        %v3262 = vsel %vm521, %v3173, 0
        %v3265 = vsel %vm521, %v3174, 0
        %v3268 = vsel %vm521, %v3175, 0
        %v3271 = vsel %vm521, %v3176, 0
        %v3274 = vsel %vm521, %v3177, 0
        %v3277 = vsel %vm521, %v3178, 0
        %v3280 = vsel %vm521, %v3179, 0
        %v3283 = vsel %vm521, %v3180, 0
        %v3286 = vsel %vm521, %v3181, 0
        %v3289 = vsel %vm521, %v3182, 0
        %v3292 = vsel %vm630, %v3143, 0
        %3294 = vmatprep.subr.bf16.mxu0 0
        %3295 = vmatpush1.bf16.msra.mxu0 %v3292
        %3296 = vmatprep.subr.bf16.mxu0 0
        %3297 = vmatpush1.bf16.msra.mxu0 0
        %3298 = vmatprep.subr.bf16.mxu0 0
        %3299 = vmatpush1.bf16.msra.mxu0 0
        %3300 = vmatprep.subr.bf16.mxu0 0
        %3301 = vmatpush1.bf16.msra.mxu0 0
        %3302 = vmatprep.subr.bf16.mxu0 0
        %3303 = vmatpush1.bf16.msra.mxu0 0
        %3304 = vmatprep.subr.bf16.mxu0 0
        %3305 = vmatpush1.bf16.msra.mxu0 0
        %3306 = vmatprep.subr.bf16.mxu0 0
        %3307 = vmatpush1.bf16.msra.mxu0 0
        %3308 = vmatprep.subr.bf16.mxu0 0
        %3309 = vmatpush1.bf16.msra.mxu0 0
        %3310 = vmatprep.subr.bf16.mxu0 0
        %3311 = vmatpush1.bf16.msra.mxu0 0
        %3312 = vmatprep.subr.bf16.mxu0 0
        %3313 = vmatpush1.bf16.msra.mxu0 0
        %3314 = vmatprep.subr.bf16.mxu0 0
        %3315 = vmatpush1.bf16.msra.mxu0 0
        %3316 = vmatprep.subr.bf16.mxu0 0
        %3317 = vmatpush1.bf16.msra.mxu0 0
        %3318 = vmatprep.subr.bf16.mxu0 0
        %3319 = vmatpush1.bf16.msra.mxu0 0
        %3320 = vmatprep.subr.bf16.mxu0 0
        %3321 = vmatpush1.bf16.msra.mxu0 0
        %3322 = vmatprep.subr.bf16.mxu0 0
        %3323 = vmatpush1.bf16.msra.mxu0 0
        %3324 = vmatprep.subr.bf16.mxu0 0
        %3325 = vmatpush1.bf16.msra.mxu0 0
        %3326 = vmatprep.mubr.bf16.mxu0 0
        %3327 = vmatmul.mubr.bf16.gmra.mrb[0].mxu0 %v3184
        %v3328 = vpop.f32.mrb[0].mxu0
        %v3329 = vadd.f32 0.0, %v3328
        %v3330 = vpop.f32.mrb[0].mxu0
        %v3331 = vpop.f32.mrb[0].mxu0
        %v3332 = vadd.f32 0.0, %v3331
        %v3333 = vpop.f32.mrb[0].mxu0
        %3334 = vmatprep.mubr.bf16.mxu0 0
        %3335 = vmatmul.mubr.bf16.gmra.mrb[0].mxu0 %v3187
        %v3336 = vpop.f32.mrb[0].mxu0
        %v3337 = vadd.f32 0.0, %v3336
        %v3338 = vpop.f32.mrb[0].mxu0
        %v3339 = vpop.f32.mrb[0].mxu0
        %v3340 = vadd.f32 0.0, %v3339
        %v3341 = vpop.f32.mrb[0].mxu0
        %3342 = vmatprep.mubr.bf16.mxu0 0
        %3343 = vmatmul.mubr.bf16.gmra.mrb[0].mxu0 %v3190
        %v3344 = vpop.f32.mrb[0].mxu0
        %v3345 = vadd.f32 0.0, %v3344
        %v3346 = vpop.f32.mrb[0].mxu0
        %v3347 = vpop.f32.mrb[0].mxu0
        %v3348 = vadd.f32 0.0, %v3347
        %v3349 = vpop.f32.mrb[0].mxu0
        %3350 = vmatprep.mubr.bf16.mxu0 0
        %3351 = vmatmul.mubr.bf16.gmra.mrb[0].mxu0 %v3193
        %v3352 = vpop.f32.mrb[0].mxu0
        %v3353 = vadd.f32 0.0, %v3352
        %v3354 = vpop.f32.mrb[0].mxu0
        %v3355 = vpop.f32.mrb[0].mxu0
        %v3356 = vadd.f32 0.0, %v3355
        %v3357 = vpop.f32.mrb[0].mxu0
        %3358 = vmatprep.mubr.bf16.mxu0 0
        %3359 = vmatmul.mubr.bf16.gmra.mrb[0].mxu0 %v3196
        %v3360 = vpop.f32.mrb[0].mxu0
        %v3361 = vadd.f32 0.0, %v3360
        %v3362 = vpop.f32.mrb[0].mxu0
        %v3363 = vpop.f32.mrb[0].mxu0
        %v3364 = vadd.f32 0.0, %v3363
        %v3365 = vpop.f32.mrb[0].mxu0
        %3366 = vmatprep.mubr.bf16.mxu0 0
        %3367 = vmatmul.mubr.bf16.gmra.mrb[0].mxu0 %v3199
        %v3368 = vpop.f32.mrb[0].mxu0
        %v3369 = vadd.f32 0.0, %v3368
        %v3370 = vpop.f32.mrb[0].mxu0
        %v3371 = vpop.f32.mrb[0].mxu0
        %v3372 = vadd.f32 0.0, %v3371
        %v3373 = vpop.f32.mrb[0].mxu0
        %3374 = vmatprep.mubr.bf16.mxu0 0
        %3375 = vmatmul.mubr.bf16.gmra.mrb[0].mxu0 %v3202
        %v3376 = vpop.f32.mrb[0].mxu0
        %v3377 = vadd.f32 0.0, %v3376
        %v3378 = vpop.f32.mrb[0].mxu0
        %v3379 = vpop.f32.mrb[0].mxu0
        %v3380 = vadd.f32 0.0, %v3379
        %v3381 = vpop.f32.mrb[0].mxu0
        %3382 = vmatprep.mubr.bf16.mxu0 0
        %3383 = vmatmul.mubr.bf16.gmra.mrb[0].mxu0 %v3205
        %v3384 = vpop.f32.mrb[0].mxu0
        %v3385 = vadd.f32 0.0, %v3384
        %v3386 = vpop.f32.mrb[0].mxu0
        %v3387 = vpop.f32.mrb[0].mxu0
        %v3388 = vadd.f32 0.0, %v3387
        %v3389 = vpop.f32.mrb[0].mxu0
        %3390 = vmatprep.mubr.bf16.mxu0 0
        %3391 = vmatmul.mubr.bf16.gmra.mrb[0].mxu0 %v3208
        %v3392 = vpop.f32.mrb[0].mxu0
        %v3393 = vadd.f32 0.0, %v3392
        %v3394 = vpop.f32.mrb[0].mxu0
        %v3395 = vpop.f32.mrb[0].mxu0
        %v3396 = vadd.f32 0.0, %v3395
        %v3397 = vpop.f32.mrb[0].mxu0
        %3398 = vmatprep.mubr.bf16.mxu0 0
        %3399 = vmatmul.mubr.bf16.gmra.mrb[0].mxu0 %v3211
        %v3400 = vpop.f32.mrb[0].mxu0
        %v3401 = vadd.f32 0.0, %v3400
        %v3402 = vpop.f32.mrb[0].mxu0
        %v3403 = vpop.f32.mrb[0].mxu0
        %v3404 = vadd.f32 0.0, %v3403
        %v3405 = vpop.f32.mrb[0].mxu0
        %3406 = vmatprep.mubr.bf16.mxu0 0
        %3407 = vmatmul.mubr.bf16.gmra.mrb[0].mxu0 %v3214
        %v3408 = vpop.f32.mrb[0].mxu0
        %v3409 = vadd.f32 0.0, %v3408
        %v3410 = vpop.f32.mrb[0].mxu0
        %v3411 = vpop.f32.mrb[0].mxu0
        %v3412 = vadd.f32 0.0, %v3411
        %v3413 = vpop.f32.mrb[0].mxu0
        %3414 = vmatprep.mubr.bf16.mxu0 0
        %3415 = vmatmul.mubr.bf16.gmra.mrb[0].mxu0 %v3217
        %v3416 = vpop.f32.mrb[0].mxu0
        %v3417 = vadd.f32 0.0, %v3416
        %v3418 = vpop.f32.mrb[0].mxu0
        %v3419 = vpop.f32.mrb[0].mxu0
        %v3420 = vadd.f32 0.0, %v3419
        %v3421 = vpop.f32.mrb[0].mxu0
        %3422 = vmatprep.mubr.bf16.mxu0 0
        %3423 = vmatmul.mubr.bf16.gmra.mrb[0].mxu0 %v3220
        %v3424 = vpop.f32.mrb[0].mxu0
        %v3425 = vadd.f32 0.0, %v3424
        %v3426 = vpop.f32.mrb[0].mxu0
        %v3427 = vpop.f32.mrb[0].mxu0
        %v3428 = vadd.f32 0.0, %v3427
        %v3429 = vpop.f32.mrb[0].mxu0
        %3430 = vmatprep.mubr.bf16.mxu0 0
        %3431 = vmatmul.mubr.bf16.gmra.mrb[0].mxu0 %v3223
        %v3432 = vpop.f32.mrb[0].mxu0
        %v3433 = vadd.f32 0.0, %v3432
        %v3434 = vpop.f32.mrb[0].mxu0
        %v3435 = vpop.f32.mrb[0].mxu0
        %v3436 = vadd.f32 0.0, %v3435
        %v3437 = vpop.f32.mrb[0].mxu0
        %3438 = vmatprep.mubr.bf16.mxu0 0
        %3439 = vmatmul.mubr.bf16.gmra.mrb[0].mxu0 %v3226
        %v3440 = vpop.f32.mrb[0].mxu0
        %v3441 = vadd.f32 0.0, %v3440
        %v3442 = vpop.f32.mrb[0].mxu0
        %v3443 = vpop.f32.mrb[0].mxu0
        %v3444 = vadd.f32 0.0, %v3443
        %v3445 = vpop.f32.mrb[0].mxu0
        %3446 = vmatprep.mubr.bf16.mxu0 0
        %3447 = vmatmul.mubr.bf16.gmra.mrb[0].mxu0 %v3229
        %v3448 = vpop.f32.mrb[0].mxu0
        %v3449 = vadd.f32 0.0, %v3448
        %v3450 = vpop.f32.mrb[0].mxu0
        %v3451 = vpop.f32.mrb[0].mxu0
        %v3452 = vadd.f32 0.0, %v3451
        %v3453 = vpop.f32.mrb[0].mxu0
        %3454 = vmatprep.mubr.bf16.mxu0 0
        %3455 = vmatmul.mubr.bf16.gmra.mrb[0].mxu0 %v3232
        %v3456 = vpop.f32.mrb[0].mxu0
        %v3457 = vadd.f32 0.0, %v3456
        %v3458 = vpop.f32.mrb[0].mxu0
        %v3459 = vpop.f32.mrb[0].mxu0
        %v3460 = vadd.f32 0.0, %v3459
        %v3461 = vpop.f32.mrb[0].mxu0
        %3462 = vmatprep.mubr.bf16.mxu0 0
        %3463 = vmatmul.mubr.bf16.gmra.mrb[0].mxu0 %v3235
        %v3464 = vpop.f32.mrb[0].mxu0
        %v3465 = vadd.f32 0.0, %v3464
        %v3466 = vpop.f32.mrb[0].mxu0
        %v3467 = vpop.f32.mrb[0].mxu0
        %v3468 = vadd.f32 0.0, %v3467
        %v3469 = vpop.f32.mrb[0].mxu0
        %3470 = vmatprep.mubr.bf16.mxu0 0
        %3471 = vmatmul.mubr.bf16.gmra.mrb[0].mxu0 %v3238
        %v3472 = vpop.f32.mrb[0].mxu0
        %v3473 = vadd.f32 0.0, %v3472
        %v3474 = vpop.f32.mrb[0].mxu0
        %v3475 = vpop.f32.mrb[0].mxu0
        %v3476 = vadd.f32 0.0, %v3475
        %v3477 = vpop.f32.mrb[0].mxu0
        %3478 = vmatprep.mubr.bf16.mxu0 0
        %3479 = vmatmul.mubr.bf16.gmra.mrb[0].mxu0 %v3241
        %v3480 = vpop.f32.mrb[0].mxu0
        %v3481 = vadd.f32 0.0, %v3480
        %v3482 = vpop.f32.mrb[0].mxu0
        %v3483 = vpop.f32.mrb[0].mxu0
        %v3484 = vadd.f32 0.0, %v3483
        %v3485 = vpop.f32.mrb[0].mxu0
        %3486 = vmatprep.mubr.bf16.mxu0 0
        %3487 = vmatmul.mubr.bf16.gmra.mrb[0].mxu0 %v3244
        %v3488 = vpop.f32.mrb[0].mxu0
        %v3489 = vadd.f32 0.0, %v3488
        %v3490 = vpop.f32.mrb[0].mxu0
        %v3491 = vpop.f32.mrb[0].mxu0
        %v3492 = vadd.f32 0.0, %v3491
        %v3493 = vpop.f32.mrb[0].mxu0
        %3494 = vmatprep.mubr.bf16.mxu0 0
        %3495 = vmatmul.mubr.bf16.gmra.mrb[0].mxu0 %v3247
        %v3496 = vpop.f32.mrb[0].mxu0
        %v3497 = vadd.f32 0.0, %v3496
        %v3498 = vpop.f32.mrb[0].mxu0
        %v3499 = vpop.f32.mrb[0].mxu0
        %v3500 = vadd.f32 0.0, %v3499
        %v3501 = vpop.f32.mrb[0].mxu0
        %3502 = vmatprep.mubr.bf16.mxu0 0
        %3503 = vmatmul.mubr.bf16.gmra.mrb[0].mxu0 %v3250
        %v3504 = vpop.f32.mrb[0].mxu0
        %v3505 = vadd.f32 0.0, %v3504
        %v3506 = vpop.f32.mrb[0].mxu0
        %v3507 = vpop.f32.mrb[0].mxu0
        %v3508 = vadd.f32 0.0, %v3507
        %v3509 = vpop.f32.mrb[0].mxu0
        %3510 = vmatprep.mubr.bf16.mxu0 0
        %3511 = vmatmul.mubr.bf16.gmra.mrb[0].mxu0 %v3253
        %v3512 = vpop.f32.mrb[0].mxu0
        %v3513 = vadd.f32 0.0, %v3512
        %v3514 = vpop.f32.mrb[0].mxu0
        %v3515 = vpop.f32.mrb[0].mxu0
        %v3516 = vadd.f32 0.0, %v3515
        %v3517 = vpop.f32.mrb[0].mxu0
        %3518 = vmatprep.mubr.bf16.mxu0 0
        %3519 = vmatmul.mubr.bf16.gmra.mrb[0].mxu0 %v3256
        %v3520 = vpop.f32.mrb[0].mxu0
        %v3521 = vadd.f32 0.0, %v3520
        %v3522 = vpop.f32.mrb[0].mxu0
        %v3523 = vpop.f32.mrb[0].mxu0
        %v3524 = vadd.f32 0.0, %v3523
        %v3525 = vpop.f32.mrb[0].mxu0
        %3526 = vmatprep.mubr.bf16.mxu0 0
        %3527 = vmatmul.mubr.bf16.gmra.mrb[0].mxu0 %v3259
        %v3528 = vpop.f32.mrb[0].mxu0
        %v3529 = vadd.f32 0.0, %v3528
        %v3530 = vpop.f32.mrb[0].mxu0
        %v3531 = vpop.f32.mrb[0].mxu0
        %v3532 = vadd.f32 0.0, %v3531
        %v3533 = vpop.f32.mrb[0].mxu0
        %3534 = vmatprep.mubr.bf16.mxu0 0
        %3535 = vmatmul.mubr.bf16.gmra.mrb[0].mxu0 %v3262
        %v3536 = vpop.f32.mrb[0].mxu0
        %v3537 = vadd.f32 0.0, %v3536
        %v3538 = vpop.f32.mrb[0].mxu0
        %v3539 = vpop.f32.mrb[0].mxu0
        %v3540 = vadd.f32 0.0, %v3539
        %v3541 = vpop.f32.mrb[0].mxu0
        %3542 = vmatprep.mubr.bf16.mxu0 0
        %3543 = vmatmul.mubr.bf16.gmra.mrb[0].mxu0 %v3265
        %v3544 = vpop.f32.mrb[0].mxu0
        %v3545 = vadd.f32 0.0, %v3544
        %v3546 = vpop.f32.mrb[0].mxu0
        %v3547 = vpop.f32.mrb[0].mxu0
        %v3548 = vadd.f32 0.0, %v3547
        %v3549 = vpop.f32.mrb[0].mxu0
        %3550 = vmatprep.mubr.bf16.mxu0 0
        %3551 = vmatmul.mubr.bf16.gmra.mrb[0].mxu0 %v3268
        %v3552 = vpop.f32.mrb[0].mxu0
        %v3553 = vadd.f32 0.0, %v3552
        %v3554 = vpop.f32.mrb[0].mxu0
        %v3555 = vpop.f32.mrb[0].mxu0
        %v3556 = vadd.f32 0.0, %v3555
        %v3557 = vpop.f32.mrb[0].mxu0
        %3558 = vmatprep.mubr.bf16.mxu0 0
        %3559 = vmatmul.mubr.bf16.gmra.mrb[0].mxu0 %v3271
        %v3560 = vpop.f32.mrb[0].mxu0
        %v3561 = vadd.f32 0.0, %v3560
        %v3562 = vpop.f32.mrb[0].mxu0
        %v3563 = vpop.f32.mrb[0].mxu0
        %v3564 = vadd.f32 0.0, %v3563
        %v3565 = vpop.f32.mrb[0].mxu0
        %3566 = vmatprep.mubr.bf16.mxu0 0
        %3567 = vmatmul.mubr.bf16.gmra.mrb[0].mxu0 %v3274
        %v3568 = vpop.f32.mrb[0].mxu0
        %v3569 = vadd.f32 0.0, %v3568
        %v3570 = vpop.f32.mrb[0].mxu0
        %v3571 = vpop.f32.mrb[0].mxu0
        %v3572 = vadd.f32 0.0, %v3571
        %v3573 = vpop.f32.mrb[0].mxu0
        %3574 = vmatprep.mubr.bf16.mxu0 0
        %3575 = vmatmul.mubr.bf16.gmra.mrb[0].mxu0 %v3277
        %v3576 = vpop.f32.mrb[0].mxu0
        %v3577 = vadd.f32 0.0, %v3576
        %v3578 = vpop.f32.mrb[0].mxu0
        %v3579 = vpop.f32.mrb[0].mxu0
        %v3580 = vadd.f32 0.0, %v3579
        %v3581 = vpop.f32.mrb[0].mxu0
        %3582 = vmatprep.mubr.bf16.mxu0 0
        %3583 = vmatmul.mubr.bf16.gmra.mrb[0].mxu0 %v3280
        %v3584 = vpop.f32.mrb[0].mxu0
        %v3585 = vadd.f32 0.0, %v3584
        %v3586 = vpop.f32.mrb[0].mxu0
        %v3587 = vpop.f32.mrb[0].mxu0
        %v3588 = vadd.f32 0.0, %v3587
        %v3589 = vpop.f32.mrb[0].mxu0
        %3590 = vmatprep.mubr.bf16.mxu0 0
        %3591 = vmatmul.mubr.bf16.gmra.mrb[0].mxu0 %v3283
        %v3592 = vpop.f32.mrb[0].mxu0
        %v3593 = vadd.f32 0.0, %v3592
        %v3594 = vpop.f32.mrb[0].mxu0
        %v3595 = vpop.f32.mrb[0].mxu0
        %v3596 = vadd.f32 0.0, %v3595
        %v3597 = vpop.f32.mrb[0].mxu0
        %3598 = vmatprep.mubr.bf16.mxu0 0
        %3599 = vmatmul.mubr.bf16.gmra.mrb[0].mxu0 %v3286
        %v3600 = vpop.f32.mrb[0].mxu0
        %v3601 = vadd.f32 0.0, %v3600
        %v3602 = vpop.f32.mrb[0].mxu0
        %v3603 = vpop.f32.mrb[0].mxu0
        %v3604 = vadd.f32 0.0, %v3603
        %v3605 = vpop.f32.mrb[0].mxu0
        %3606 = vmatprep.mubr.bf16.mxu0 0
        %3607 = vmatmul.mubr.bf16.gmra.mrb[0].mxu0 %v3289
        %v3608 = vpop.f32.mrb[0].mxu0
        %v3609 = vadd.f32 0.0, %v3608
        %v3610 = vpop.f32.mrb[0].mxu0
        %v3611 = vpop.f32.mrb[0].mxu0
        %v3612 = vadd.f32 0.0, %v3611
        %v3613 = vpop.f32.mrb[0].mxu0
        %3614 = vdwg.mxu0
        %v3615 = vadd.f32 %v3070, %v3329
        %v3616 = vadd.f32 %v3071, %v3332
        %v3617 = vadd.f32 %v3072, %v3337
        %v3618 = vadd.f32 %v3073, %v3340
        %v3619 = vadd.f32 %v3074, %v3345
        %v3620 = vadd.f32 %v3075, %v3348
        %v3621 = vadd.f32 %v3076, %v3353
        %v3622 = vadd.f32 %v3077, %v3356
        %v3623 = vadd.f32 %v3078, %v3361
        %v3624 = vadd.f32 %v3079, %v3364
        %v3625 = vadd.f32 %v3080, %v3369
        %v3626 = vadd.f32 %v3081, %v3372
        %v3627 = vadd.f32 %v3082, %v3377
        %v3628 = vadd.f32 %v3083, %v3380
        %v3629 = vadd.f32 %v3084, %v3385
        %v3630 = vadd.f32 %v3085, %v3388
        %v3631 = vadd.f32 %v3086, %v3393
        %v3632 = vadd.f32 %v3087, %v3396
        %v3633 = vadd.f32 %v3088, %v3401
        %v3634 = vadd.f32 %v3089, %v3404
        %v3635 = vadd.f32 %v3090, %v3409
        %v3636 = vadd.f32 %v3091, %v3412
        %v3637 = vadd.f32 %v3092, %v3417
        %v3638 = vadd.f32 %v3093, %v3420
        %v3639 = vadd.f32 %v3094, %v3425
        %v3640 = vadd.f32 %v3095, %v3428
        %v3641 = vadd.f32 %v3096, %v3433
        %v3642 = vadd.f32 %v3097, %v3436
        %v3643 = vadd.f32 %v3098, %v3441
        %v3644 = vadd.f32 %v3099, %v3444
        %v3645 = vadd.f32 %v3100, %v3449
        %v3646 = vadd.f32 %v3101, %v3452
        %v3647 = vadd.f32 %v3102, %v3457
        %v3648 = vadd.f32 %v3103, %v3460
        %v3649 = vadd.f32 %v3104, %v3465
        %v3650 = vadd.f32 %v3105, %v3468
        %v3651 = vadd.f32 %v3106, %v3473
        %v3652 = vadd.f32 %v3107, %v3476
        %v3653 = vadd.f32 %v3108, %v3481
        %v3654 = vadd.f32 %v3109, %v3484
        %v3655 = vadd.f32 %v3110, %v3489
        %v3656 = vadd.f32 %v3111, %v3492
        %v3657 = vadd.f32 %v3112, %v3497
        %v3658 = vadd.f32 %v3113, %v3500
        %v3659 = vadd.f32 %v3114, %v3505
        %v3660 = vadd.f32 %v3115, %v3508
        %v3661 = vadd.f32 %v3116, %v3513
        %v3662 = vadd.f32 %v3117, %v3516
        %v3663 = vadd.f32 %v3118, %v3521
        %v3664 = vadd.f32 %v3119, %v3524
        %v3665 = vadd.f32 %v3120, %v3529
        %v3666 = vadd.f32 %v3121, %v3532
        %v3667 = vadd.f32 %v3122, %v3537
        %v3668 = vadd.f32 %v3123, %v3540
        %v3669 = vadd.f32 %v3124, %v3545
        %v3670 = vadd.f32 %v3125, %v3548
        %v3671 = vadd.f32 %v3126, %v3553
        %v3672 = vadd.f32 %v3127, %v3556
        %v3673 = vadd.f32 %v3128, %v3561
        %v3674 = vadd.f32 %v3129, %v3564
        %v3675 = vadd.f32 %v3130, %v3569
        %v3676 = vadd.f32 %v3131, %v3572
        %v3677 = vadd.f32 %v3132, %v3577
        %v3678 = vadd.f32 %v3133, %v3580
        %v3679 = vadd.f32 %v3134, %v3585
        %v3680 = vadd.f32 %v3135, %v3588
        %v3681 = vadd.f32 %v3136, %v3593
        %v3682 = vadd.f32 %v3137, %v3596
        %v3683 = vadd.f32 %v3138, %v3601
        %v3684 = vadd.f32 %v3139, %v3604
        %v3685 = vadd.f32 %v3140, %v3609
        %v3686 = vadd.f32 %v3141, %v3612
        %vm3687 = vcmask 23552
        %3688 = vst.msk [vmem:[%s252] sm:$0xff] %vm3687, %v3615
        %3689 = vst.msk [vmem:[%s252 + $0x8] sm:$0xff] %vm3687, %v3616
        %3690 = vst.msk [vmem:[%s252 + $0x10] sm:$0xff] %vm3687, %v3617
        %3691 = vst.msk [vmem:[%s252 + $0x18] sm:$0xff] %vm3687, %v3618
        %3692 = vst.msk [vmem:[%s252 + $0x20] sm:$0xff] %vm3687, %v3619
        %3693 = vst.msk [vmem:[%s252 + $0x28] sm:$0xff] %vm3687, %v3620
        %3694 = vst.msk [vmem:[%s252 + $0x30] sm:$0xff] %vm3687, %v3621
        %3695 = vst.msk [vmem:[%s252 + $0x38] sm:$0xff] %vm3687, %v3622
        %3696 = vst.msk [vmem:[%s252 + $0x40] sm:$0xff] %vm3687, %v3623
        %3697 = vst.msk [vmem:[%s252 + $0x48] sm:$0xff] %vm3687, %v3624
        %3698 = vst.msk [vmem:[%s252 + $0x50] sm:$0xff] %vm3687, %v3625
        %3699 = vst.msk [vmem:[%s252 + $0x58] sm:$0xff] %vm3687, %v3626
        %3700 = vst.msk [vmem:[%s252 + $0x60] sm:$0xff] %vm3687, %v3627
        %3701 = vst.msk [vmem:[%s252 + $0x68] sm:$0xff] %vm3687, %v3628
        %3702 = vst.msk [vmem:[%s252 + $0x70] sm:$0xff] %vm3687, %v3629
        %3703 = vst.msk [vmem:[%s252 + $0x78] sm:$0xff] %vm3687, %v3630
        %3704 = vst.msk [vmem:[%s252 + $0x80] sm:$0xff] %vm3687, %v3631
        %3705 = vst.msk [vmem:[%s252 + $0x88] sm:$0xff] %vm3687, %v3632
        %3706 = vst.msk [vmem:[%s252 + $0x90] sm:$0xff] %vm3687, %v3633
        %3707 = vst.msk [vmem:[%s252 + $0x98] sm:$0xff] %vm3687, %v3634
        %3708 = vst.msk [vmem:[%s252 + $0xa0] sm:$0xff] %vm3687, %v3635
        %3709 = vst.msk [vmem:[%s252 + $0xa8] sm:$0xff] %vm3687, %v3636
        %3710 = vst.msk [vmem:[%s252 + $0xb0] sm:$0xff] %vm3687, %v3637
        %3711 = vst.msk [vmem:[%s252 + $0xb8] sm:$0xff] %vm3687, %v3638
        %3712 = vst.msk [vmem:[%s252 + $0xc0] sm:$0xff] %vm3687, %v3639
        %3713 = vst.msk [vmem:[%s252 + $0xc8] sm:$0xff] %vm3687, %v3640
        %3714 = vst.msk [vmem:[%s252 + $0xd0] sm:$0xff] %vm3687, %v3641
        %3715 = vst.msk [vmem:[%s252 + $0xd8] sm:$0xff] %vm3687, %v3642
        %3716 = vst.msk [vmem:[%s252 + $0xe0] sm:$0xff] %vm3687, %v3643
        %3717 = vst.msk [vmem:[%s252 + $0xe8] sm:$0xff] %vm3687, %v3644
        %3718 = vst.msk [vmem:[%s252 + $0xf0] sm:$0xff] %vm3687, %v3645
        %3719 = vst.msk [vmem:[%s252 + $0xf8] sm:$0xff] %vm3687, %v3646
        %3720 = vst.msk [vmem:[%s252 + $0x100] sm:$0xff] %vm3687, %v3647
        %3721 = vst.msk [vmem:[%s252 + $0x108] sm:$0xff] %vm3687, %v3648
        %3722 = vst.msk [vmem:[%s252 + $0x110] sm:$0xff] %vm3687, %v3649
        %3723 = vst.msk [vmem:[%s252 + $0x118] sm:$0xff] %vm3687, %v3650
        %3724 = vst.msk [vmem:[%s252 + $0x120] sm:$0xff] %vm3687, %v3651
        %3725 = vst.msk [vmem:[%s252 + $0x128] sm:$0xff] %vm3687, %v3652
        %3726 = vst.msk [vmem:[%s252 + $0x130] sm:$0xff] %vm3687, %v3653
        %3727 = vst.msk [vmem:[%s252 + $0x138] sm:$0xff] %vm3687, %v3654
        %3728 = vst.msk [vmem:[%s252 + $0x140] sm:$0xff] %vm3687, %v3655
        %3729 = vst.msk [vmem:[%s252 + $0x148] sm:$0xff] %vm3687, %v3656
        %3730 = vst.msk [vmem:[%s252 + $0x150] sm:$0xff] %vm3687, %v3657
        %3731 = vst.msk [vmem:[%s252 + $0x158] sm:$0xff] %vm3687, %v3658
        %3732 = vst.msk [vmem:[%s252 + $0x160] sm:$0xff] %vm3687, %v3659
        %3733 = vst.msk [vmem:[%s252 + $0x168] sm:$0xff] %vm3687, %v3660
        %3734 = vst.msk [vmem:[%s252 + $0x170] sm:$0xff] %vm3687, %v3661
        %3735 = vst.msk [vmem:[%s252 + $0x178] sm:$0xff] %vm3687, %v3662
        %3736 = vst.msk [vmem:[%s252 + $0x180] sm:$0xff] %vm3687, %v3663
        %3737 = vst.msk [vmem:[%s252 + $0x188] sm:$0xff] %vm3687, %v3664
        %3738 = vst.msk [vmem:[%s252 + $0x190] sm:$0xff] %vm3687, %v3665
        %3739 = vst.msk [vmem:[%s252 + $0x198] sm:$0xff] %vm3687, %v3666
        %3740 = vst.msk [vmem:[%s252 + $0x1a0] sm:$0xff] %vm3687, %v3667
        %3741 = vst.msk [vmem:[%s252 + $0x1a8] sm:$0xff] %vm3687, %v3668
        %3742 = vst.msk [vmem:[%s252 + $0x1b0] sm:$0xff] %vm3687, %v3669
        %3743 = vst.msk [vmem:[%s252 + $0x1b8] sm:$0xff] %vm3687, %v3670
        %3744 = vst.msk [vmem:[%s252 + $0x1c0] sm:$0xff] %vm3687, %v3671
        %3745 = vst.msk [vmem:[%s252 + $0x1c8] sm:$0xff] %vm3687, %v3672
        %3746 = vst.msk [vmem:[%s252 + $0x1d0] sm:$0xff] %vm3687, %v3673
        %3747 = vst.msk [vmem:[%s252 + $0x1d8] sm:$0xff] %vm3687, %v3674
        %3748 = vst.msk [vmem:[%s252 + $0x1e0] sm:$0xff] %vm3687, %v3675
        %3749 = vst.msk [vmem:[%s252 + $0x1e8] sm:$0xff] %vm3687, %v3676
        %3750 = vst.msk [vmem:[%s252 + $0x1f0] sm:$0xff] %vm3687, %v3677
        %3751 = vst.msk [vmem:[%s252 + $0x1f8] sm:$0xff] %vm3687, %v3678
        %3752 = vst.msk [vmem:[%s252 + $0x200] sm:$0xff] %vm3687, %v3679
        %3753 = vst.msk [vmem:[%s252 + $0x208] sm:$0xff] %vm3687, %v3680
        %3754 = vst.msk [vmem:[%s252 + $0x210] sm:$0xff] %vm3687, %v3681
        %3755 = vst.msk [vmem:[%s252 + $0x218] sm:$0xff] %vm3687, %v3682
        %3756 = vst.msk [vmem:[%s252 + $0x220] sm:$0xff] %vm3687, %v3683
        %3757 = vst.msk [vmem:[%s252 + $0x228] sm:$0xff] %vm3687, %v3684
        %3758 = vst.msk [vmem:[%s252 + $0x230] sm:$0xff] %vm3687, %v3685
        %3759 = vst.msk [vmem:[%s252 + $0x238] sm:$0xff] %vm3687, %v3686
        %s3760 = smul.u32 %s20, 4
        %s3761 = smul.u32 %s21, 2
        %s3762 = sadd.s32 %s3760, %s3761
        %s3763 = sadd.s32 %s3762, %s22
        %p3764 = scmp.lt.s32.totalorder %s3763, 7
        %s3765 = scalar_select %p3764, %s3763, 7
        %s3766 = smul.addr %s3765, 72
        %s3767 = smul.addr %s3766, 8
        %s3768 = scalar_lea.vmem %s3, %s3767
        // Predicated region
        $region37: #{tpu_custom_call.1} parent=31 // pred_check
          %p3769 = pneg %p135
        $region38: #{tpu_custom_call.1} parent=31 // pred_check_branch
          %3771 = sbr.rel (%p3769) target = $region40
        $region39: #{tpu_custom_call.1} parent=31 // pred_region
          %s3772 = smul.u32 %s20, 4
          %s3773 = smul.u32 %s21, 2
          %s3774 = sadd.s32 %s3772, %s3773
          %s3775 = sadd.s32 %s3774, %s22
        $region40: #{tpu_custom_call.1} parent=31 // pred_fallthru
          _
      $region32: #{tpu_custom_call.1} parent=5 // pred_fallthru
        _
      %p3776 = scmp.le.s32.totalorder 2, %s10
      // Predicated region
      $region41: #{tpu_custom_call.1} parent=5 // pred_check
        %p3777 = pneg %p3776
      $region42: #{tpu_custom_call.1} parent=5 // pred_check_branch
        %3779 = sbr.rel (%p3777) target = $region44
      $region43: #{tpu_custom_call.1} parent=5 // pred_region
        %s3780 = ssub.s32 %s10, 2
        // Predicated region
        $region45: #{tpu_custom_call.1} parent=43 // pred_check
          %p3781 = pneg %p141
        $region46: #{tpu_custom_call.1} parent=43 // pred_check_branch
          %3783 = sbr.rel (%p3781) target = $region48
        $region47: #{tpu_custom_call.1} parent=43 // pred_region
          %s3784 = smul.u32 %s23, 4
          %s3785 = smul.u32 %s24, 2
          %s3786 = sadd.s32 %s3784, %s3785
          %s3787 = sadd.s32 %s3786, %s25
          %p3788 = scmp.lt.s32.totalorder %s3787, 7
          %s3789 = scalar_select %p3788, %s3787, 7
          %s3790 = smul.addr %s3789, 72
          %s3791 = smul.addr %s3790, 8
          %s3792 = scalar_lea.vmem %s3, %s3791
        $region48: #{tpu_custom_call.1} parent=43 // pred_fallthru
          _
      $region44: #{tpu_custom_call.1} parent=5 // pred_fallthru
        _
    $region6: #{tpu_custom_call.1} parent=1 // loop_footer
      %s14 = sadd.s32 1, %s10
    $region7: #{tpu_custom_call.1} parent=1 // loop_footer_branch
      %9 = sbr.rel target = $region3
    $region8: #{tpu_custom_call.1} parent=1 // loop_exit
      _
    %3793 = vsyncpa [#allocation3], 1
    %s3794 = scalar_lea.sflag [#allocation3], 1
    %3795 = vsyncpa %s3794, 1

</llo_original>
